<compile_context>
chip_gen: v7x
topology: tpu7x:2x2x1
jax: 0.10.0
libtpu: 0.0.40
codegen_flags: <defaults>
</compile_context>

<pallas_src>
import functools
import numpy as np
import jax
import jax.numpy as jnp
from jax.experimental import pallas as pl
from jax.experimental.pallas import tpu as pltpu

# ----------------------------- configuration -----------------------------
DIM = 64            # model dim        (torch default 512)
DIM_HEAD = 16       # per-head dim     (torch default 64)
NUM_LATENTS = 8     # latent tokens    (torch default 64)
DEPTH = 2
CROSS_HEADS = 1
SELF_HEADS = 4      # (torch default 8)
EMB_INIT_SCALE = 0.02
T_MIN, T_MAX = 1e-4, 4.0
LN_EPS = 1e-5

N_UNITS = 10
N_SESSIONS = 3
N_TOKEN_TYPES = 4
READOUT_SPECS = {"cursor_velocity": 2, "arm_velocity": 3}   # task -> out dim

VMEM_LIMIT_BYTES = 32 * 1024 * 1024   # generous headroom on v5e / v6e / v7x


# ----------------------------- host-side helpers -----------------------------
def make_rotate_half_matrix(d):
    """rotate_half(x) = x @ R with interleaved pairs (x0, x1) -> (-x1, x0).

    Only used host-side to pre-rotate projection weights; never enters a kernel.
    """
    R = np.zeros((d, d), np.float32)
    i = np.arange(d // 2)
    R[2 * i + 1, 2 * i] = -1.0
    R[2 * i, 2 * i + 1] = 1.0
    return jnp.asarray(R)


def rotary_freqs(timestamps, dim_head):
    half = dim_head // 2
    inv_freq = np.zeros(half, np.float32)
    ks = np.arange(0, half, 2, dtype=np.float32)
    inv_freq[: dim_head // 4] = 2 * np.pi / (T_MIN * ((T_MAX / T_MIN) ** (ks / half)))
    freqs = timestamps[..., None].astype(jnp.float32) * jnp.asarray(inv_freq)
    return jnp.repeat(freqs, 2, axis=-1)   # (..., dim_head): [f0,f0,f1,f1,...]


# ----------------------------- in-kernel math -----------------------------
def _layernorm(x, g, b):
    mu = jnp.mean(x, axis=-1, keepdims=True)
    var = jnp.mean((x - mu) ** 2, axis=-1, keepdims=True)
    return (x - mu) * jax.lax.rsqrt(var + LN_EPS) * g + b


def _gelu(x):
    return 0.5 * x * (1.0 + jax.lax.erf(x * np.float32(1.0 / np.sqrt(2.0))))


# ----------------------------- fused block kernel -----------------------------
@functools.lru_cache(maxsize=None)
def _make_block_kernel(B, H, rotate_value, is_self, use_mask, n_pred):
    """One fused residual block, single grid point, everything resident in VMEM:

        h   = x_q + OutProj(RotaryMHA(LN(x_q), LN(x_ctx)))
        out = h + GEGLU_FFN(LN(h))        [optionally: pred = out @ W_readout]
    """

    def kernel(*refs):
        it = iter(refs)
        xq_ref = next(it)
        xc_ref = xq_ref if is_self else next(it)
        qcos_ref = next(it); qsin_ref = next(it)
        kcos_ref = qcos_ref if is_self else next(it)
        ksin_ref = qsin_ref if is_self else next(it)
        maskb_ref = next(it) if use_mask else None
        lnq_g_ref = next(it); lnq_b_ref = next(it)
        lnk_g_ref = lnq_g_ref if is_self else next(it)
        lnk_b_ref = lnq_b_ref if is_self else next(it)
        wq_ref = next(it); wqr_ref = next(it)
        wk_ref = next(it); wkr_ref = next(it)
        wv_ref = next(it)
        wvr_ref = next(it) if rotate_value else None
        wo_ref = next(it); bo_ref = next(it)
        fg_ref = next(it); fb_ref = next(it)
        wa_ref = next(it); ba_ref = next(it)
        wg_ref = next(it); bg_ref = next(it)
        w2_ref = next(it); b2_ref = next(it)
        if n_pred:
            wr_ref = next(it); br_ref = next(it)
        o_ref = next(it)
        pred_ref = next(it) if n_pred else None

        D = wq_ref.shape[-1]
        scale = np.float32(1.0 / np.sqrt(D))

        # load small shared parameters once
        lnq_g = lnq_g_ref[...]; lnq_b = lnq_b_ref[...]
        lnk_g = lnk_g_ref[...]; lnk_b = lnk_b_ref[...]
        bo = bo_ref[...]
        fg = fg_ref[...]; fb = fb_ref[...]
        wa = wa_ref[...]; ba = ba_ref[...]
        wg = wg_ref[...]; bg = bg_ref[...]
        w2 = w2_ref[...]; b2 = b2_ref[...]

        for b in range(B):                                   # static, B is tiny
            xq = xq_ref[b].astype(jnp.float32)               # (Nq, dim)
            xqn = _layernorm(xq, lnq_g, lnq_b)
            if is_self:
                xcn = xqn
            else:
                xcn = _layernorm(xc_ref[b].astype(jnp.float32), lnk_g, lnk_b)
            qcos = qcos_ref[b]; qsin = qsin_ref[b]           # (Nq, D)
            if is_self:
                kcos, ksin = qcos, qsin
            else:
                kcos = kcos_ref[b]; ksin = ksin_ref[b]       # (Nk, D)
            mask_row = maskb_ref[b] if use_mask else None    # (1, Nk)

            y = bo                                           # (1, dim), broadcasts
            for h in range(H):                               # static, H <= 4
                # projections; *_r use host-pre-rotated weights, i.e.
                # x @ (W R) == rotate_half(x @ W)  -> no in-kernel rotate matmul
                q = jnp.dot(xqn, wq_ref[h], preferred_element_type=jnp.float32)
                q_r = jnp.dot(xqn, wqr_ref[h], preferred_element_type=jnp.float32)
                k = jnp.dot(xcn, wk_ref[h], preferred_element_type=jnp.float32)
                k_r = jnp.dot(xcn, wkr_ref[h], preferred_element_type=jnp.float32)
                v = jnp.dot(xcn, wv_ref[h], preferred_element_type=jnp.float32)
                # RoPE: x*cos + rotate_half(x)*sin  (pure VPU math)
                q = q * qcos + q_r * qsin
                k = k * kcos + k_r * ksin
                if rotate_value:
                    v_r = jnp.dot(xcn, wvr_ref[h],
                                  preferred_element_type=jnp.float32)
                    v_rot = v * kcos + v_r * ksin
                    v_rh = v_r * kcos - v * ksin     # == rotate_half(v_rot)
                else:
                    v_rot = v

                s = jax.lax.dot_general(q, k, (((1,), (1,)), ((), ())),
                                        preferred_element_type=jnp.float32) * scale
                if use_mask:
                    s = s + mask_row
                m = jnp.max(s, axis=-1, keepdims=True)
                p = jnp.exp(s - m)
                p = p / jnp.sum(p, axis=-1, keepdims=True)
                o = jnp.dot(p, v_rot, preferred_element_type=jnp.float32)  # (Nq, D)
                if rotate_value:
                    # inverse rotation with -freqs: cos same, sin negated;
                    # rotate_half(o) == p @ rotate_half(v_rot)
                    o_rh = jnp.dot(p, v_rh, preferred_element_type=jnp.float32)
                    o = o * qcos - o_rh * qsin
                y = y + jnp.dot(o, wo_ref[h], preferred_element_type=jnp.float32)

            h1 = xq + y                                      # attention residual

            # fused LayerNorm + GEGLU feed-forward + residual
            hn = _layernorm(h1, fg, fb)
            a = jnp.dot(hn, wa, preferred_element_type=jnp.float32) + ba
            g = jnp.dot(hn, wg, preferred_element_type=jnp.float32) + bg
            ff = jnp.dot(a * _gelu(g), w2, preferred_element_type=jnp.float32) + b2
            out_b = h1 + ff
            o_ref[b] = out_b.astype(o_ref.dtype)

            if n_pred:   # merged multitask readout, single matmul
                pred = (jnp.dot(out_b, wr_ref[...],
                                preferred_element_type=jnp.float32) + br_ref[...])
                pred_ref[b] = pred.astype(pred_ref.dtype)

    return kernel


# ----------------------------- block wrapper -----------------------------
def _stack_heads(w, heads, d):
    # (dim, heads*d) -> (heads, dim, d), matching torch's '(h d)' inner layout
    dim = w.shape[0]
    return w.reshape(dim, heads, d).transpose(1, 0, 2)


def fused_block(x_q, x_ctx, q_cos, q_sin, k_cos, k_sin, mask_bias, attn_p,
                ffn_p, *, heads, rotate_value, is_self, readout=None):
    """Fused (attention + residual + FFN + residual [+ readout]) block."""
    B, Nq, dim = x_q.shape
    D = DIM_HEAD
    inner = heads * D
    R = make_rotate_half_matrix(D)

    if is_self:
        wq = attn_p["wqkv"][:, :inner]
        wk = attn_p["wqkv"][:, inner:2 * inner]
        wv = attn_p["wqkv"][:, 2 * inner:]
        lnq = (attn_p["ln_g"], attn_p["ln_b"])
        lnk = None
    else:
        wq = attn_p["wq"]
        wk = attn_p["wkv"][:, :inner]
        wv = attn_p["wkv"][:, inner:]
        lnq = (attn_p["ln_q_g"], attn_p["ln_q_b"])
        lnk = (attn_p["ln_kv_g"], attn_p["ln_kv_b"])

    wq_st = _stack_heads(wq, heads, D)
    wk_st = _stack_heads(wk, heads, D)
    wv_st = _stack_heads(wv, heads, D)
    wo_st = attn_p["wo"].reshape(heads, D, dim)

    inputs = [x_q]
    if not is_self:
        inputs.append(x_ctx)
    inputs += [q_cos, q_sin]
    if not is_self:
        inputs += [k_cos, k_sin]
    use_mask = mask_bias is not None
    if use_mask:
        inputs.append(mask_bias)
    inputs += [lnq[0].reshape(1, dim), lnq[1].reshape(1, dim)]
    if not is_self:
        inputs += [lnk[0].reshape(1, dim), lnk[1].reshape(1, dim)]
    # pre-rotated weights: x @ (W R) == rotate_half(x @ W)
    inputs += [wq_st, wq_st @ R, wk_st, wk_st @ R, wv_st]
    if rotate_value:
        inputs.append(wv_st @ R)
    inputs += [wo_st, attn_p["bo"].reshape(1, dim)]
    inputs += [ffn_p["ln_g"].reshape(1, dim), ffn_p["ln_b"].reshape(1, dim),
               ffn_p["wa"], ffn_p["ba"].reshape(1, -1),
               ffn_p["wg"], ffn_p["bg"].reshape(1, -1),
               ffn_p["w2"], ffn_p["b2"].reshape(1, dim)]
    n_pred = 0
    if readout is not None:
        wr, br = readout
        n_pred = int(wr.shape[1])
        inputs += [wr, br.reshape(1, n_pred)]

    out_shape = [jax.ShapeDtypeStruct((B, Nq, dim), jnp.float32)]
    if n_pred:
        out_shape.append(jax.ShapeDtypeStruct((B, Nq, n_pred), jnp.float32))

    kernel = _make_block_kernel(B, heads, rotate_value, is_self, use_mask, n_pred)
    fn = pl.pallas_call(
        kernel,
        out_shape=tuple(out_shape) if n_pred else out_shape[0],
        compiler_params=pltpu.CompilerParams(vmem_limit_bytes=VMEM_LIMIT_BYTES),
    )
    return fn(*inputs)


# ----------------------------- parameters -----------------------------
def init_params(key):
    kit = iter(jax.random.split(key, 64))

    def nrm(shape, scale):
        return jax.random.normal(next(kit), shape, dtype=jnp.float32) * scale

    def lin(din, dout):
        return nrm((din, dout), 1.0 / np.sqrt(din))

    def ln(d):
        return jnp.ones((d,), jnp.float32), jnp.zeros((d,), jnp.float32)

    def cross_attn_params(heads):
        inner = heads * DIM_HEAD
        gq, bq = ln(DIM); gk, bk = ln(DIM)
        return dict(ln_q_g=gq, ln_q_b=bq, ln_kv_g=gk, ln_kv_b=bk,
                    wq=lin(DIM, inner), wkv=lin(DIM, 2 * inner),
                    wo=lin(inner, DIM), bo=jnp.zeros((DIM,), jnp.float32))

    def self_attn_params(heads):
        inner = heads * DIM_HEAD
        g, b = ln(DIM)
        return dict(ln_g=g, ln_b=b, wqkv=lin(DIM, 3 * inner),
                    wo=lin(inner, DIM), bo=jnp.zeros((DIM,), jnp.float32))

    def ffn_params():
        hidden = DIM * 4
        g, b = ln(DIM)
        return dict(ln_g=g, ln_b=b,
                    wa=lin(DIM, hidden), ba=jnp.zeros((hidden,), jnp.float32),
                    wg=lin(DIM, hidden), bg=jnp.zeros((hidden,), jnp.float32),
                    w2=lin(hidden, DIM), b2=jnp.zeros((DIM,), jnp.float32))

    return dict(
        unit_emb=nrm((N_UNITS, DIM), EMB_INIT_SCALE),
        session_emb=nrm((N_SESSIONS, DIM), EMB_INIT_SCALE),
        token_type_emb=nrm((N_TOKEN_TYPES, DIM), EMB_INIT_SCALE),
        task_emb=nrm((len(READOUT_SPECS), DIM), EMB_INIT_SCALE),
        latent_emb=nrm((NUM_LATENTS, DIM), EMB_INIT_SCALE),
        enc_atn=cross_attn_params(CROSS_HEADS),
        enc_ffn=ffn_params(),
        proc_layers=[dict(attn=self_attn_params(SELF_HEADS), ffn=ffn_params())
                     for _ in range(DEPTH)],
        dec_atn=cross_attn_params(CROSS_HEADS),
        dec_ffn=ffn_params(),
        readout={name: dict(w=lin(DIM, dout), b=jnp.zeros((dout,), jnp.float32))
                 for name, dout in READOUT_SPECS.items()},
    )


# ----------------------------- forward pass -----------------------------
def poyo_plus_forward(params, batch):
    # 1. input / latent / query token construction (embedding lookups = glue)
    inputs = (params["unit_emb"][batch["input_unit_index"]]
              + params["token_type_emb"][batch["input_token_type"]])
    latents = params["latent_emb"][batch["latent_index"]]
    queries = (params["session_emb"][batch["output_session_index"]]
               + params["task_emb"][batch["output_decoder_index"]])

    # rotary cos/sin tables: computed once, reused by every layer
    in_freqs = rotary_freqs(batch["input_timestamps"], DIM_HEAD)
    lat_freqs = rotary_freqs(batch["latent_timestamps"], DIM_HEAD)
    out_freqs = rotary_freqs(batch["output_timestamps"], DIM_HEAD)
    in_cos, in_sin = jnp.cos(in_freqs), jnp.sin(in_freqs)
    lat_cos, lat_sin = jnp.cos(lat_freqs), jnp.sin(lat_freqs)
    out_cos, out_sin = jnp.cos(out_freqs), jnp.sin(out_freqs)

    mask = batch.get("input_mask", None)
    mask_bias = None
    if mask is not None:
        mask_bias = jnp.where(mask, 0.0, -1e30).astype(jnp.float32)[:, None, :]

    # 2. encoder: latents attend to inputs (rotate_value=True) + FFN -> 1 kernel
    latents = fused_block(latents, inputs, lat_cos, lat_sin, in_cos, in_sin,
                          mask_bias, params["enc_atn"], params["enc_ffn"],
                          heads=CROSS_HEADS, rotate_value=True, is_self=False)

    # 3. processor: self-attention + FFN -> 1 kernel per layer (dropout = id)
    for layer in params["proc_layers"]:
        latents = fused_block(latents, None, lat_cos, lat_sin, None, None, None,
                              layer["attn"], layer["ffn"], heads=SELF_HEADS,
                              rotate_value=True, is_self=True)

    # 4./5./6. decoder cross-attention (rotate_value=False, no mask -> static
    # skip) + FFN + merged multitask readout -> 1 kernel
    w_all = jnp.concatenate([params["readout"][n]["w"] for n in READOUT_SPECS],
                            axis=1)
    b_all = jnp.concatenate([params["readout"][n]["b"] for n in READOUT_SPECS],
                            axis=0)
    _, preds_all = fused_block(queries, latents, out_cos, out_sin, lat_cos,
                               lat_sin, None, params["dec_atn"],
                               params["dec_ffn"], heads=CROSS_HEADS,
                               rotate_value=False, is_self=False,
                               readout=(w_all, b_all))

    # TODO(synk): torch's MultitaskReadout gathers tokens via boolean masks
    # (dynamic shapes); here we emit dense per-task predictions plus the
    # selection mask instead.
    outputs = {}
    off = 0
    for ti, (name, dout) in enumerate(READOUT_SPECS.items()):
        outputs[name] = {
            "preds": preds_all[..., off:off + dout],
            "mask": batch["output_decoder_index"] == ti,
        }
        off += dout
    return outputs


# ----------------------------- main -----------------------------
if __name__ == "__main__":
    key = jax.random.PRNGKey(0)
    pkey, dkey = jax.random.split(key)
    params = init_params(pkey)

    B, NIN, NOUT = 2, 24, 6
    ks = jax.random.split(dkey, 8)
    batch = {
        "input_unit_index": jax.random.randint(ks[0], (B, NIN), 0, N_UNITS),
        "input_timestamps": jax.random.uniform(ks[1], (B, NIN), minval=0.0, maxval=1.0),
        "input_token_type": jax.random.randint(ks[2], (B, NIN), 0, N_TOKEN_TYPES),
        "input_mask": jax.random.uniform(ks[3], (B, NIN)) > 0.1,
        "latent_index": jnp.tile(jnp.arange(NUM_LATENTS)[None, :], (B, 1)),
        "latent_timestamps": jnp.tile(jnp.linspace(0.0, 1.0, NUM_LATENTS)[None, :], (B, 1)),
        "output_session_index": jax.random.randint(ks[4], (B, NOUT), 0, N_SESSIONS),
        "output_timestamps": jax.random.uniform(ks[5], (B, NOUT), minval=0.0, maxval=1.0),
        "output_decoder_index": jax.random.randint(ks[6], (B, NOUT), 0, len(READOUT_SPECS)),
    }

    out = poyo_plus_forward(params, batch)
    out = jax.block_until_ready(out)
    assert out["cursor_velocity"]["preds"].shape == (B, NOUT, 2)
    assert out["arm_velocity"]["preds"].shape == (B, NOUT, 3)
    print("KERNEL_OK")
</pallas_src>

<mosaic_0001>
module attributes {stable_mosaic.version = 11 : i64} {
  func.func @kernel(%arg0: memref<2x8x64xf32, #tpu.memory_space<vmem>>, %arg1: memref<2x24x64xf32, #tpu.memory_space<vmem>>, %arg2: memref<2x8x16xf32, #tpu.memory_space<vmem>>, %arg3: memref<2x8x16xf32, #tpu.memory_space<vmem>>, %arg4: memref<2x24x16xf32, #tpu.memory_space<vmem>>, %arg5: memref<2x24x16xf32, #tpu.memory_space<vmem>>, %arg6: memref<2x1x24xf32, #tpu.memory_space<vmem>>, %arg7: memref<1x64xf32, #tpu.memory_space<vmem>>, %arg8: memref<1x64xf32, #tpu.memory_space<vmem>>, %arg9: memref<1x64xf32, #tpu.memory_space<vmem>>, %arg10: memref<1x64xf32, #tpu.memory_space<vmem>>, %arg11: memref<1x64x16xf32, #tpu.memory_space<vmem>>, %arg12: memref<1x64x16xf32, #tpu.memory_space<vmem>>, %arg13: memref<1x64x16xf32, #tpu.memory_space<vmem>>, %arg14: memref<1x64x16xf32, #tpu.memory_space<vmem>>, %arg15: memref<1x64x16xf32, #tpu.memory_space<vmem>>, %arg16: memref<1x64x16xf32, #tpu.memory_space<vmem>>, %arg17: memref<1x16x64xf32, #tpu.memory_space<vmem>>, %arg18: memref<1x64xf32, #tpu.memory_space<vmem>>, %arg19: memref<1x64xf32, #tpu.memory_space<vmem>>, %arg20: memref<1x64xf32, #tpu.memory_space<vmem>>, %arg21: memref<64x256xf32, #tpu.memory_space<vmem>>, %arg22: memref<1x256xf32, #tpu.memory_space<vmem>>, %arg23: memref<64x256xf32, #tpu.memory_space<vmem>>, %arg24: memref<1x256xf32, #tpu.memory_space<vmem>>, %arg25: memref<256x64xf32, #tpu.memory_space<vmem>>, %arg26: memref<1x64xf32, #tpu.memory_space<vmem>>, %arg27: memref<2x8x64xf32, #tpu.memory_space<vmem>>) attributes {dimension_semantics = [], scalar_prefetch = 0 : i64, scratch_operands = 0 : i64, tpu.core_type = #tpu.core_type<tc>} {
    %c0 = arith.constant 0 : index
    %c0_0 = arith.constant 0 : index
    %0 = vector.load %arg7[%c0, %c0_0] : memref<1x64xf32, #tpu.memory_space<vmem>>, vector<1x64xf32>
    %c0_1 = arith.constant 0 : index
    %c0_2 = arith.constant 0 : index
    %1 = vector.load %arg8[%c0_1, %c0_2] : memref<1x64xf32, #tpu.memory_space<vmem>>, vector<1x64xf32>
    %c0_3 = arith.constant 0 : index
    %c0_4 = arith.constant 0 : index
    %2 = vector.load %arg9[%c0_3, %c0_4] : memref<1x64xf32, #tpu.memory_space<vmem>>, vector<1x64xf32>
    %c0_5 = arith.constant 0 : index
    %c0_6 = arith.constant 0 : index
    %3 = vector.load %arg10[%c0_5, %c0_6] : memref<1x64xf32, #tpu.memory_space<vmem>>, vector<1x64xf32>
    %c0_7 = arith.constant 0 : index
    %c0_8 = arith.constant 0 : index
    %4 = vector.load %arg18[%c0_7, %c0_8] : memref<1x64xf32, #tpu.memory_space<vmem>>, vector<1x64xf32>
    %c0_9 = arith.constant 0 : index
    %c0_10 = arith.constant 0 : index
    %5 = vector.load %arg19[%c0_9, %c0_10] : memref<1x64xf32, #tpu.memory_space<vmem>>, vector<1x64xf32>
    %c0_11 = arith.constant 0 : index
    %c0_12 = arith.constant 0 : index
    %6 = vector.load %arg20[%c0_11, %c0_12] : memref<1x64xf32, #tpu.memory_space<vmem>>, vector<1x64xf32>
    %c0_13 = arith.constant 0 : index
    %c0_14 = arith.constant 0 : index
    %7 = vector.load %arg21[%c0_13, %c0_14] : memref<64x256xf32, #tpu.memory_space<vmem>>, vector<64x256xf32>
    %c0_15 = arith.constant 0 : index
    %c0_16 = arith.constant 0 : index
    %8 = vector.load %arg22[%c0_15, %c0_16] : memref<1x256xf32, #tpu.memory_space<vmem>>, vector<1x256xf32>
    %c0_17 = arith.constant 0 : index
    %c0_18 = arith.constant 0 : index
    %9 = vector.load %arg23[%c0_17, %c0_18] : memref<64x256xf32, #tpu.memory_space<vmem>>, vector<64x256xf32>
    %c0_19 = arith.constant 0 : index
    %c0_20 = arith.constant 0 : index
    %10 = vector.load %arg24[%c0_19, %c0_20] : memref<1x256xf32, #tpu.memory_space<vmem>>, vector<1x256xf32>
    %c0_21 = arith.constant 0 : index
    %c0_22 = arith.constant 0 : index
    %11 = vector.load %arg25[%c0_21, %c0_22] : memref<256x64xf32, #tpu.memory_space<vmem>>, vector<256x64xf32>
    %c0_23 = arith.constant 0 : index
    %c0_24 = arith.constant 0 : index
    %12 = vector.load %arg26[%c0_23, %c0_24] : memref<1x64xf32, #tpu.memory_space<vmem>>, vector<1x64xf32>
    %c0_25 = arith.constant 0 : index
    %c0_26 = arith.constant 0 : index
    %c0_27 = arith.constant 0 : index
    %13 = vector.load %arg0[%c0_25, %c0_26, %c0_27] : memref<2x8x64xf32, #tpu.memory_space<vmem>>, vector<1x8x64xf32>
    %14 = vector.shape_cast %13 : vector<1x8x64xf32> to vector<8x64xf32>
    %cst = arith.constant dense<0.000000e+00> : vector<8xf32>
    %15 = vector.multi_reduction <add>, %14, %cst [1] : vector<8x64xf32> to vector<8xf32>
    %16 = vector.shape_cast %15 : vector<8xf32> to vector<8x1xf32>
    %cst_28 = arith.constant 6.400000e+01 : f32
    %17 = vector.broadcast %cst_28 : f32 to vector<8x1xf32>
    %18 = arith.divf %16, %17 : vector<8x1xf32>
    %19 = vector.broadcast %18 : vector<8x1xf32> to vector<8x64xf32>
    %20 = arith.subf %14, %19 : vector<8x64xf32>
    %21 = arith.mulf %20, %20 : vector<8x64xf32>
    %cst_29 = arith.constant dense<0.000000e+00> : vector<8xf32>
    %22 = vector.multi_reduction <add>, %21, %cst_29 [1] : vector<8x64xf32> to vector<8xf32>
    %23 = vector.shape_cast %22 : vector<8xf32> to vector<8x1xf32>
    %cst_30 = arith.constant 6.400000e+01 : f32
    %24 = vector.broadcast %cst_30 : f32 to vector<8x1xf32>
    %25 = arith.divf %23, %24 : vector<8x1xf32>
    %26 = vector.broadcast %18 : vector<8x1xf32> to vector<8x64xf32>
    %27 = arith.subf %14, %26 : vector<8x64xf32>
    %cst_31 = arith.constant 9.99999974E-6 : f32
    %28 = vector.broadcast %cst_31 : f32 to vector<8x1xf32>
    %29 = arith.addf %25, %28 : vector<8x1xf32>
    %30 = math.rsqrt %29 : vector<8x1xf32>
    %31 = vector.broadcast %30 : vector<8x1xf32> to vector<8x64xf32>
    %32 = arith.mulf %27, %31 : vector<8x64xf32>
    %33 = vector.broadcast %0 : vector<1x64xf32> to vector<8x64xf32>
    %34 = arith.mulf %32, %33 : vector<8x64xf32>
    %35 = vector.broadcast %1 : vector<1x64xf32> to vector<8x64xf32>
    %36 = arith.addf %34, %35 : vector<8x64xf32>
    %c0_32 = arith.constant 0 : index
    %c0_33 = arith.constant 0 : index
    %c0_34 = arith.constant 0 : index
    %37 = vector.load %arg1[%c0_32, %c0_33, %c0_34] : memref<2x24x64xf32, #tpu.memory_space<vmem>>, vector<1x24x64xf32>
    %38 = vector.shape_cast %37 : vector<1x24x64xf32> to vector<24x64xf32>
    %cst_35 = arith.constant dense<0.000000e+00> : vector<24xf32>
    %39 = vector.multi_reduction <add>, %38, %cst_35 [1] : vector<24x64xf32> to vector<24xf32>
    %40 = vector.shape_cast %39 : vector<24xf32> to vector<24x1xf32>
    %cst_36 = arith.constant 6.400000e+01 : f32
    %41 = vector.broadcast %cst_36 : f32 to vector<24x1xf32>
    %42 = arith.divf %40, %41 : vector<24x1xf32>
    %43 = vector.broadcast %42 : vector<24x1xf32> to vector<24x64xf32>
    %44 = arith.subf %38, %43 : vector<24x64xf32>
    %45 = arith.mulf %44, %44 : vector<24x64xf32>
    %cst_37 = arith.constant dense<0.000000e+00> : vector<24xf32>
    %46 = vector.multi_reduction <add>, %45, %cst_37 [1] : vector<24x64xf32> to vector<24xf32>
    %47 = vector.shape_cast %46 : vector<24xf32> to vector<24x1xf32>
    %cst_38 = arith.constant 6.400000e+01 : f32
    %48 = vector.broadcast %cst_38 : f32 to vector<24x1xf32>
    %49 = arith.divf %47, %48 : vector<24x1xf32>
    %50 = vector.broadcast %42 : vector<24x1xf32> to vector<24x64xf32>
    %51 = arith.subf %38, %50 : vector<24x64xf32>
    %cst_39 = arith.constant 9.99999974E-6 : f32
    %52 = vector.broadcast %cst_39 : f32 to vector<24x1xf32>
    %53 = arith.addf %49, %52 : vector<24x1xf32>
    %54 = math.rsqrt %53 : vector<24x1xf32>
    %55 = vector.broadcast %54 : vector<24x1xf32> to vector<24x64xf32>
    %56 = arith.mulf %51, %55 : vector<24x64xf32>
    %57 = vector.broadcast %2 : vector<1x64xf32> to vector<24x64xf32>
    %58 = arith.mulf %56, %57 : vector<24x64xf32>
    %59 = vector.broadcast %3 : vector<1x64xf32> to vector<24x64xf32>
    %60 = arith.addf %58, %59 : vector<24x64xf32>
    %c0_40 = arith.constant 0 : index
    %c0_41 = arith.constant 0 : index
    %c0_42 = arith.constant 0 : index
    %61 = vector.load %arg2[%c0_40, %c0_41, %c0_42] : memref<2x8x16xf32, #tpu.memory_space<vmem>>, vector<1x8x16xf32>
    %62 = vector.shape_cast %61 : vector<1x8x16xf32> to vector<8x16xf32>
    %c0_43 = arith.constant 0 : index
    %c0_44 = arith.constant 0 : index
    %c0_45 = arith.constant 0 : index
    %63 = vector.load %arg3[%c0_43, %c0_44, %c0_45] : memref<2x8x16xf32, #tpu.memory_space<vmem>>, vector<1x8x16xf32>
    %64 = vector.shape_cast %63 : vector<1x8x16xf32> to vector<8x16xf32>
    %c0_46 = arith.constant 0 : index
    %c0_47 = arith.constant 0 : index
    %c0_48 = arith.constant 0 : index
    %65 = vector.load %arg4[%c0_46, %c0_47, %c0_48] : memref<2x24x16xf32, #tpu.memory_space<vmem>>, vector<1x24x16xf32>
    %66 = vector.shape_cast %65 : vector<1x24x16xf32> to vector<24x16xf32>
    %c0_49 = arith.constant 0 : index
    %c0_50 = arith.constant 0 : index
    %c0_51 = arith.constant 0 : index
    %67 = vector.load %arg5[%c0_49, %c0_50, %c0_51] : memref<2x24x16xf32, #tpu.memory_space<vmem>>, vector<1x24x16xf32>
    %68 = vector.shape_cast %67 : vector<1x24x16xf32> to vector<24x16xf32>
    %c0_52 = arith.constant 0 : index
    %c0_53 = arith.constant 0 : index
    %c0_54 = arith.constant 0 : index
    %69 = vector.load %arg6[%c0_52, %c0_53, %c0_54] : memref<2x1x24xf32, #tpu.memory_space<vmem>>, vector<1x1x24xf32>
    %70 = vector.shape_cast %69 : vector<1x1x24xf32> to vector<1x24xf32>
    %c0_55 = arith.constant 0 : index
    %c0_56 = arith.constant 0 : index
    %c0_57 = arith.constant 0 : index
    %71 = vector.load %arg11[%c0_55, %c0_56, %c0_57] : memref<1x64x16xf32, #tpu.memory_space<vmem>>, vector<1x64x16xf32>
    %72 = vector.shape_cast %71 : vector<1x64x16xf32> to vector<64x16xf32>
    %cst_58 = arith.constant dense<0.000000e+00> : vector<8x16xf32>
    %73 = tpu.matmul %36, %72, %cst_58 {dimension_numbers = #tpu.dot_dimension_numbers<[1], [0], [0], [1], [0, 0, 1, 1], [], []>} : vector<8x64xf32>, vector<64x16xf32>, vector<8x16xf32> -> vector<8x16xf32>
    %c0_59 = arith.constant 0 : index
    %c0_60 = arith.constant 0 : index
    %c0_61 = arith.constant 0 : index
    %74 = vector.load %arg12[%c0_59, %c0_60, %c0_61] : memref<1x64x16xf32, #tpu.memory_space<vmem>>, vector<1x64x16xf32>
    %75 = vector.shape_cast %74 : vector<1x64x16xf32> to vector<64x16xf32>
    %cst_62 = arith.constant dense<0.000000e+00> : vector<8x16xf32>
    %76 = tpu.matmul %36, %75, %cst_62 {dimension_numbers = #tpu.dot_dimension_numbers<[1], [0], [0], [1], [0, 0, 1, 1], [], []>} : vector<8x64xf32>, vector<64x16xf32>, vector<8x16xf32> -> vector<8x16xf32>
    %c0_63 = arith.constant 0 : index
    %c0_64 = arith.constant 0 : index
    %c0_65 = arith.constant 0 : index
    %77 = vector.load %arg13[%c0_63, %c0_64, %c0_65] : memref<1x64x16xf32, #tpu.memory_space<vmem>>, vector<1x64x16xf32>
    %78 = vector.shape_cast %77 : vector<1x64x16xf32> to vector<64x16xf32>
    %cst_66 = arith.constant dense<0.000000e+00> : vector<24x16xf32>
    %79 = tpu.matmul %60, %78, %cst_66 {dimension_numbers = #tpu.dot_dimension_numbers<[1], [0], [0], [1], [0, 0, 1, 1], [], []>} : vector<24x64xf32>, vector<64x16xf32>, vector<24x16xf32> -> vector<24x16xf32>
    %c0_67 = arith.constant 0 : index
    %c0_68 = arith.constant 0 : index
    %c0_69 = arith.constant 0 : index
    %80 = vector.load %arg14[%c0_67, %c0_68, %c0_69] : memref<1x64x16xf32, #tpu.memory_space<vmem>>, vector<1x64x16xf32>
    %81 = vector.shape_cast %80 : vector<1x64x16xf32> to vector<64x16xf32>
    %cst_70 = arith.constant dense<0.000000e+00> : vector<24x16xf32>
    %82 = tpu.matmul %60, %81, %cst_70 {dimension_numbers = #tpu.dot_dimension_numbers<[1], [0], [0], [1], [0, 0, 1, 1], [], []>} : vector<24x64xf32>, vector<64x16xf32>, vector<24x16xf32> -> vector<24x16xf32>
    %c0_71 = arith.constant 0 : index
    %c0_72 = arith.constant 0 : index
    %c0_73 = arith.constant 0 : index
    %83 = vector.load %arg15[%c0_71, %c0_72, %c0_73] : memref<1x64x16xf32, #tpu.memory_space<vmem>>, vector<1x64x16xf32>
    %84 = vector.shape_cast %83 : vector<1x64x16xf32> to vector<64x16xf32>
    %cst_74 = arith.constant dense<0.000000e+00> : vector<24x16xf32>
    %85 = tpu.matmul %60, %84, %cst_74 {dimension_numbers = #tpu.dot_dimension_numbers<[1], [0], [0], [1], [0, 0, 1, 1], [], []>} : vector<24x64xf32>, vector<64x16xf32>, vector<24x16xf32> -> vector<24x16xf32>
    %86 = arith.mulf %73, %62 : vector<8x16xf32>
    %87 = arith.mulf %76, %64 : vector<8x16xf32>
    %88 = arith.addf %86, %87 : vector<8x16xf32>
    %89 = arith.mulf %79, %66 : vector<24x16xf32>
    %90 = arith.mulf %82, %68 : vector<24x16xf32>
    %91 = arith.addf %89, %90 : vector<24x16xf32>
    %c0_75 = arith.constant 0 : index
    %c0_76 = arith.constant 0 : index
    %c0_77 = arith.constant 0 : index
    %92 = vector.load %arg16[%c0_75, %c0_76, %c0_77] : memref<1x64x16xf32, #tpu.memory_space<vmem>>, vector<1x64x16xf32>
    %93 = vector.shape_cast %92 : vector<1x64x16xf32> to vector<64x16xf32>
    %cst_78 = arith.constant dense<0.000000e+00> : vector<24x16xf32>
    %94 = tpu.matmul %60, %93, %cst_78 {dimension_numbers = #tpu.dot_dimension_numbers<[1], [0], [0], [1], [0, 0, 1, 1], [], []>} : vector<24x64xf32>, vector<64x16xf32>, vector<24x16xf32> -> vector<24x16xf32>
    %95 = arith.mulf %85, %66 : vector<24x16xf32>
    %96 = arith.mulf %94, %68 : vector<24x16xf32>
    %97 = arith.addf %95, %96 : vector<24x16xf32>
    %98 = arith.mulf %94, %66 : vector<24x16xf32>
    %99 = arith.mulf %85, %68 : vector<24x16xf32>
    %100 = arith.subf %98, %99 : vector<24x16xf32>
    %cst_79 = arith.constant dense<0.000000e+00> : vector<8x24xf32>
    %101 = tpu.matmul %88, %91, %cst_79 {dimension_numbers = #tpu.dot_dimension_numbers<[1], [1], [0], [0], [0, 0, 1, 0], [], []>} : vector<8x16xf32>, vector<24x16xf32>, vector<8x24xf32> -> vector<8x24xf32>
    %cst_80 = arith.constant 2.500000e-01 : f32
    %102 = vector.broadcast %cst_80 : f32 to vector<8x24xf32>
    %103 = arith.mulf %101, %102 : vector<8x24xf32>
    %104 = vector.broadcast %70 : vector<1x24xf32> to vector<8x24xf32>
    %105 = arith.addf %103, %104 : vector<8x24xf32>
    %cst_81 = arith.constant dense<0xFF800000> : vector<8xf32>
    %106 = vector.multi_reduction <maximumf>, %105, %cst_81 [1] : vector<8x24xf32> to vector<8xf32>
    %107 = vector.shape_cast %106 : vector<8xf32> to vector<8x1xf32>
    %108 = vector.broadcast %107 : vector<8x1xf32> to vector<8x24xf32>
    %109 = arith.subf %105, %108 : vector<8x24xf32>
    %110 = math.exp %109 : vector<8x24xf32>
    %cst_82 = arith.constant dense<0.000000e+00> : vector<8xf32>
    %111 = vector.multi_reduction <add>, %110, %cst_82 [1] : vector<8x24xf32> to vector<8xf32>
    %112 = vector.shape_cast %111 : vector<8xf32> to vector<8x1xf32>
    %113 = vector.broadcast %112 : vector<8x1xf32> to vector<8x24xf32>
    %114 = arith.divf %110, %113 : vector<8x24xf32>
    %cst_83 = arith.constant dense<0.000000e+00> : vector<8x16xf32>
    %115 = tpu.matmul %114, %97, %cst_83 {dimension_numbers = #tpu.dot_dimension_numbers<[1], [0], [0], [1], [0, 0, 1, 1], [], []>} : vector<8x24xf32>, vector<24x16xf32>, vector<8x16xf32> -> vector<8x16xf32>
    %cst_84 = arith.constant dense<0.000000e+00> : vector<8x16xf32>
    %116 = tpu.matmul %114, %100, %cst_84 {dimension_numbers = #tpu.dot_dimension_numbers<[1], [0], [0], [1], [0, 0, 1, 1], [], []>} : vector<8x24xf32>, vector<24x16xf32>, vector<8x16xf32> -> vector<8x16xf32>
    %117 = arith.mulf %115, %62 : vector<8x16xf32>
    %118 = arith.mulf %116, %64 : vector<8x16xf32>
    %119 = arith.subf %117, %118 : vector<8x16xf32>
    %c0_85 = arith.constant 0 : index
    %c0_86 = arith.constant 0 : index
    %c0_87 = arith.constant 0 : index
    %120 = vector.load %arg17[%c0_85, %c0_86, %c0_87] : memref<1x16x64xf32, #tpu.memory_space<vmem>>, vector<1x16x64xf32>
    %121 = vector.shape_cast %120 : vector<1x16x64xf32> to vector<16x64xf32>
    %cst_88 = arith.constant dense<0.000000e+00> : vector<8x64xf32>
    %122 = tpu.matmul %119, %121, %cst_88 {dimension_numbers = #tpu.dot_dimension_numbers<[1], [0], [0], [1], [0, 0, 1, 1], [], []>} : vector<8x16xf32>, vector<16x64xf32>, vector<8x64xf32> -> vector<8x64xf32>
    %123 = vector.broadcast %4 : vector<1x64xf32> to vector<8x64xf32>
    %124 = arith.addf %123, %122 : vector<8x64xf32>
    %125 = arith.addf %14, %124 : vector<8x64xf32>
    %cst_89 = arith.constant dense<0.000000e+00> : vector<8xf32>
    %126 = vector.multi_reduction <add>, %125, %cst_89 [1] : vector<8x64xf32> to vector<8xf32>
    %127 = vector.shape_cast %126 : vector<8xf32> to vector<8x1xf32>
    %cst_90 = arith.constant 6.400000e+01 : f32
    %128 = vector.broadcast %cst_90 : f32 to vector<8x1xf32>
    %129 = arith.divf %127, %128 : vector<8x1xf32>
    %130 = vector.broadcast %129 : vector<8x1xf32> to vector<8x64xf32>
    %131 = arith.subf %125, %130 : vector<8x64xf32>
    %132 = arith.mulf %131, %131 : vector<8x64xf32>
    %cst_91 = arith.constant dense<0.000000e+00> : vector<8xf32>
    %133 = vector.multi_reduction <add>, %132, %cst_91 [1] : vector<8x64xf32> to vector<8xf32>
    %134 = vector.shape_cast %133 : vector<8xf32> to vector<8x1xf32>
    %cst_92 = arith.constant 6.400000e+01 : f32
    %135 = vector.broadcast %cst_92 : f32 to vector<8x1xf32>
    %136 = arith.divf %134, %135 : vector<8x1xf32>
    %137 = vector.broadcast %129 : vector<8x1xf32> to vector<8x64xf32>
    %138 = arith.subf %125, %137 : vector<8x64xf32>
    %cst_93 = arith.constant 9.99999974E-6 : f32
    %139 = vector.broadcast %cst_93 : f32 to vector<8x1xf32>
    %140 = arith.addf %136, %139 : vector<8x1xf32>
    %141 = math.rsqrt %140 : vector<8x1xf32>
    %142 = vector.broadcast %141 : vector<8x1xf32> to vector<8x64xf32>
    %143 = arith.mulf %138, %142 : vector<8x64xf32>
    %144 = vector.broadcast %5 : vector<1x64xf32> to vector<8x64xf32>
    %145 = arith.mulf %143, %144 : vector<8x64xf32>
    %146 = vector.broadcast %6 : vector<1x64xf32> to vector<8x64xf32>
    %147 = arith.addf %145, %146 : vector<8x64xf32>
    %cst_94 = arith.constant dense<0.000000e+00> : vector<8x256xf32>
    %148 = tpu.matmul %147, %7, %cst_94 {dimension_numbers = #tpu.dot_dimension_numbers<[1], [0], [0], [1], [0, 0, 1, 1], [], []>} : vector<8x64xf32>, vector<64x256xf32>, vector<8x256xf32> -> vector<8x256xf32>
    %149 = vector.broadcast %8 : vector<1x256xf32> to vector<8x256xf32>
    %150 = arith.addf %148, %149 : vector<8x256xf32>
    %cst_95 = arith.constant dense<0.000000e+00> : vector<8x256xf32>
    %151 = tpu.matmul %147, %9, %cst_95 {dimension_numbers = #tpu.dot_dimension_numbers<[1], [0], [0], [1], [0, 0, 1, 1], [], []>} : vector<8x64xf32>, vector<64x256xf32>, vector<8x256xf32> -> vector<8x256xf32>
    %152 = vector.broadcast %10 : vector<1x256xf32> to vector<8x256xf32>
    %153 = arith.addf %151, %152 : vector<8x256xf32>
    %cst_96 = arith.constant 5.000000e-01 : f32
    %154 = vector.broadcast %cst_96 : f32 to vector<8x256xf32>
    %155 = arith.mulf %154, %153 : vector<8x256xf32>
    %cst_97 = arith.constant 0.707106769 : f32
    %156 = vector.broadcast %cst_97 : f32 to vector<8x256xf32>
    %157 = arith.mulf %153, %156 : vector<8x256xf32>
    %158 = math.erf %157 : vector<8x256xf32>
    %cst_98 = arith.constant 1.000000e+00 : f32
    %159 = vector.broadcast %cst_98 : f32 to vector<8x256xf32>
    %160 = arith.addf %159, %158 : vector<8x256xf32>
    %161 = arith.mulf %155, %160 : vector<8x256xf32>
    %162 = arith.mulf %150, %161 : vector<8x256xf32>
    %cst_99 = arith.constant dense<0.000000e+00> : vector<8x64xf32>
    %163 = tpu.matmul %162, %11, %cst_99 {dimension_numbers = #tpu.dot_dimension_numbers<[1], [0], [0], [1], [0, 0, 1, 1], [], []>} : vector<8x256xf32>, vector<256x64xf32>, vector<8x64xf32> -> vector<8x64xf32>
    %164 = vector.broadcast %12 : vector<1x64xf32> to vector<8x64xf32>
    %165 = arith.addf %163, %164 : vector<8x64xf32>
    %166 = arith.addf %125, %165 : vector<8x64xf32>
    %c0_100 = arith.constant 0 : index
    %c0_101 = arith.constant 0 : index
    %c0_102 = arith.constant 0 : index
    %167 = vector.load %arg27[%c0_100, %c0_101, %c0_102] : memref<2x8x64xf32, #tpu.memory_space<vmem>>, vector<1x8x64xf32>
    %168 = vector.shape_cast %167 : vector<1x8x64xf32> to vector<8x64xf32>
    %169 = vector.shape_cast %166 : vector<8x64xf32> to vector<1x8x64xf32>
    tpu.vector_store %arg27[%c0_100, %c0_101, %c0_102], %169 {strides = array<i32>} : memref<2x8x64xf32, #tpu.memory_space<vmem>>, vector<1x8x64xf32>,
    %c1 = arith.constant 1 : index
    %c0_103 = arith.constant 0 : index
    %c0_104 = arith.constant 0 : index
    %170 = vector.load %arg0[%c1, %c0_103, %c0_104] : memref<2x8x64xf32, #tpu.memory_space<vmem>>, vector<1x8x64xf32>
    %171 = vector.shape_cast %170 : vector<1x8x64xf32> to vector<8x64xf32>
    %cst_105 = arith.constant dense<0.000000e+00> : vector<8xf32>
    %172 = vector.multi_reduction <add>, %171, %cst_105 [1] : vector<8x64xf32> to vector<8xf32>
    %173 = vector.shape_cast %172 : vector<8xf32> to vector<8x1xf32>
    %cst_106 = arith.constant 6.400000e+01 : f32
    %174 = vector.broadcast %cst_106 : f32 to vector<8x1xf32>
    %175 = arith.divf %173, %174 : vector<8x1xf32>
    %176 = vector.broadcast %175 : vector<8x1xf32> to vector<8x64xf32>
    %177 = arith.subf %171, %176 : vector<8x64xf32>
    %178 = arith.mulf %177, %177 : vector<8x64xf32>
    %cst_107 = arith.constant dense<0.000000e+00> : vector<8xf32>
    %179 = vector.multi_reduction <add>, %178, %cst_107 [1] : vector<8x64xf32> to vector<8xf32>
    %180 = vector.shape_cast %179 : vector<8xf32> to vector<8x1xf32>
    %cst_108 = arith.constant 6.400000e+01 : f32
    %181 = vector.broadcast %cst_108 : f32 to vector<8x1xf32>
    %182 = arith.divf %180, %181 : vector<8x1xf32>
    %183 = vector.broadcast %175 : vector<8x1xf32> to vector<8x64xf32>
    %184 = arith.subf %171, %183 : vector<8x64xf32>
    %cst_109 = arith.constant 9.99999974E-6 : f32
    %185 = vector.broadcast %cst_109 : f32 to vector<8x1xf32>
    %186 = arith.addf %182, %185 : vector<8x1xf32>
    %187 = math.rsqrt %186 : vector<8x1xf32>
    %188 = vector.broadcast %187 : vector<8x1xf32> to vector<8x64xf32>
    %189 = arith.mulf %184, %188 : vector<8x64xf32>
    %190 = vector.broadcast %0 : vector<1x64xf32> to vector<8x64xf32>
    %191 = arith.mulf %189, %190 : vector<8x64xf32>
    %192 = vector.broadcast %1 : vector<1x64xf32> to vector<8x64xf32>
    %193 = arith.addf %191, %192 : vector<8x64xf32>
    %c1_110 = arith.constant 1 : index
    %c0_111 = arith.constant 0 : index
    %c0_112 = arith.constant 0 : index
    %194 = vector.load %arg1[%c1_110, %c0_111, %c0_112] : memref<2x24x64xf32, #tpu.memory_space<vmem>>, vector<1x24x64xf32>
    %195 = vector.shape_cast %194 : vector<1x24x64xf32> to vector<24x64xf32>
    %cst_113 = arith.constant dense<0.000000e+00> : vector<24xf32>
    %196 = vector.multi_reduction <add>, %195, %cst_113 [1] : vector<24x64xf32> to vector<24xf32>
    %197 = vector.shape_cast %196 : vector<24xf32> to vector<24x1xf32>
    %cst_114 = arith.constant 6.400000e+01 : f32
    %198 = vector.broadcast %cst_114 : f32 to vector<24x1xf32>
    %199 = arith.divf %197, %198 : vector<24x1xf32>
    %200 = vector.broadcast %199 : vector<24x1xf32> to vector<24x64xf32>
    %201 = arith.subf %195, %200 : vector<24x64xf32>
    %202 = arith.mulf %201, %201 : vector<24x64xf32>
    %cst_115 = arith.constant dense<0.000000e+00> : vector<24xf32>
    %203 = vector.multi_reduction <add>, %202, %cst_115 [1] : vector<24x64xf32> to vector<24xf32>
    %204 = vector.shape_cast %203 : vector<24xf32> to vector<24x1xf32>
    %cst_116 = arith.constant 6.400000e+01 : f32
    %205 = vector.broadcast %cst_116 : f32 to vector<24x1xf32>
    %206 = arith.divf %204, %205 : vector<24x1xf32>
    %207 = vector.broadcast %199 : vector<24x1xf32> to vector<24x64xf32>
    %208 = arith.subf %195, %207 : vector<24x64xf32>
    %cst_117 = arith.constant 9.99999974E-6 : f32
    %209 = vector.broadcast %cst_117 : f32 to vector<24x1xf32>
    %210 = arith.addf %206, %209 : vector<24x1xf32>
    %211 = math.rsqrt %210 : vector<24x1xf32>
    %212 = vector.broadcast %211 : vector<24x1xf32> to vector<24x64xf32>
    %213 = arith.mulf %208, %212 : vector<24x64xf32>
    %214 = vector.broadcast %2 : vector<1x64xf32> to vector<24x64xf32>
    %215 = arith.mulf %213, %214 : vector<24x64xf32>
    %216 = vector.broadcast %3 : vector<1x64xf32> to vector<24x64xf32>
    %217 = arith.addf %215, %216 : vector<24x64xf32>
    %c1_118 = arith.constant 1 : index
    %c0_119 = arith.constant 0 : index
    %c0_120 = arith.constant 0 : index
    %218 = vector.load %arg2[%c1_118, %c0_119, %c0_120] : memref<2x8x16xf32, #tpu.memory_space<vmem>>, vector<1x8x16xf32>
    %219 = vector.shape_cast %218 : vector<1x8x16xf32> to vector<8x16xf32>
    %c1_121 = arith.constant 1 : index
    %c0_122 = arith.constant 0 : index
    %c0_123 = arith.constant 0 : index
    %220 = vector.load %arg3[%c1_121, %c0_122, %c0_123] : memref<2x8x16xf32, #tpu.memory_space<vmem>>, vector<1x8x16xf32>
    %221 = vector.shape_cast %220 : vector<1x8x16xf32> to vector<8x16xf32>
    %c1_124 = arith.constant 1 : index
    %c0_125 = arith.constant 0 : index
    %c0_126 = arith.constant 0 : index
    %222 = vector.load %arg4[%c1_124, %c0_125, %c0_126] : memref<2x24x16xf32, #tpu.memory_space<vmem>>, vector<1x24x16xf32>
    %223 = vector.shape_cast %222 : vector<1x24x16xf32> to vector<24x16xf32>
    %c1_127 = arith.constant 1 : index
    %c0_128 = arith.constant 0 : index
    %c0_129 = arith.constant 0 : index
    %224 = vector.load %arg5[%c1_127, %c0_128, %c0_129] : memref<2x24x16xf32, #tpu.memory_space<vmem>>, vector<1x24x16xf32>
    %225 = vector.shape_cast %224 : vector<1x24x16xf32> to vector<24x16xf32>
    %c1_130 = arith.constant 1 : index
    %c0_131 = arith.constant 0 : index
    %c0_132 = arith.constant 0 : index
    %226 = vector.load %arg6[%c1_130, %c0_131, %c0_132] : memref<2x1x24xf32, #tpu.memory_space<vmem>>, vector<1x1x24xf32>
    %227 = vector.shape_cast %226 : vector<1x1x24xf32> to vector<1x24xf32>
    %c0_133 = arith.constant 0 : index
    %c0_134 = arith.constant 0 : index
    %c0_135 = arith.constant 0 : index
    %228 = vector.load %arg11[%c0_133, %c0_134, %c0_135] : memref<1x64x16xf32, #tpu.memory_space<vmem>>, vector<1x64x16xf32>
    %229 = vector.shape_cast %228 : vector<1x64x16xf32> to vector<64x16xf32>
    %cst_136 = arith.constant dense<0.000000e+00> : vector<8x16xf32>
    %230 = tpu.matmul %193, %229, %cst_136 {dimension_numbers = #tpu.dot_dimension_numbers<[1], [0], [0], [1], [0, 0, 1, 1], [], []>} : vector<8x64xf32>, vector<64x16xf32>, vector<8x16xf32> -> vector<8x16xf32>
    %c0_137 = arith.constant 0 : index
    %c0_138 = arith.constant 0 : index
    %c0_139 = arith.constant 0 : index
    %231 = vector.load %arg12[%c0_137, %c0_138, %c0_139] : memref<1x64x16xf32, #tpu.memory_space<vmem>>, vector<1x64x16xf32>
    %232 = vector.shape_cast %231 : vector<1x64x16xf32> to vector<64x16xf32>
    %cst_140 = arith.constant dense<0.000000e+00> : vector<8x16xf32>
    %233 = tpu.matmul %193, %232, %cst_140 {dimension_numbers = #tpu.dot_dimension_numbers<[1], [0], [0], [1], [0, 0, 1, 1], [], []>} : vector<8x64xf32>, vector<64x16xf32>, vector<8x16xf32> -> vector<8x16xf32>
    %c0_141 = arith.constant 0 : index
    %c0_142 = arith.constant 0 : index
    %c0_143 = arith.constant 0 : index
    %234 = vector.load %arg13[%c0_141, %c0_142, %c0_143] : memref<1x64x16xf32, #tpu.memory_space<vmem>>, vector<1x64x16xf32>
    %235 = vector.shape_cast %234 : vector<1x64x16xf32> to vector<64x16xf32>
    %cst_144 = arith.constant dense<0.000000e+00> : vector<24x16xf32>
    %236 = tpu.matmul %217, %235, %cst_144 {dimension_numbers = #tpu.dot_dimension_numbers<[1], [0], [0], [1], [0, 0, 1, 1], [], []>} : vector<24x64xf32>, vector<64x16xf32>, vector<24x16xf32> -> vector<24x16xf32>
    %c0_145 = arith.constant 0 : index
    %c0_146 = arith.constant 0 : index
    %c0_147 = arith.constant 0 : index
    %237 = vector.load %arg14[%c0_145, %c0_146, %c0_147] : memref<1x64x16xf32, #tpu.memory_space<vmem>>, vector<1x64x16xf32>
    %238 = vector.shape_cast %237 : vector<1x64x16xf32> to vector<64x16xf32>
    %cst_148 = arith.constant dense<0.000000e+00> : vector<24x16xf32>
    %239 = tpu.matmul %217, %238, %cst_148 {dimension_numbers = #tpu.dot_dimension_numbers<[1], [0], [0], [1], [0, 0, 1, 1], [], []>} : vector<24x64xf32>, vector<64x16xf32>, vector<24x16xf32> -> vector<24x16xf32>
    %c0_149 = arith.constant 0 : index
    %c0_150 = arith.constant 0 : index
    %c0_151 = arith.constant 0 : index
    %240 = vector.load %arg15[%c0_149, %c0_150, %c0_151] : memref<1x64x16xf32, #tpu.memory_space<vmem>>, vector<1x64x16xf32>
    %241 = vector.shape_cast %240 : vector<1x64x16xf32> to vector<64x16xf32>
    %cst_152 = arith.constant dense<0.000000e+00> : vector<24x16xf32>
    %242 = tpu.matmul %217, %241, %cst_152 {dimension_numbers = #tpu.dot_dimension_numbers<[1], [0], [0], [1], [0, 0, 1, 1], [], []>} : vector<24x64xf32>, vector<64x16xf32>, vector<24x16xf32> -> vector<24x16xf32>
    %243 = arith.mulf %230, %219 : vector<8x16xf32>
    %244 = arith.mulf %233, %221 : vector<8x16xf32>
    %245 = arith.addf %243, %244 : vector<8x16xf32>
    %246 = arith.mulf %236, %223 : vector<24x16xf32>
    %247 = arith.mulf %239, %225 : vector<24x16xf32>
    %248 = arith.addf %246, %247 : vector<24x16xf32>
    %c0_153 = arith.constant 0 : index
    %c0_154 = arith.constant 0 : index
    %c0_155 = arith.constant 0 : index
    %249 = vector.load %arg16[%c0_153, %c0_154, %c0_155] : memref<1x64x16xf32, #tpu.memory_space<vmem>>, vector<1x64x16xf32>
    %250 = vector.shape_cast %249 : vector<1x64x16xf32> to vector<64x16xf32>
    %cst_156 = arith.constant dense<0.000000e+00> : vector<24x16xf32>
    %251 = tpu.matmul %217, %250, %cst_156 {dimension_numbers = #tpu.dot_dimension_numbers<[1], [0], [0], [1], [0, 0, 1, 1], [], []>} : vector<24x64xf32>, vector<64x16xf32>, vector<24x16xf32> -> vector<24x16xf32>
    %252 = arith.mulf %242, %223 : vector<24x16xf32>
    %253 = arith.mulf %251, %225 : vector<24x16xf32>
    %254 = arith.addf %252, %253 : vector<24x16xf32>
    %255 = arith.mulf %251, %223 : vector<24x16xf32>
    %256 = arith.mulf %242, %225 : vector<24x16xf32>
    %257 = arith.subf %255, %256 : vector<24x16xf32>
    %cst_157 = arith.constant dense<0.000000e+00> : vector<8x24xf32>
    %258 = tpu.matmul %245, %248, %cst_157 {dimension_numbers = #tpu.dot_dimension_numbers<[1], [1], [0], [0], [0, 0, 1, 0], [], []>} : vector<8x16xf32>, vector<24x16xf32>, vector<8x24xf32> -> vector<8x24xf32>
    %cst_158 = arith.constant 2.500000e-01 : f32
    %259 = vector.broadcast %cst_158 : f32 to vector<8x24xf32>
    %260 = arith.mulf %258, %259 : vector<8x24xf32>
    %261 = vector.broadcast %227 : vector<1x24xf32> to vector<8x24xf32>
    %262 = arith.addf %260, %261 : vector<8x24xf32>
    %cst_159 = arith.constant dense<0xFF800000> : vector<8xf32>
    %263 = vector.multi_reduction <maximumf>, %262, %cst_159 [1] : vector<8x24xf32> to vector<8xf32>
    %264 = vector.shape_cast %263 : vector<8xf32> to vector<8x1xf32>
    %265 = vector.broadcast %264 : vector<8x1xf32> to vector<8x24xf32>
    %266 = arith.subf %262, %265 : vector<8x24xf32>
    %267 = math.exp %266 : vector<8x24xf32>
    %cst_160 = arith.constant dense<0.000000e+00> : vector<8xf32>
    %268 = vector.multi_reduction <add>, %267, %cst_160 [1] : vector<8x24xf32> to vector<8xf32>
    %269 = vector.shape_cast %268 : vector<8xf32> to vector<8x1xf32>
    %270 = vector.broadcast %269 : vector<8x1xf32> to vector<8x24xf32>
    %271 = arith.divf %267, %270 : vector<8x24xf32>
    %cst_161 = arith.constant dense<0.000000e+00> : vector<8x16xf32>
    %272 = tpu.matmul %271, %254, %cst_161 {dimension_numbers = #tpu.dot_dimension_numbers<[1], [0], [0], [1], [0, 0, 1, 1], [], []>} : vector<8x24xf32>, vector<24x16xf32>, vector<8x16xf32> -> vector<8x16xf32>
    %cst_162 = arith.constant dense<0.000000e+00> : vector<8x16xf32>
    %273 = tpu.matmul %271, %257, %cst_162 {dimension_numbers = #tpu.dot_dimension_numbers<[1], [0], [0], [1], [0, 0, 1, 1], [], []>} : vector<8x24xf32>, vector<24x16xf32>, vector<8x16xf32> -> vector<8x16xf32>
    %274 = arith.mulf %272, %219 : vector<8x16xf32>
    %275 = arith.mulf %273, %221 : vector<8x16xf32>
    %276 = arith.subf %274, %275 : vector<8x16xf32>
    %c0_163 = arith.constant 0 : index
    %c0_164 = arith.constant 0 : index
    %c0_165 = arith.constant 0 : index
    %277 = vector.load %arg17[%c0_163, %c0_164, %c0_165] : memref<1x16x64xf32, #tpu.memory_space<vmem>>, vector<1x16x64xf32>
    %278 = vector.shape_cast %277 : vector<1x16x64xf32> to vector<16x64xf32>
    %cst_166 = arith.constant dense<0.000000e+00> : vector<8x64xf32>
    %279 = tpu.matmul %276, %278, %cst_166 {dimension_numbers = #tpu.dot_dimension_numbers<[1], [0], [0], [1], [0, 0, 1, 1], [], []>} : vector<8x16xf32>, vector<16x64xf32>, vector<8x64xf32> -> vector<8x64xf32>
    %280 = vector.broadcast %4 : vector<1x64xf32> to vector<8x64xf32>
    %281 = arith.addf %280, %279 : vector<8x64xf32>
    %282 = arith.addf %171, %281 : vector<8x64xf32>
    %cst_167 = arith.constant dense<0.000000e+00> : vector<8xf32>
    %283 = vector.multi_reduction <add>, %282, %cst_167 [1] : vector<8x64xf32> to vector<8xf32>
    %284 = vector.shape_cast %283 : vector<8xf32> to vector<8x1xf32>
    %cst_168 = arith.constant 6.400000e+01 : f32
    %285 = vector.broadcast %cst_168 : f32 to vector<8x1xf32>
    %286 = arith.divf %284, %285 : vector<8x1xf32>
    %287 = vector.broadcast %286 : vector<8x1xf32> to vector<8x64xf32>
    %288 = arith.subf %282, %287 : vector<8x64xf32>
    %289 = arith.mulf %288, %288 : vector<8x64xf32>
    %cst_169 = arith.constant dense<0.000000e+00> : vector<8xf32>
    %290 = vector.multi_reduction <add>, %289, %cst_169 [1] : vector<8x64xf32> to vector<8xf32>
    %291 = vector.shape_cast %290 : vector<8xf32> to vector<8x1xf32>
    %cst_170 = arith.constant 6.400000e+01 : f32
    %292 = vector.broadcast %cst_170 : f32 to vector<8x1xf32>
    %293 = arith.divf %291, %292 : vector<8x1xf32>
    %294 = vector.broadcast %286 : vector<8x1xf32> to vector<8x64xf32>
    %295 = arith.subf %282, %294 : vector<8x64xf32>
    %cst_171 = arith.constant 9.99999974E-6 : f32
    %296 = vector.broadcast %cst_171 : f32 to vector<8x1xf32>
    %297 = arith.addf %293, %296 : vector<8x1xf32>
    %298 = math.rsqrt %297 : vector<8x1xf32>
    %299 = vector.broadcast %298 : vector<8x1xf32> to vector<8x64xf32>
    %300 = arith.mulf %295, %299 : vector<8x64xf32>
    %301 = vector.broadcast %5 : vector<1x64xf32> to vector<8x64xf32>
    %302 = arith.mulf %300, %301 : vector<8x64xf32>
    %303 = vector.broadcast %6 : vector<1x64xf32> to vector<8x64xf32>
    %304 = arith.addf %302, %303 : vector<8x64xf32>
    %cst_172 = arith.constant dense<0.000000e+00> : vector<8x256xf32>
    %305 = tpu.matmul %304, %7, %cst_172 {dimension_numbers = #tpu.dot_dimension_numbers<[1], [0], [0], [1], [0, 0, 1, 1], [], []>} : vector<8x64xf32>, vector<64x256xf32>, vector<8x256xf32> -> vector<8x256xf32>
    %306 = vector.broadcast %8 : vector<1x256xf32> to vector<8x256xf32>
    %307 = arith.addf %305, %306 : vector<8x256xf32>
    %cst_173 = arith.constant dense<0.000000e+00> : vector<8x256xf32>
    %308 = tpu.matmul %304, %9, %cst_173 {dimension_numbers = #tpu.dot_dimension_numbers<[1], [0], [0], [1], [0, 0, 1, 1], [], []>} : vector<8x64xf32>, vector<64x256xf32>, vector<8x256xf32> -> vector<8x256xf32>
    %309 = vector.broadcast %10 : vector<1x256xf32> to vector<8x256xf32>
    %310 = arith.addf %308, %309 : vector<8x256xf32>
    %cst_174 = arith.constant 5.000000e-01 : f32
    %311 = vector.broadcast %cst_174 : f32 to vector<8x256xf32>
    %312 = arith.mulf %311, %310 : vector<8x256xf32>
    %cst_175 = arith.constant 0.707106769 : f32
    %313 = vector.broadcast %cst_175 : f32 to vector<8x256xf32>
    %314 = arith.mulf %310, %313 : vector<8x256xf32>
    %315 = math.erf %314 : vector<8x256xf32>
    %cst_176 = arith.constant 1.000000e+00 : f32
    %316 = vector.broadcast %cst_176 : f32 to vector<8x256xf32>
    %317 = arith.addf %316, %315 : vector<8x256xf32>
    %318 = arith.mulf %312, %317 : vector<8x256xf32>
    %319 = arith.mulf %307, %318 : vector<8x256xf32>
    %cst_177 = arith.constant dense<0.000000e+00> : vector<8x64xf32>
    %320 = tpu.matmul %319, %11, %cst_177 {dimension_numbers = #tpu.dot_dimension_numbers<[1], [0], [0], [1], [0, 0, 1, 1], [], []>} : vector<8x256xf32>, vector<256x64xf32>, vector<8x64xf32> -> vector<8x64xf32>
    %321 = vector.broadcast %12 : vector<1x64xf32> to vector<8x64xf32>
    %322 = arith.addf %320, %321 : vector<8x64xf32>
    %323 = arith.addf %282, %322 : vector<8x64xf32>
    %c1_178 = arith.constant 1 : index
    %c0_179 = arith.constant 0 : index
    %c0_180 = arith.constant 0 : index
    %324 = vector.load %arg27[%c1_178, %c0_179, %c0_180] : memref<2x8x64xf32, #tpu.memory_space<vmem>>, vector<1x8x64xf32>
    %325 = vector.shape_cast %324 : vector<1x8x64xf32> to vector<8x64xf32>
    %326 = vector.shape_cast %323 : vector<8x64xf32> to vector<1x8x64xf32>
    tpu.vector_store %arg27[%c1_178, %c0_179, %c0_180], %326 {strides = array<i32>} : memref<2x8x64xf32, #tpu.memory_space<vmem>>, vector<1x8x64xf32>,
    return
  }
}

</mosaic_0001>

<llo_original>
// kernel: tpu_custom_call.1
$region0: #{tpu_custom_call.1}
  #allocation0 [shape = 'u32[]', space=smem, size = 0x4, offset = 0x4, fixed_abs, tag = 'smem constant byte address 0x4 - core index']
  #allocation1 [shape = 'u32[144,128]{1,0:T(1,128)}', space=vmem, size = 0x12000, scoped, tag = 'internal scratch']
  %s0 = inlined_call_operand.vmem [shape: f32[2,8,64], index: 0, kind: input, shape index: {}]
  %s1 = inlined_call_operand.vmem [shape: f32[2,24,64], index: 1, kind: input, shape index: {}]
  %s2 = inlined_call_operand.vmem [shape: f32[2,8,16], index: 2, kind: input, shape index: {}]
  %s3 = inlined_call_operand.vmem [shape: f32[2,8,16], index: 3, kind: input, shape index: {}]
  %s4 = inlined_call_operand.vmem [shape: f32[2,24,16], index: 4, kind: input, shape index: {}]
  %s5 = inlined_call_operand.vmem [shape: f32[2,24,16], index: 5, kind: input, shape index: {}]
  %s6 = inlined_call_operand.vmem [shape: f32[2,1,24], index: 6, kind: input, shape index: {}]
  %s7 = inlined_call_operand.vmem [shape: f32[1,64], index: 7, kind: input, shape index: {}]
  %s8 = inlined_call_operand.vmem [shape: f32[1,64], index: 8, kind: input, shape index: {}]
  %s9 = inlined_call_operand.vmem [shape: f32[1,64], index: 9, kind: input, shape index: {}]
  %s10 = inlined_call_operand.vmem [shape: f32[1,64], index: 10, kind: input, shape index: {}]
  %s11 = inlined_call_operand.vmem [shape: f32[1,64,16], index: 11, kind: input, shape index: {}]
  %s12 = inlined_call_operand.vmem [shape: f32[1,64,16], index: 12, kind: input, shape index: {}]
  %s13 = inlined_call_operand.vmem [shape: f32[1,64,16], index: 13, kind: input, shape index: {}]
  %s14 = inlined_call_operand.vmem [shape: f32[1,64,16], index: 14, kind: input, shape index: {}]
  %s15 = inlined_call_operand.vmem [shape: f32[1,64,16], index: 15, kind: input, shape index: {}]
  %s16 = inlined_call_operand.vmem [shape: f32[1,64,16], index: 16, kind: input, shape index: {}]
  %s17 = inlined_call_operand.vmem [shape: f32[1,16,64], index: 17, kind: input, shape index: {}]
  %s18 = inlined_call_operand.vmem [shape: f32[1,64], index: 18, kind: input, shape index: {}]
  %s19 = inlined_call_operand.vmem [shape: f32[1,64], index: 19, kind: input, shape index: {}]
  %s20 = inlined_call_operand.vmem [shape: f32[1,64], index: 20, kind: input, shape index: {}]
  %s21 = inlined_call_operand.vmem [shape: f32[64,256], index: 21, kind: input, shape index: {}]
  %s22 = inlined_call_operand.vmem [shape: f32[1,256], index: 22, kind: input, shape index: {}]
  %s23 = inlined_call_operand.vmem [shape: f32[64,256], index: 23, kind: input, shape index: {}]
  %s24 = inlined_call_operand.vmem [shape: f32[1,256], index: 24, kind: input, shape index: {}]
  %s25 = inlined_call_operand.vmem [shape: f32[256,64], index: 25, kind: input, shape index: {}]
  %s26 = inlined_call_operand.vmem [shape: f32[1,64], index: 26, kind: input, shape index: {}]
  %s27 = inlined_call_operand.hbm [shape: f32[2,8,64], index: 27, kind: output, shape index: {}]
  %s28 = sld [smem:[#allocation0]]
  $region118: #{tpu_custom_call.1} parent=0
    _
  %s30 = ssub.s32 1, %s28
  %s31 = scalar_select 0, %s30, %s28
  $region1: #{tpu_custom_call.1} parent=0
    #allocation2 [shape = 'u8[8192]{0}', space=vmem, size = 0x2000, scoped, tag = 'output window, operand 0, single buffered']
    #allocation3 [shape = 's32[1]{0}', space=sflag, size = 0x4, scoped, tag = 'scoped memory for tpu_custom_call.1']
    %32 = vsyncpa [#allocation3], 0
    // Predicated region
    $region2: #{tpu_custom_call.1} parent=1 // pred_check
      _
    $region3: #{tpu_custom_call.1} parent=1 // pred_check_branch
      %34 = sbr.rel (0) target = $region5
    $region4: #{tpu_custom_call.1} parent=1 // pred_region
      _
    $region5: #{tpu_custom_call.1} parent=1 // pred_fallthru
      _
    // Predicated region
    $region6: #{tpu_custom_call.1} parent=1 // pred_check
      _
    $region7: #{tpu_custom_call.1} parent=1 // pred_check_branch
      %36 = sbr.rel (0) target = $region9
    $region8: #{tpu_custom_call.1} parent=1 // pred_region
      _
    $region9: #{tpu_custom_call.1} parent=1 // pred_fallthru
      _
    // Predicated region
    $region10: #{tpu_custom_call.1} parent=1 // pred_check
      _
    $region11: #{tpu_custom_call.1} parent=1 // pred_check_branch
      %38 = sbr.rel (0) target = $region13
    $region12: #{tpu_custom_call.1} parent=1 // pred_region
      _
    $region13: #{tpu_custom_call.1} parent=1 // pred_fallthru
      _
    // Predicated region
    $region14: #{tpu_custom_call.1} parent=1 // pred_check
      _
    $region15: #{tpu_custom_call.1} parent=1 // pred_check_branch
      %40 = sbr.rel (0) target = $region17
    $region16: #{tpu_custom_call.1} parent=1 // pred_region
      _
    $region17: #{tpu_custom_call.1} parent=1 // pred_fallthru
      _
    // Predicated region
    $region18: #{tpu_custom_call.1} parent=1 // pred_check
      _
    $region19: #{tpu_custom_call.1} parent=1 // pred_check_branch
      %42 = sbr.rel (0) target = $region21
    $region20: #{tpu_custom_call.1} parent=1 // pred_region
      _
    $region21: #{tpu_custom_call.1} parent=1 // pred_fallthru
      _
    // Predicated region
    $region22: #{tpu_custom_call.1} parent=1 // pred_check
      _
    $region23: #{tpu_custom_call.1} parent=1 // pred_check_branch
      %44 = sbr.rel (0) target = $region25
    $region24: #{tpu_custom_call.1} parent=1 // pred_region
      _
    $region25: #{tpu_custom_call.1} parent=1 // pred_fallthru
      _
    // Predicated region
    $region26: #{tpu_custom_call.1} parent=1 // pred_check
      _
    $region27: #{tpu_custom_call.1} parent=1 // pred_check_branch
      %46 = sbr.rel (0) target = $region29
    $region28: #{tpu_custom_call.1} parent=1 // pred_region
      _
    $region29: #{tpu_custom_call.1} parent=1 // pred_fallthru
      _
    // Predicated region
    $region30: #{tpu_custom_call.1} parent=1 // pred_check
      _
    $region31: #{tpu_custom_call.1} parent=1 // pred_check_branch
      %48 = sbr.rel (0) target = $region33
    $region32: #{tpu_custom_call.1} parent=1 // pred_region
      _
    $region33: #{tpu_custom_call.1} parent=1 // pred_fallthru
      _
    // Predicated region
    $region34: #{tpu_custom_call.1} parent=1 // pred_check
      _
    $region35: #{tpu_custom_call.1} parent=1 // pred_check_branch
      %50 = sbr.rel (0) target = $region37
    $region36: #{tpu_custom_call.1} parent=1 // pred_region
      _
    $region37: #{tpu_custom_call.1} parent=1 // pred_fallthru
      _
    // Predicated region
    $region38: #{tpu_custom_call.1} parent=1 // pred_check
      _
    $region39: #{tpu_custom_call.1} parent=1 // pred_check_branch
      %52 = sbr.rel (0) target = $region41
    $region40: #{tpu_custom_call.1} parent=1 // pred_region
      _
    $region41: #{tpu_custom_call.1} parent=1 // pred_fallthru
      _
    // Predicated region
    $region42: #{tpu_custom_call.1} parent=1 // pred_check
      _
    $region43: #{tpu_custom_call.1} parent=1 // pred_check_branch
      %54 = sbr.rel (0) target = $region45
    $region44: #{tpu_custom_call.1} parent=1 // pred_region
      _
    $region45: #{tpu_custom_call.1} parent=1 // pred_fallthru
      _
    // Predicated region
    $region46: #{tpu_custom_call.1} parent=1 // pred_check
      _
    $region47: #{tpu_custom_call.1} parent=1 // pred_check_branch
      %56 = sbr.rel (0) target = $region49
    $region48: #{tpu_custom_call.1} parent=1 // pred_region
      _
    $region49: #{tpu_custom_call.1} parent=1 // pred_fallthru
      _
    // Predicated region
    $region50: #{tpu_custom_call.1} parent=1 // pred_check
      _
    $region51: #{tpu_custom_call.1} parent=1 // pred_check_branch
      %58 = sbr.rel (0) target = $region53
    $region52: #{tpu_custom_call.1} parent=1 // pred_region
      _
    $region53: #{tpu_custom_call.1} parent=1 // pred_fallthru
      _
    // Predicated region
    $region54: #{tpu_custom_call.1} parent=1 // pred_check
      _
    $region55: #{tpu_custom_call.1} parent=1 // pred_check_branch
      %60 = sbr.rel (0) target = $region57
    $region56: #{tpu_custom_call.1} parent=1 // pred_region
      _
    $region57: #{tpu_custom_call.1} parent=1 // pred_fallthru
      _
    // Predicated region
    $region58: #{tpu_custom_call.1} parent=1 // pred_check
      _
    $region59: #{tpu_custom_call.1} parent=1 // pred_check_branch
      %62 = sbr.rel (0) target = $region61
    $region60: #{tpu_custom_call.1} parent=1 // pred_region
      _
    $region61: #{tpu_custom_call.1} parent=1 // pred_fallthru
      _
    // Predicated region
    $region62: #{tpu_custom_call.1} parent=1 // pred_check
      _
    $region63: #{tpu_custom_call.1} parent=1 // pred_check_branch
      %64 = sbr.rel (0) target = $region65
    $region64: #{tpu_custom_call.1} parent=1 // pred_region
      _
    $region65: #{tpu_custom_call.1} parent=1 // pred_fallthru
      _
    // Predicated region
    $region66: #{tpu_custom_call.1} parent=1 // pred_check
      _
    $region67: #{tpu_custom_call.1} parent=1 // pred_check_branch
      %66 = sbr.rel (0) target = $region69
    $region68: #{tpu_custom_call.1} parent=1 // pred_region
      _
    $region69: #{tpu_custom_call.1} parent=1 // pred_fallthru
      _
    // Predicated region
    $region70: #{tpu_custom_call.1} parent=1 // pred_check
      _
    $region71: #{tpu_custom_call.1} parent=1 // pred_check_branch
      %68 = sbr.rel (0) target = $region73
    $region72: #{tpu_custom_call.1} parent=1 // pred_region
      _
    $region73: #{tpu_custom_call.1} parent=1 // pred_fallthru
      _
    // Predicated region
    $region74: #{tpu_custom_call.1} parent=1 // pred_check
      _
    $region75: #{tpu_custom_call.1} parent=1 // pred_check_branch
      %70 = sbr.rel (0) target = $region77
    $region76: #{tpu_custom_call.1} parent=1 // pred_region
      _
    $region77: #{tpu_custom_call.1} parent=1 // pred_fallthru
      _
    // Predicated region
    $region78: #{tpu_custom_call.1} parent=1 // pred_check
      _
    $region79: #{tpu_custom_call.1} parent=1 // pred_check_branch
      %72 = sbr.rel (0) target = $region81
    $region80: #{tpu_custom_call.1} parent=1 // pred_region
      _
    $region81: #{tpu_custom_call.1} parent=1 // pred_fallthru
      _
    // Predicated region
    $region82: #{tpu_custom_call.1} parent=1 // pred_check
      _
    $region83: #{tpu_custom_call.1} parent=1 // pred_check_branch
      %74 = sbr.rel (0) target = $region85
    $region84: #{tpu_custom_call.1} parent=1 // pred_region
      _
    $region85: #{tpu_custom_call.1} parent=1 // pred_fallthru
      _
    // Predicated region
    $region86: #{tpu_custom_call.1} parent=1 // pred_check
      _
    $region87: #{tpu_custom_call.1} parent=1 // pred_check_branch
      %76 = sbr.rel (0) target = $region89
    $region88: #{tpu_custom_call.1} parent=1 // pred_region
      _
    $region89: #{tpu_custom_call.1} parent=1 // pred_fallthru
      _
    // Predicated region
    $region90: #{tpu_custom_call.1} parent=1 // pred_check
      _
    $region91: #{tpu_custom_call.1} parent=1 // pred_check_branch
      %78 = sbr.rel (0) target = $region93
    $region92: #{tpu_custom_call.1} parent=1 // pred_region
      _
    $region93: #{tpu_custom_call.1} parent=1 // pred_fallthru
      _
    // Predicated region
    $region94: #{tpu_custom_call.1} parent=1 // pred_check
      _
    $region95: #{tpu_custom_call.1} parent=1 // pred_check_branch
      %80 = sbr.rel (0) target = $region97
    $region96: #{tpu_custom_call.1} parent=1 // pred_region
      _
    $region97: #{tpu_custom_call.1} parent=1 // pred_fallthru
      _
    // Predicated region
    $region98: #{tpu_custom_call.1} parent=1 // pred_check
      _
    $region99: #{tpu_custom_call.1} parent=1 // pred_check_branch
      %82 = sbr.rel (0) target = $region101
    $region100: #{tpu_custom_call.1} parent=1 // pred_region
      _
    $region101: #{tpu_custom_call.1} parent=1 // pred_fallthru
      _
    // Predicated region
    $region102: #{tpu_custom_call.1} parent=1 // pred_check
      _
    $region103: #{tpu_custom_call.1} parent=1 // pred_check_branch
      %84 = sbr.rel (0) target = $region105
    $region104: #{tpu_custom_call.1} parent=1 // pred_region
      _
    $region105: #{tpu_custom_call.1} parent=1 // pred_fallthru
      _
    // Predicated region
    $region106: #{tpu_custom_call.1} parent=1 // pred_check
      _
    $region107: #{tpu_custom_call.1} parent=1 // pred_check_branch
      %86 = sbr.rel (0) target = $region109
    $region108: #{tpu_custom_call.1} parent=1 // pred_region
      _
    $region109: #{tpu_custom_call.1} parent=1 // pred_fallthru
      _
    %v87 = vld [vmem:[%s7] sm:$0x1]
    %v88 = vld [vmem:[%s8] sm:$0x1]
    %v89 = vld [vmem:[%s9] sm:$0x1]
    %v90 = vld [vmem:[%s10] sm:$0x1]
    %v91 = vld [vmem:[%s18] sm:$0x1]
    %v92 = vld [vmem:[%s19] sm:$0x1]
    %v93 = vld [vmem:[%s20] sm:$0x1]
    %v94 = vld [vmem:[%s21] sm:$0xff]
    %v95 = vld [vmem:[%s21 + $0x8] sm:$0xff]
    %v96 = vld [vmem:[%s21 + $0x10] sm:$0xff]
    %v97 = vld [vmem:[%s21 + $0x18] sm:$0xff]
    %v98 = vld [vmem:[%s21 + $0x20] sm:$0xff]
    %v99 = vld [vmem:[%s21 + $0x28] sm:$0xff]
    %v100 = vld [vmem:[%s21 + $0x30] sm:$0xff]
    %v101 = vld [vmem:[%s21 + $0x38] sm:$0xff]
    %v102 = vld [vmem:[%s21 + $0x40] sm:$0xff]
    %v103 = vld [vmem:[%s21 + $0x48] sm:$0xff]
    %v104 = vld [vmem:[%s21 + $0x50] sm:$0xff]
    %v105 = vld [vmem:[%s21 + $0x58] sm:$0xff]
    %v106 = vld [vmem:[%s21 + $0x60] sm:$0xff]
    %v107 = vld [vmem:[%s21 + $0x68] sm:$0xff]
    %v108 = vld [vmem:[%s21 + $0x70] sm:$0xff]
    %v109 = vld [vmem:[%s21 + $0x78] sm:$0xff]
    %v110 = vld [vmem:[%s22] sm:$0x3]
    %v111 = vld [vmem:[%s23] sm:$0xff]
    %v112 = vld [vmem:[%s23 + $0x8] sm:$0xff]
    %v113 = vld [vmem:[%s23 + $0x10] sm:$0xff]
    %v114 = vld [vmem:[%s23 + $0x18] sm:$0xff]
    %v115 = vld [vmem:[%s23 + $0x20] sm:$0xff]
    %v116 = vld [vmem:[%s23 + $0x28] sm:$0xff]
    %v117 = vld [vmem:[%s23 + $0x30] sm:$0xff]
    %v118 = vld [vmem:[%s23 + $0x38] sm:$0xff]
    %v119 = vld [vmem:[%s23 + $0x40] sm:$0xff]
    %v120 = vld [vmem:[%s23 + $0x48] sm:$0xff]
    %v121 = vld [vmem:[%s23 + $0x50] sm:$0xff]
    %v122 = vld [vmem:[%s23 + $0x58] sm:$0xff]
    %v123 = vld [vmem:[%s23 + $0x60] sm:$0xff]
    %v124 = vld [vmem:[%s23 + $0x68] sm:$0xff]
    %v125 = vld [vmem:[%s23 + $0x70] sm:$0xff]
    %v126 = vld [vmem:[%s23 + $0x78] sm:$0xff]
    %v127 = vld [vmem:[%s24] sm:$0x3]
    %v128 = vld [vmem:[%s25] sm:$0xff]
    %v129 = vld [vmem:[%s25 + $0x8] sm:$0xff]
    %v130 = vld [vmem:[%s25 + $0x10] sm:$0xff]
    %v131 = vld [vmem:[%s25 + $0x18] sm:$0xff]
    %v132 = vld [vmem:[%s25 + $0x20] sm:$0xff]
    %v133 = vld [vmem:[%s25 + $0x28] sm:$0xff]
    %v134 = vld [vmem:[%s25 + $0x30] sm:$0xff]
    %v135 = vld [vmem:[%s25 + $0x38] sm:$0xff]
    %v136 = vld [vmem:[%s25 + $0x40] sm:$0xff]
    %v137 = vld [vmem:[%s25 + $0x48] sm:$0xff]
    %v138 = vld [vmem:[%s25 + $0x50] sm:$0xff]
    %v139 = vld [vmem:[%s25 + $0x58] sm:$0xff]
    %v140 = vld [vmem:[%s25 + $0x60] sm:$0xff]
    %v141 = vld [vmem:[%s25 + $0x68] sm:$0xff]
    %v142 = vld [vmem:[%s25 + $0x70] sm:$0xff]
    %v143 = vld [vmem:[%s25 + $0x78] sm:$0xff]
    %v144 = vld [vmem:[%s25 + $0x80] sm:$0xff]
    %v145 = vld [vmem:[%s25 + $0x88] sm:$0xff]
    %v146 = vld [vmem:[%s25 + $0x90] sm:$0xff]
    %v147 = vld [vmem:[%s25 + $0x98] sm:$0xff]
    %v148 = vld [vmem:[%s25 + $0xa0] sm:$0xff]
    %v149 = vld [vmem:[%s25 + $0xa8] sm:$0xff]
    %v150 = vld [vmem:[%s25 + $0xb0] sm:$0xff]
    %v151 = vld [vmem:[%s25 + $0xb8] sm:$0xff]
    %v152 = vld [vmem:[%s25 + $0xc0] sm:$0xff]
    %v153 = vld [vmem:[%s25 + $0xc8] sm:$0xff]
    %v154 = vld [vmem:[%s25 + $0xd0] sm:$0xff]
    %v155 = vld [vmem:[%s25 + $0xd8] sm:$0xff]
    %v156 = vld [vmem:[%s25 + $0xe0] sm:$0xff]
    %v157 = vld [vmem:[%s25 + $0xe8] sm:$0xff]
    %v158 = vld [vmem:[%s25 + $0xf0] sm:$0xff]
    %v159 = vld [vmem:[%s25 + $0xf8] sm:$0xff]
    %v160 = vld [vmem:[%s26] sm:$0x1]
    %v161 = vld [vmem:[%s0] sm:$0xff]
    %vm162 = vcmask 523264
    %v163 = vsel %vm162, %v161, 0.0
    %164 = vadd.xlane.f32.xlu0 %v163
    %v165 = vpop.xlane.xlu0 %164
    %v166 = vrcp.pop 64.0
    %v167 = vmul.f32 %v165, %v166
    %v168 = vsub.f32 %v161, %v167
    %v169 = vmul.f32 %v168, %v168
    %v170 = vsel %vm162, %v169, 0.0
    %171 = vadd.xlane.f32.xlu0 %v170
    %v172 = vpop.xlane.xlu0 %171
    %v173 = vmul.f32 %v172, %v166
    %v174 = vadd.f32 %v173, 1e-05
    %v175 = vrsqrt.pop %v174
    %v176 = vmul.f32 %v168, %v175
    %v178 = vlaneseq
    %v179 = vshrl.u32 %v178, 7
    %v180 = vsub.s32 0, %v179
    %v181 = vrot.slane %v87, %v180
    %v183 = vmul.f32 %v176, %v181
    %v185 = vlaneseq
    %v186 = vshrl.u32 %v185, 7
    %v187 = vsub.s32 0, %v186
    %v188 = vrot.slane %v88, %v187
    %v190 = vadd.f32 %v183, %v188
    %v191 = vld [vmem:[%s1] sm:$0xff]
    %v192 = vld [vmem:[%s1 + $0x8] sm:$0xff]
    %v193 = vld [vmem:[%s1 + $0x10] sm:$0xff]
    %v194 = vsel %vm162, %v191, 0.0
    %195 = vadd.xlane.f32.xlu0 %v194
    %v196 = vpop.xlane.xlu0 %195
    %v197 = vsel %vm162, %v192, 0.0
    %198 = vadd.xlane.f32.xlu0 %v197
    %v199 = vpop.xlane.xlu0 %198
    %v200 = vsel %vm162, %v193, 0.0
    %201 = vadd.xlane.f32.xlu0 %v200
    %v202 = vpop.xlane.xlu0 %201
    %v203 = vmul.f32 %v196, %v166
    %v204 = vmul.f32 %v199, %v166
    %v205 = vmul.f32 %v202, %v166
    %v206 = vsub.f32 %v191, %v203
    %v207 = vsub.f32 %v192, %v204
    %v208 = vsub.f32 %v193, %v205
    %v209 = vmul.f32 %v206, %v206
    %v210 = vmul.f32 %v207, %v207
    %v211 = vmul.f32 %v208, %v208
    %v212 = vsel %vm162, %v209, 0.0
    %213 = vadd.xlane.f32.xlu0 %v212
    %v214 = vpop.xlane.xlu0 %213
    %v215 = vsel %vm162, %v210, 0.0
    %216 = vadd.xlane.f32.xlu0 %v215
    %v217 = vpop.xlane.xlu0 %216
    %v218 = vsel %vm162, %v211, 0.0
    %219 = vadd.xlane.f32.xlu0 %v218
    %v220 = vpop.xlane.xlu0 %219
    %v221 = vmul.f32 %v214, %v166
    %v222 = vmul.f32 %v217, %v166
    %v223 = vmul.f32 %v220, %v166
    %v224 = vadd.f32 %v221, 1e-05
    %v225 = vadd.f32 %v222, 1e-05
    %v226 = vadd.f32 %v223, 1e-05
    %v227 = vrsqrt.pop %v224
    %v228 = vrsqrt.pop %v225
    %v229 = vrsqrt.pop %v226
    %v230 = vmul.f32 %v206, %v227
    %v231 = vmul.f32 %v207, %v228
    %v232 = vmul.f32 %v208, %v229
    %v234 = vlaneseq
    %v235 = vshrl.u32 %v234, 7
    %v236 = vsub.s32 0, %v235
    %v237 = vrot.slane %v89, %v236
    %v239 = vmul.f32 %v230, %v237
    %v240 = vmul.f32 %v231, %v237
    %v241 = vmul.f32 %v232, %v237
    %v243 = vlaneseq
    %v244 = vshrl.u32 %v243, 7
    %v245 = vsub.s32 0, %v244
    %v246 = vrot.slane %v90, %v245
    %v248 = vadd.f32 %v239, %v246
    %v249 = vadd.f32 %v240, %v246
    %v250 = vadd.f32 %v241, %v246
    %v251 = vld [vmem:[%s2] sm:$0xff]
    %v252 = vld [vmem:[%s3] sm:$0xff]
    %v253 = vld [vmem:[%s4] sm:$0xff]
    %v254 = vld [vmem:[%s4 + $0x8] sm:$0xff]
    %v255 = vld [vmem:[%s4 + $0x10] sm:$0xff]
    %v256 = vld [vmem:[%s5] sm:$0xff]
    %v257 = vld [vmem:[%s5 + $0x8] sm:$0xff]
    %v258 = vld [vmem:[%s5 + $0x10] sm:$0xff]
    %v259 = vld [vmem:[%s6] sm:$0x1]
    %v260 = vld [vmem:[%s11] sm:$0xff]
    %v261 = vld [vmem:[%s11 + $0x8] sm:$0xff]
    %v262 = vld [vmem:[%s11 + $0x10] sm:$0xff]
    %v263 = vld [vmem:[%s11 + $0x18] sm:$0xff]
    %v264 = vld [vmem:[%s11 + $0x20] sm:$0xff]
    %v265 = vld [vmem:[%s11 + $0x28] sm:$0xff]
    %v266 = vld [vmem:[%s11 + $0x30] sm:$0xff]
    %v267 = vld [vmem:[%s11 + $0x38] sm:$0xff]
    %v269 = vsel %vm162, %v190, 0
    %271 = vmatprep.subr.mxu0 0.0
    %272 = vmatpush1.msra.mxu0 %v260
    %273 = vmatprep.subr.mxu0 0.0
    %274 = vmatpush1.msra.mxu0 %v261
    %275 = vmatprep.subr.mxu0 0.0
    %276 = vmatpush1.msra.mxu0 %v262
    %277 = vmatprep.subr.mxu0 0.0
    %278 = vmatpush1.msra.mxu0 %v263
    %279 = vmatprep.subr.mxu0 0.0
    %280 = vmatpush1.msra.mxu0 %v264
    %281 = vmatprep.subr.mxu0 0.0
    %282 = vmatpush1.msra.mxu0 %v265
    %283 = vmatprep.subr.mxu0 0.0
    %284 = vmatpush1.msra.mxu0 %v266
    %285 = vmatprep.subr.mxu0 0.0
    %286 = vmatpush1.msra.mxu0 %v267
    %287 = vmatprep.subr.mxu0 0.0
    %288 = vmatpush1.msra.mxu0 0.0
    %289 = vmatprep.subr.mxu0 0.0
    %290 = vmatpush1.msra.mxu0 0.0
    %291 = vmatprep.subr.mxu0 0.0
    %292 = vmatpush1.msra.mxu0 0.0
    %293 = vmatprep.subr.mxu0 0.0
    %294 = vmatpush1.msra.mxu0 0.0
    %295 = vmatprep.subr.mxu0 0.0
    %296 = vmatpush1.msra.mxu0 0.0
    %297 = vmatprep.subr.mxu0 0.0
    %298 = vmatpush1.msra.mxu0 0.0
    %299 = vmatprep.subr.mxu0 0.0
    %300 = vmatpush1.msra.mxu0 0.0
    %301 = vmatprep.subr.mxu0 0.0
    %302 = vmatpush1.msra.mxu0 0.0
    %303 = vmatprep.subr.mxu0 0.0
    %304 = vmatpush1.msra.mxu0 0.0
    %305 = vmatprep.subr.mxu0 0.0
    %306 = vmatpush1.msra.mxu0 0.0
    %307 = vmatprep.subr.mxu0 0.0
    %308 = vmatpush1.msra.mxu0 0.0
    %309 = vmatprep.subr.mxu0 0.0
    %310 = vmatpush1.msra.mxu0 0.0
    %311 = vmatprep.subr.mxu0 0.0
    %312 = vmatpush1.msra.mxu0 0.0
    %313 = vmatprep.subr.mxu0 0.0
    %314 = vmatpush1.msra.mxu0 0.0
    %315 = vmatprep.subr.mxu0 0.0
    %316 = vmatpush1.msra.mxu0 0.0
    %317 = vmatprep.subr.mxu0 0.0
    %318 = vmatpush1.msra.mxu0 0.0
    %319 = vmatprep.subr.mxu0 0.0
    %320 = vmatpush1.msra.mxu0 0.0
    %321 = vmatprep.subr.mxu0 0.0
    %322 = vmatpush1.msra.mxu0 0.0
    %323 = vmatprep.subr.mxu0 0.0
    %324 = vmatpush1.msra.mxu0 0.0
    %325 = vmatprep.subr.mxu0 0.0
    %326 = vmatpush1.msra.mxu0 0.0
    %327 = vmatprep.subr.mxu0 0.0
    %328 = vmatpush1.msra.mxu0 0.0
    %329 = vmatprep.subr.mxu0 0.0
    %330 = vmatpush1.msra.mxu0 0.0
    %331 = vmatprep.subr.mxu0 0.0
    %332 = vmatpush1.msra.mxu0 0.0
    %333 = vmatprep.subr.mxu0 0.0
    %334 = vmatpush1.msra.mxu0 0.0
    %335 = vmatprep.mubr.f32.mxu0 0.0
    %336 = vmatmul.mubr.f32.gmra.mrb[0].mxu0 %v269
    %v337 = vpop.f32.mrb[0].mxu0
    %v338 = vadd.f32 0.0, %v337
    %v339 = vpop.f32.mrb[0].mxu0
    %340 = vdwg.mxu0
    %v341 = vld [vmem:[%s12] sm:$0xff]
    %v342 = vld [vmem:[%s12 + $0x8] sm:$0xff]
    %v343 = vld [vmem:[%s12 + $0x10] sm:$0xff]
    %v344 = vld [vmem:[%s12 + $0x18] sm:$0xff]
    %v345 = vld [vmem:[%s12 + $0x20] sm:$0xff]
    %v346 = vld [vmem:[%s12 + $0x28] sm:$0xff]
    %v347 = vld [vmem:[%s12 + $0x30] sm:$0xff]
    %v348 = vld [vmem:[%s12 + $0x38] sm:$0xff]
    %349 = vmatprep.subr.mxu0 0.0
    %350 = vmatpush1.msra.mxu0 %v341
    %351 = vmatprep.subr.mxu0 0.0
    %352 = vmatpush1.msra.mxu0 %v342
    %353 = vmatprep.subr.mxu0 0.0
    %354 = vmatpush1.msra.mxu0 %v343
    %355 = vmatprep.subr.mxu0 0.0
    %356 = vmatpush1.msra.mxu0 %v344
    %357 = vmatprep.subr.mxu0 0.0
    %358 = vmatpush1.msra.mxu0 %v345
    %359 = vmatprep.subr.mxu0 0.0
    %360 = vmatpush1.msra.mxu0 %v346
    %361 = vmatprep.subr.mxu0 0.0
    %362 = vmatpush1.msra.mxu0 %v347
    %363 = vmatprep.subr.mxu0 0.0
    %364 = vmatpush1.msra.mxu0 %v348
    %365 = vmatprep.subr.mxu0 0.0
    %366 = vmatpush1.msra.mxu0 0.0
    %367 = vmatprep.subr.mxu0 0.0
    %368 = vmatpush1.msra.mxu0 0.0
    %369 = vmatprep.subr.mxu0 0.0
    %370 = vmatpush1.msra.mxu0 0.0
    %371 = vmatprep.subr.mxu0 0.0
    %372 = vmatpush1.msra.mxu0 0.0
    %373 = vmatprep.subr.mxu0 0.0
    %374 = vmatpush1.msra.mxu0 0.0
    %375 = vmatprep.subr.mxu0 0.0
    %376 = vmatpush1.msra.mxu0 0.0
    %377 = vmatprep.subr.mxu0 0.0
    %378 = vmatpush1.msra.mxu0 0.0
    %379 = vmatprep.subr.mxu0 0.0
    %380 = vmatpush1.msra.mxu0 0.0
    %381 = vmatprep.subr.mxu0 0.0
    %382 = vmatpush1.msra.mxu0 0.0
    %383 = vmatprep.subr.mxu0 0.0
    %384 = vmatpush1.msra.mxu0 0.0
    %385 = vmatprep.subr.mxu0 0.0
    %386 = vmatpush1.msra.mxu0 0.0
    %387 = vmatprep.subr.mxu0 0.0
    %388 = vmatpush1.msra.mxu0 0.0
    %389 = vmatprep.subr.mxu0 0.0
    %390 = vmatpush1.msra.mxu0 0.0
    %391 = vmatprep.subr.mxu0 0.0
    %392 = vmatpush1.msra.mxu0 0.0
    %393 = vmatprep.subr.mxu0 0.0
    %394 = vmatpush1.msra.mxu0 0.0
    %395 = vmatprep.subr.mxu0 0.0
    %396 = vmatpush1.msra.mxu0 0.0
    %397 = vmatprep.subr.mxu0 0.0
    %398 = vmatpush1.msra.mxu0 0.0
    %399 = vmatprep.subr.mxu0 0.0
    %400 = vmatpush1.msra.mxu0 0.0
    %401 = vmatprep.subr.mxu0 0.0
    %402 = vmatpush1.msra.mxu0 0.0
    %403 = vmatprep.subr.mxu0 0.0
    %404 = vmatpush1.msra.mxu0 0.0
    %405 = vmatprep.subr.mxu0 0.0
    %406 = vmatpush1.msra.mxu0 0.0
    %407 = vmatprep.subr.mxu0 0.0
    %408 = vmatpush1.msra.mxu0 0.0
    %409 = vmatprep.subr.mxu0 0.0
    %410 = vmatpush1.msra.mxu0 0.0
    %411 = vmatprep.subr.mxu0 0.0
    %412 = vmatpush1.msra.mxu0 0.0
    %413 = vmatprep.mubr.f32.mxu0 0.0
    %414 = vmatmul.mubr.f32.gmra.mrb[0].mxu0 %v269
    %v415 = vpop.f32.mrb[0].mxu0
    %v416 = vadd.f32 0.0, %v415
    %v417 = vpop.f32.mrb[0].mxu0
    %418 = vdwg.mxu0
    %v419 = vld [vmem:[%s13] sm:$0xff]
    %v420 = vld [vmem:[%s13 + $0x8] sm:$0xff]
    %v421 = vld [vmem:[%s13 + $0x10] sm:$0xff]
    %v422 = vld [vmem:[%s13 + $0x18] sm:$0xff]
    %v423 = vld [vmem:[%s13 + $0x20] sm:$0xff]
    %v424 = vld [vmem:[%s13 + $0x28] sm:$0xff]
    %v425 = vld [vmem:[%s13 + $0x30] sm:$0xff]
    %v426 = vld [vmem:[%s13 + $0x38] sm:$0xff]
    %v428 = vsel %vm162, %v248, 0
    %v431 = vsel %vm162, %v249, 0
    %v434 = vsel %vm162, %v250, 0
    %436 = vmatprep.subr.mxu0 0.0
    %437 = vmatpush1.msra.mxu0 %v419
    %438 = vmatprep.subr.mxu0 0.0
    %439 = vmatpush1.msra.mxu0 %v420
    %440 = vmatprep.subr.mxu0 0.0
    %441 = vmatpush1.msra.mxu0 %v421
    %442 = vmatprep.subr.mxu0 0.0
    %443 = vmatpush1.msra.mxu0 %v422
    %444 = vmatprep.subr.mxu0 0.0
    %445 = vmatpush1.msra.mxu0 %v423
    %446 = vmatprep.subr.mxu0 0.0
    %447 = vmatpush1.msra.mxu0 %v424
    %448 = vmatprep.subr.mxu0 0.0
    %449 = vmatpush1.msra.mxu0 %v425
    %450 = vmatprep.subr.mxu0 0.0
    %451 = vmatpush1.msra.mxu0 %v426
    %452 = vmatprep.subr.mxu0 0.0
    %453 = vmatpush1.msra.mxu0 0.0
    %454 = vmatprep.subr.mxu0 0.0
    %455 = vmatpush1.msra.mxu0 0.0
    %456 = vmatprep.subr.mxu0 0.0
    %457 = vmatpush1.msra.mxu0 0.0
    %458 = vmatprep.subr.mxu0 0.0
    %459 = vmatpush1.msra.mxu0 0.0
    %460 = vmatprep.subr.mxu0 0.0
    %461 = vmatpush1.msra.mxu0 0.0
    %462 = vmatprep.subr.mxu0 0.0
    %463 = vmatpush1.msra.mxu0 0.0
    %464 = vmatprep.subr.mxu0 0.0
    %465 = vmatpush1.msra.mxu0 0.0
    %466 = vmatprep.subr.mxu0 0.0
    %467 = vmatpush1.msra.mxu0 0.0
    %468 = vmatprep.subr.mxu0 0.0
    %469 = vmatpush1.msra.mxu0 0.0
    %470 = vmatprep.subr.mxu0 0.0
    %471 = vmatpush1.msra.mxu0 0.0
    %472 = vmatprep.subr.mxu0 0.0
    %473 = vmatpush1.msra.mxu0 0.0
    %474 = vmatprep.subr.mxu0 0.0
    %475 = vmatpush1.msra.mxu0 0.0
    %476 = vmatprep.subr.mxu0 0.0
    %477 = vmatpush1.msra.mxu0 0.0
    %478 = vmatprep.subr.mxu0 0.0
    %479 = vmatpush1.msra.mxu0 0.0
    %480 = vmatprep.subr.mxu0 0.0
    %481 = vmatpush1.msra.mxu0 0.0
    %482 = vmatprep.subr.mxu0 0.0
    %483 = vmatpush1.msra.mxu0 0.0
    %484 = vmatprep.subr.mxu0 0.0
    %485 = vmatpush1.msra.mxu0 0.0
    %486 = vmatprep.subr.mxu0 0.0
    %487 = vmatpush1.msra.mxu0 0.0
    %488 = vmatprep.subr.mxu0 0.0
    %489 = vmatpush1.msra.mxu0 0.0
    %490 = vmatprep.subr.mxu0 0.0
    %491 = vmatpush1.msra.mxu0 0.0
    %492 = vmatprep.subr.mxu0 0.0
    %493 = vmatpush1.msra.mxu0 0.0
    %494 = vmatprep.subr.mxu0 0.0
    %495 = vmatpush1.msra.mxu0 0.0
    %496 = vmatprep.subr.mxu0 0.0
    %497 = vmatpush1.msra.mxu0 0.0
    %498 = vmatprep.subr.mxu0 0.0
    %499 = vmatpush1.msra.mxu0 0.0
    %500 = vmatprep.mubr.f32.mxu0 0.0
    %501 = vmatmul.mubr.f32.gmra.mrb[0].mxu0 %v428
    %v502 = vpop.f32.mrb[0].mxu0
    %v503 = vadd.f32 0.0, %v502
    %v504 = vpop.f32.mrb[0].mxu0
    %505 = vmatprep.mubr.f32.mxu0 0.0
    %506 = vmatmul.mubr.f32.gmra.mrb[0].mxu0 %v431
    %v507 = vpop.f32.mrb[0].mxu0
    %v508 = vadd.f32 0.0, %v507
    %v509 = vpop.f32.mrb[0].mxu0
    %510 = vmatprep.mubr.f32.mxu0 0.0
    %511 = vmatmul.mubr.f32.gmra.mrb[0].mxu0 %v434
    %v512 = vpop.f32.mrb[0].mxu0
    %v513 = vadd.f32 0.0, %v512
    %v514 = vpop.f32.mrb[0].mxu0
    %515 = vdwg.mxu0
    %v516 = vld [vmem:[%s14] sm:$0xff]
    %v517 = vld [vmem:[%s14 + $0x8] sm:$0xff]
    %v518 = vld [vmem:[%s14 + $0x10] sm:$0xff]
    %v519 = vld [vmem:[%s14 + $0x18] sm:$0xff]
    %v520 = vld [vmem:[%s14 + $0x20] sm:$0xff]
    %v521 = vld [vmem:[%s14 + $0x28] sm:$0xff]
    %v522 = vld [vmem:[%s14 + $0x30] sm:$0xff]
    %v523 = vld [vmem:[%s14 + $0x38] sm:$0xff]
    %524 = vmatprep.subr.mxu0 0.0
    %525 = vmatpush1.msra.mxu0 %v516
    %526 = vmatprep.subr.mxu0 0.0
    %527 = vmatpush1.msra.mxu0 %v517
    %528 = vmatprep.subr.mxu0 0.0
    %529 = vmatpush1.msra.mxu0 %v518
    %530 = vmatprep.subr.mxu0 0.0
    %531 = vmatpush1.msra.mxu0 %v519
    %532 = vmatprep.subr.mxu0 0.0
    %533 = vmatpush1.msra.mxu0 %v520
    %534 = vmatprep.subr.mxu0 0.0
    %535 = vmatpush1.msra.mxu0 %v521
    %536 = vmatprep.subr.mxu0 0.0
    %537 = vmatpush1.msra.mxu0 %v522
    %538 = vmatprep.subr.mxu0 0.0
    %539 = vmatpush1.msra.mxu0 %v523
    %540 = vmatprep.subr.mxu0 0.0
    %541 = vmatpush1.msra.mxu0 0.0
    %542 = vmatprep.subr.mxu0 0.0
    %543 = vmatpush1.msra.mxu0 0.0
    %544 = vmatprep.subr.mxu0 0.0
    %545 = vmatpush1.msra.mxu0 0.0
    %546 = vmatprep.subr.mxu0 0.0
    %547 = vmatpush1.msra.mxu0 0.0
    %548 = vmatprep.subr.mxu0 0.0
    %549 = vmatpush1.msra.mxu0 0.0
    %550 = vmatprep.subr.mxu0 0.0
    %551 = vmatpush1.msra.mxu0 0.0
    %552 = vmatprep.subr.mxu0 0.0
    %553 = vmatpush1.msra.mxu0 0.0
    %554 = vmatprep.subr.mxu0 0.0
    %555 = vmatpush1.msra.mxu0 0.0
    %556 = vmatprep.subr.mxu0 0.0
    %557 = vmatpush1.msra.mxu0 0.0
    %558 = vmatprep.subr.mxu0 0.0
    %559 = vmatpush1.msra.mxu0 0.0
    %560 = vmatprep.subr.mxu0 0.0
    %561 = vmatpush1.msra.mxu0 0.0
    %562 = vmatprep.subr.mxu0 0.0
    %563 = vmatpush1.msra.mxu0 0.0
    %564 = vmatprep.subr.mxu0 0.0
    %565 = vmatpush1.msra.mxu0 0.0
    %566 = vmatprep.subr.mxu0 0.0
    %567 = vmatpush1.msra.mxu0 0.0
    %568 = vmatprep.subr.mxu0 0.0
    %569 = vmatpush1.msra.mxu0 0.0
    %570 = vmatprep.subr.mxu0 0.0
    %571 = vmatpush1.msra.mxu0 0.0
    %572 = vmatprep.subr.mxu0 0.0
    %573 = vmatpush1.msra.mxu0 0.0
    %574 = vmatprep.subr.mxu0 0.0
    %575 = vmatpush1.msra.mxu0 0.0
    %576 = vmatprep.subr.mxu0 0.0
    %577 = vmatpush1.msra.mxu0 0.0
    %578 = vmatprep.subr.mxu0 0.0
    %579 = vmatpush1.msra.mxu0 0.0
    %580 = vmatprep.subr.mxu0 0.0
    %581 = vmatpush1.msra.mxu0 0.0
    %582 = vmatprep.subr.mxu0 0.0
    %583 = vmatpush1.msra.mxu0 0.0
    %584 = vmatprep.subr.mxu0 0.0
    %585 = vmatpush1.msra.mxu0 0.0
    %586 = vmatprep.subr.mxu0 0.0
    %587 = vmatpush1.msra.mxu0 0.0
    %588 = vmatprep.mubr.f32.mxu0 0.0
    %589 = vmatmul.mubr.f32.gmra.mrb[0].mxu0 %v428
    %v590 = vpop.f32.mrb[0].mxu0
    %v591 = vadd.f32 0.0, %v590
    %v592 = vpop.f32.mrb[0].mxu0
    %593 = vmatprep.mubr.f32.mxu0 0.0
    %594 = vmatmul.mubr.f32.gmra.mrb[0].mxu0 %v431
    %v595 = vpop.f32.mrb[0].mxu0
    %v596 = vadd.f32 0.0, %v595
    %v597 = vpop.f32.mrb[0].mxu0
    %598 = vmatprep.mubr.f32.mxu0 0.0
    %599 = vmatmul.mubr.f32.gmra.mrb[0].mxu0 %v434
    %v600 = vpop.f32.mrb[0].mxu0
    %v601 = vadd.f32 0.0, %v600
    %v602 = vpop.f32.mrb[0].mxu0
    %603 = vdwg.mxu0
    %v604 = vld [vmem:[%s15] sm:$0xff]
    %v605 = vld [vmem:[%s15 + $0x8] sm:$0xff]
    %v606 = vld [vmem:[%s15 + $0x10] sm:$0xff]
    %v607 = vld [vmem:[%s15 + $0x18] sm:$0xff]
    %v608 = vld [vmem:[%s15 + $0x20] sm:$0xff]
    %v609 = vld [vmem:[%s15 + $0x28] sm:$0xff]
    %v610 = vld [vmem:[%s15 + $0x30] sm:$0xff]
    %v611 = vld [vmem:[%s15 + $0x38] sm:$0xff]
    %612 = vmatprep.subr.mxu0 0.0
    %613 = vmatpush1.msra.mxu0 %v604
    %614 = vmatprep.subr.mxu0 0.0
    %615 = vmatpush1.msra.mxu0 %v605
    %616 = vmatprep.subr.mxu0 0.0
    %617 = vmatpush1.msra.mxu0 %v606
    %618 = vmatprep.subr.mxu0 0.0
    %619 = vmatpush1.msra.mxu0 %v607
    %620 = vmatprep.subr.mxu0 0.0
    %621 = vmatpush1.msra.mxu0 %v608
    %622 = vmatprep.subr.mxu0 0.0
    %623 = vmatpush1.msra.mxu0 %v609
    %624 = vmatprep.subr.mxu0 0.0
    %625 = vmatpush1.msra.mxu0 %v610
    %626 = vmatprep.subr.mxu0 0.0
    %627 = vmatpush1.msra.mxu0 %v611
    %628 = vmatprep.subr.mxu0 0.0
    %629 = vmatpush1.msra.mxu0 0.0
    %630 = vmatprep.subr.mxu0 0.0
    %631 = vmatpush1.msra.mxu0 0.0
    %632 = vmatprep.subr.mxu0 0.0
    %633 = vmatpush1.msra.mxu0 0.0
    %634 = vmatprep.subr.mxu0 0.0
    %635 = vmatpush1.msra.mxu0 0.0
    %636 = vmatprep.subr.mxu0 0.0
    %637 = vmatpush1.msra.mxu0 0.0
    %638 = vmatprep.subr.mxu0 0.0
    %639 = vmatpush1.msra.mxu0 0.0
    %640 = vmatprep.subr.mxu0 0.0
    %641 = vmatpush1.msra.mxu0 0.0
    %642 = vmatprep.subr.mxu0 0.0
    %643 = vmatpush1.msra.mxu0 0.0
    %644 = vmatprep.subr.mxu0 0.0
    %645 = vmatpush1.msra.mxu0 0.0
    %646 = vmatprep.subr.mxu0 0.0
    %647 = vmatpush1.msra.mxu0 0.0
    %648 = vmatprep.subr.mxu0 0.0
    %649 = vmatpush1.msra.mxu0 0.0
    %650 = vmatprep.subr.mxu0 0.0
    %651 = vmatpush1.msra.mxu0 0.0
    %652 = vmatprep.subr.mxu0 0.0
    %653 = vmatpush1.msra.mxu0 0.0
    %654 = vmatprep.subr.mxu0 0.0
    %655 = vmatpush1.msra.mxu0 0.0
    %656 = vmatprep.subr.mxu0 0.0
    %657 = vmatpush1.msra.mxu0 0.0
    %658 = vmatprep.subr.mxu0 0.0
    %659 = vmatpush1.msra.mxu0 0.0
    %660 = vmatprep.subr.mxu0 0.0
    %661 = vmatpush1.msra.mxu0 0.0
    %662 = vmatprep.subr.mxu0 0.0
    %663 = vmatpush1.msra.mxu0 0.0
    %664 = vmatprep.subr.mxu0 0.0
    %665 = vmatpush1.msra.mxu0 0.0
    %666 = vmatprep.subr.mxu0 0.0
    %667 = vmatpush1.msra.mxu0 0.0
    %668 = vmatprep.subr.mxu0 0.0
    %669 = vmatpush1.msra.mxu0 0.0
    %670 = vmatprep.subr.mxu0 0.0
    %671 = vmatpush1.msra.mxu0 0.0
    %672 = vmatprep.subr.mxu0 0.0
    %673 = vmatpush1.msra.mxu0 0.0
    %674 = vmatprep.subr.mxu0 0.0
    %675 = vmatpush1.msra.mxu0 0.0
    %676 = vmatprep.mubr.f32.mxu0 0.0
    %677 = vmatmul.mubr.f32.gmra.mrb[0].mxu0 %v428
    %v678 = vpop.f32.mrb[0].mxu0
    %v679 = vadd.f32 0.0, %v678
    %v680 = vpop.f32.mrb[0].mxu0
    %681 = vmatprep.mubr.f32.mxu0 0.0
    %682 = vmatmul.mubr.f32.gmra.mrb[0].mxu0 %v431
    %v683 = vpop.f32.mrb[0].mxu0
    %v684 = vadd.f32 0.0, %v683
    %v685 = vpop.f32.mrb[0].mxu0
    %686 = vmatprep.mubr.f32.mxu0 0.0
    %687 = vmatmul.mubr.f32.gmra.mrb[0].mxu0 %v434
    %v688 = vpop.f32.mrb[0].mxu0
    %v689 = vadd.f32 0.0, %v688
    %v690 = vpop.f32.mrb[0].mxu0
    %691 = vdwg.mxu0
    %v692 = vmul.f32 %v338, %v251
    %v693 = vmul.f32 %v416, %v252
    %v694 = vadd.f32 %v692, %v693
    %v695 = vmul.f32 %v503, %v253
    %v696 = vmul.f32 %v508, %v254
    %v697 = vmul.f32 %v513, %v255
    %v698 = vmul.f32 %v591, %v256
    %v699 = vmul.f32 %v596, %v257
    %v700 = vmul.f32 %v601, %v258
    %v701 = vadd.f32 %v695, %v698
    %v702 = vadd.f32 %v696, %v699
    %v703 = vadd.f32 %v697, %v700
    %v704 = vld [vmem:[%s16] sm:$0xff]
    %v705 = vld [vmem:[%s16 + $0x8] sm:$0xff]
    %v706 = vld [vmem:[%s16 + $0x10] sm:$0xff]
    %v707 = vld [vmem:[%s16 + $0x18] sm:$0xff]
    %v708 = vld [vmem:[%s16 + $0x20] sm:$0xff]
    %v709 = vld [vmem:[%s16 + $0x28] sm:$0xff]
    %v710 = vld [vmem:[%s16 + $0x30] sm:$0xff]
    %v711 = vld [vmem:[%s16 + $0x38] sm:$0xff]
    %712 = vmatprep.subr.mxu0 0.0
    %713 = vmatpush1.msra.mxu0 %v704
    %714 = vmatprep.subr.mxu0 0.0
    %715 = vmatpush1.msra.mxu0 %v705
    %716 = vmatprep.subr.mxu0 0.0
    %717 = vmatpush1.msra.mxu0 %v706
    %718 = vmatprep.subr.mxu0 0.0
    %719 = vmatpush1.msra.mxu0 %v707
    %720 = vmatprep.subr.mxu0 0.0
    %721 = vmatpush1.msra.mxu0 %v708
    %722 = vmatprep.subr.mxu0 0.0
    %723 = vmatpush1.msra.mxu0 %v709
    %724 = vmatprep.subr.mxu0 0.0
    %725 = vmatpush1.msra.mxu0 %v710
    %726 = vmatprep.subr.mxu0 0.0
    %727 = vmatpush1.msra.mxu0 %v711
    %728 = vmatprep.subr.mxu0 0.0
    %729 = vmatpush1.msra.mxu0 0.0
    %730 = vmatprep.subr.mxu0 0.0
    %731 = vmatpush1.msra.mxu0 0.0
    %732 = vmatprep.subr.mxu0 0.0
    %733 = vmatpush1.msra.mxu0 0.0
    %734 = vmatprep.subr.mxu0 0.0
    %735 = vmatpush1.msra.mxu0 0.0
    %736 = vmatprep.subr.mxu0 0.0
    %737 = vmatpush1.msra.mxu0 0.0
    %738 = vmatprep.subr.mxu0 0.0
    %739 = vmatpush1.msra.mxu0 0.0
    %740 = vmatprep.subr.mxu0 0.0
    %741 = vmatpush1.msra.mxu0 0.0
    %742 = vmatprep.subr.mxu0 0.0
    %743 = vmatpush1.msra.mxu0 0.0
    %744 = vmatprep.subr.mxu0 0.0
    %745 = vmatpush1.msra.mxu0 0.0
    %746 = vmatprep.subr.mxu0 0.0
    %747 = vmatpush1.msra.mxu0 0.0
    %748 = vmatprep.subr.mxu0 0.0
    %749 = vmatpush1.msra.mxu0 0.0
    %750 = vmatprep.subr.mxu0 0.0
    %751 = vmatpush1.msra.mxu0 0.0
    %752 = vmatprep.subr.mxu0 0.0
    %753 = vmatpush1.msra.mxu0 0.0
    %754 = vmatprep.subr.mxu0 0.0
    %755 = vmatpush1.msra.mxu0 0.0
    %756 = vmatprep.subr.mxu0 0.0
    %757 = vmatpush1.msra.mxu0 0.0
    %758 = vmatprep.subr.mxu0 0.0
    %759 = vmatpush1.msra.mxu0 0.0
    %760 = vmatprep.subr.mxu0 0.0
    %761 = vmatpush1.msra.mxu0 0.0
    %762 = vmatprep.subr.mxu0 0.0
    %763 = vmatpush1.msra.mxu0 0.0
    %764 = vmatprep.subr.mxu0 0.0
    %765 = vmatpush1.msra.mxu0 0.0
    %766 = vmatprep.subr.mxu0 0.0
    %767 = vmatpush1.msra.mxu0 0.0
    %768 = vmatprep.subr.mxu0 0.0
    %769 = vmatpush1.msra.mxu0 0.0
    %770 = vmatprep.subr.mxu0 0.0
    %771 = vmatpush1.msra.mxu0 0.0
    %772 = vmatprep.subr.mxu0 0.0
    %773 = vmatpush1.msra.mxu0 0.0
    %774 = vmatprep.subr.mxu0 0.0
    %775 = vmatpush1.msra.mxu0 0.0
    %776 = vmatprep.mubr.f32.mxu0 0.0
    %777 = vmatmul.mubr.f32.gmra.mrb[0].mxu0 %v428
    %v778 = vpop.f32.mrb[0].mxu0
    %v779 = vadd.f32 0.0, %v778
    %v780 = vpop.f32.mrb[0].mxu0
    %781 = vmatprep.mubr.f32.mxu0 0.0
    %782 = vmatmul.mubr.f32.gmra.mrb[0].mxu0 %v431
    %v783 = vpop.f32.mrb[0].mxu0
    %v784 = vadd.f32 0.0, %v783
    %v785 = vpop.f32.mrb[0].mxu0
    %786 = vmatprep.mubr.f32.mxu0 0.0
    %787 = vmatmul.mubr.f32.gmra.mrb[0].mxu0 %v434
    %v788 = vpop.f32.mrb[0].mxu0
    %v789 = vadd.f32 0.0, %v788
    %v790 = vpop.f32.mrb[0].mxu0
    %791 = vdwg.mxu0
    %v792 = vmul.f32 %v679, %v253
    %v793 = vmul.f32 %v684, %v254
    %v794 = vmul.f32 %v689, %v255
    %v795 = vmul.f32 %v779, %v256
    %v796 = vmul.f32 %v784, %v257
    %v797 = vmul.f32 %v789, %v258
    %v798 = vadd.f32 %v792, %v795
    %v799 = vadd.f32 %v793, %v796
    %v800 = vadd.f32 %v794, %v797
    %v801 = vmul.f32 %v779, %v253
    %v802 = vmul.f32 %v784, %v254
    %v803 = vmul.f32 %v789, %v255
    %v804 = vmul.f32 %v679, %v256
    %v805 = vmul.f32 %v684, %v257
    %v806 = vmul.f32 %v689, %v258
    %v807 = vsub.f32 %v801, %v804
    %v808 = vsub.f32 %v802, %v805
    %v809 = vsub.f32 %v803, %v806
    %vm810 = vcmask 130048
    %v812 = vsel %vm810, %v694, 0
    %v815 = vsel %vm810, %v701, 0
    %v818 = vsel %vm810, %v702, 0
    %v821 = vsel %vm810, %v703, 0
    %823 = vmatprep.subr.mxu0 0.0
    %824 = vmatpush1.xpose.msra.mxu0 %v815
    %825 = vmatprep.subr.mxu0 0.0
    %826 = vmatpush1.xpose.msra.mxu0 %v818
    %827 = vmatprep.subr.mxu0 0.0
    %828 = vmatpush1.xpose.msra.mxu0 %v821
    %829 = vmatprep.subr.mxu0 0.0
    %830 = vmatpush1.xpose.msra.mxu0 0.0
    %831 = vmatprep.subr.mxu0 0.0
    %832 = vmatpush1.xpose.msra.mxu0 0.0
    %833 = vmatprep.subr.mxu0 0.0
    %834 = vmatpush1.xpose.msra.mxu0 0.0
    %835 = vmatprep.subr.mxu0 0.0
    %836 = vmatpush1.xpose.msra.mxu0 0.0
    %837 = vmatprep.subr.mxu0 0.0
    %838 = vmatpush1.xpose.msra.mxu0 0.0
    %839 = vmatprep.subr.mxu0 0.0
    %840 = vmatpush1.xpose.msra.mxu0 0.0
    %841 = vmatprep.subr.mxu0 0.0
    %842 = vmatpush1.xpose.msra.mxu0 0.0
    %843 = vmatprep.subr.mxu0 0.0
    %844 = vmatpush1.xpose.msra.mxu0 0.0
    %845 = vmatprep.subr.mxu0 0.0
    %846 = vmatpush1.xpose.msra.mxu0 0.0
    %847 = vmatprep.subr.mxu0 0.0
    %848 = vmatpush1.xpose.msra.mxu0 0.0
    %849 = vmatprep.subr.mxu0 0.0
    %850 = vmatpush1.xpose.msra.mxu0 0.0
    %851 = vmatprep.subr.mxu0 0.0
    %852 = vmatpush1.xpose.msra.mxu0 0.0
    %853 = vmatprep.subr.mxu0 0.0
    %854 = vmatpush1.xpose.msra.mxu0 0.0
    %855 = vmatprep.subr.mxu0 0.0
    %856 = vmatpush1.xpose.msra.mxu0 0.0
    %857 = vmatprep.subr.mxu0 0.0
    %858 = vmatpush1.xpose.msra.mxu0 0.0
    %859 = vmatprep.subr.mxu0 0.0
    %860 = vmatpush1.xpose.msra.mxu0 0.0
    %861 = vmatprep.subr.mxu0 0.0
    %862 = vmatpush1.xpose.msra.mxu0 0.0
    %863 = vmatprep.subr.mxu0 0.0
    %864 = vmatpush1.xpose.msra.mxu0 0.0
    %865 = vmatprep.subr.mxu0 0.0
    %866 = vmatpush1.xpose.msra.mxu0 0.0
    %867 = vmatprep.subr.mxu0 0.0
    %868 = vmatpush1.xpose.msra.mxu0 0.0
    %869 = vmatprep.subr.mxu0 0.0
    %870 = vmatpush1.xpose.msra.mxu0 0.0
    %871 = vmatprep.subr.mxu0 0.0
    %872 = vmatpush1.xpose.msra.mxu0 0.0
    %873 = vmatprep.subr.mxu0 0.0
    %874 = vmatpush1.xpose.msra.mxu0 0.0
    %875 = vmatprep.subr.mxu0 0.0
    %876 = vmatpush1.xpose.msra.mxu0 0.0
    %877 = vmatprep.subr.mxu0 0.0
    %878 = vmatpush1.xpose.msra.mxu0 0.0
    %879 = vmatprep.subr.mxu0 0.0
    %880 = vmatpush1.xpose.msra.mxu0 0.0
    %881 = vmatprep.subr.mxu0 0.0
    %882 = vmatpush1.xpose.msra.mxu0 0.0
    %883 = vmatprep.subr.mxu0 0.0
    %884 = vmatpush1.xpose.msra.mxu0 0.0
    %885 = vmatprep.subr.mxu0 0.0
    %886 = vmatpush1.xpose.msra.mxu0 0.0
    %887 = vmatprep.mubr.f32.mxu0 0.0
    %888 = vmatmul.mubr.f32.gmra.mrb[0].mxu0 %v812
    %v889 = vpop.f32.mrb[0].mxu0
    %v890 = vadd.f32 0.0, %v889
    %v891 = vpop.f32.mrb[0].mxu0
    %892 = vdwg.mxu0
    %v893 = vmul.f32 %v890, 0.25
    %v895 = vlaneseq
    %v896 = vshrl.u32 %v895, 7
    %v897 = vsub.s32 0, %v896
    %v898 = vrot.slane %v259, %v897
    %v900 = vadd.f32 %v893, %v898
    %vm901 = vcmask 195584
    %v902 = vsel %vm901, %v900, -inf
    %903 = vmax.xlane.f32.xlu0 %v902
    %v904 = vpop.xlane.xlu0 %903
    %v905 = vsub.f32 %v900, %v904
    %v906 = vmul.f32 %v905, 1.442695
    %v907 = vpow.pop %v906
    %v908 = vsel %vm901, %v907, 0.0
    %909 = vadd.xlane.f32.xlu0 %v908
    %v910 = vpop.xlane.xlu0 %909
    %v911 = vrcp.pop %v910
    %v912 = vmul.f32 %v907, %v911
    %v914 = vsel %vm901, %v912, 0
    %916 = vmatprep.subr.mxu0 0.0
    %917 = vmatpush1.msra.mxu0 %v798
    %918 = vmatprep.subr.mxu0 0.0
    %919 = vmatpush1.msra.mxu0 %v799
    %920 = vmatprep.subr.mxu0 0.0
    %921 = vmatpush1.msra.mxu0 %v800
    %922 = vmatprep.subr.mxu0 0.0
    %923 = vmatpush1.msra.mxu0 0.0
    %924 = vmatprep.subr.mxu0 0.0
    %925 = vmatpush1.msra.mxu0 0.0
    %926 = vmatprep.subr.mxu0 0.0
    %927 = vmatpush1.msra.mxu0 0.0
    %928 = vmatprep.subr.mxu0 0.0
    %929 = vmatpush1.msra.mxu0 0.0
    %930 = vmatprep.subr.mxu0 0.0
    %931 = vmatpush1.msra.mxu0 0.0
    %932 = vmatprep.subr.mxu0 0.0
    %933 = vmatpush1.msra.mxu0 0.0
    %934 = vmatprep.subr.mxu0 0.0
    %935 = vmatpush1.msra.mxu0 0.0
    %936 = vmatprep.subr.mxu0 0.0
    %937 = vmatpush1.msra.mxu0 0.0
    %938 = vmatprep.subr.mxu0 0.0
    %939 = vmatpush1.msra.mxu0 0.0
    %940 = vmatprep.subr.mxu0 0.0
    %941 = vmatpush1.msra.mxu0 0.0
    %942 = vmatprep.subr.mxu0 0.0
    %943 = vmatpush1.msra.mxu0 0.0
    %944 = vmatprep.subr.mxu0 0.0
    %945 = vmatpush1.msra.mxu0 0.0
    %946 = vmatprep.subr.mxu0 0.0
    %947 = vmatpush1.msra.mxu0 0.0
    %948 = vmatprep.subr.mxu0 0.0
    %949 = vmatpush1.msra.mxu0 0.0
    %950 = vmatprep.subr.mxu0 0.0
    %951 = vmatpush1.msra.mxu0 0.0
    %952 = vmatprep.subr.mxu0 0.0
    %953 = vmatpush1.msra.mxu0 0.0
    %954 = vmatprep.subr.mxu0 0.0
    %955 = vmatpush1.msra.mxu0 0.0
    %956 = vmatprep.subr.mxu0 0.0
    %957 = vmatpush1.msra.mxu0 0.0
    %958 = vmatprep.subr.mxu0 0.0
    %959 = vmatpush1.msra.mxu0 0.0
    %960 = vmatprep.subr.mxu0 0.0
    %961 = vmatpush1.msra.mxu0 0.0
    %962 = vmatprep.subr.mxu0 0.0
    %963 = vmatpush1.msra.mxu0 0.0
    %964 = vmatprep.subr.mxu0 0.0
    %965 = vmatpush1.msra.mxu0 0.0
    %966 = vmatprep.subr.mxu0 0.0
    %967 = vmatpush1.msra.mxu0 0.0
    %968 = vmatprep.subr.mxu0 0.0
    %969 = vmatpush1.msra.mxu0 0.0
    %970 = vmatprep.subr.mxu0 0.0
    %971 = vmatpush1.msra.mxu0 0.0
    %972 = vmatprep.subr.mxu0 0.0
    %973 = vmatpush1.msra.mxu0 0.0
    %974 = vmatprep.subr.mxu0 0.0
    %975 = vmatpush1.msra.mxu0 0.0
    %976 = vmatprep.subr.mxu0 0.0
    %977 = vmatpush1.msra.mxu0 0.0
    %978 = vmatprep.subr.mxu0 0.0
    %979 = vmatpush1.msra.mxu0 0.0
    %980 = vmatprep.mubr.f32.mxu0 0.0
    %981 = vmatmul.mubr.f32.gmra.mrb[0].mxu0 %v914
    %v982 = vpop.f32.mrb[0].mxu0
    %v983 = vadd.f32 0.0, %v982
    %v984 = vpop.f32.mrb[0].mxu0
    %985 = vdwg.mxu0
    %986 = vmatprep.subr.mxu0 0.0
    %987 = vmatpush1.msra.mxu0 %v807
    %988 = vmatprep.subr.mxu0 0.0
    %989 = vmatpush1.msra.mxu0 %v808
    %990 = vmatprep.subr.mxu0 0.0
    %991 = vmatpush1.msra.mxu0 %v809
    %992 = vmatprep.subr.mxu0 0.0
    %993 = vmatpush1.msra.mxu0 0.0
    %994 = vmatprep.subr.mxu0 0.0
    %995 = vmatpush1.msra.mxu0 0.0
    %996 = vmatprep.subr.mxu0 0.0
    %997 = vmatpush1.msra.mxu0 0.0
    %998 = vmatprep.subr.mxu0 0.0
    %999 = vmatpush1.msra.mxu0 0.0
    %1000 = vmatprep.subr.mxu0 0.0
    %1001 = vmatpush1.msra.mxu0 0.0
    %1002 = vmatprep.subr.mxu0 0.0
    %1003 = vmatpush1.msra.mxu0 0.0
    %1004 = vmatprep.subr.mxu0 0.0
    %1005 = vmatpush1.msra.mxu0 0.0
    %1006 = vmatprep.subr.mxu0 0.0
    %1007 = vmatpush1.msra.mxu0 0.0
    %1008 = vmatprep.subr.mxu0 0.0
    %1009 = vmatpush1.msra.mxu0 0.0
    %1010 = vmatprep.subr.mxu0 0.0
    %1011 = vmatpush1.msra.mxu0 0.0
    %1012 = vmatprep.subr.mxu0 0.0
    %1013 = vmatpush1.msra.mxu0 0.0
    %1014 = vmatprep.subr.mxu0 0.0
    %1015 = vmatpush1.msra.mxu0 0.0
    %1016 = vmatprep.subr.mxu0 0.0
    %1017 = vmatpush1.msra.mxu0 0.0
    %1018 = vmatprep.subr.mxu0 0.0
    %1019 = vmatpush1.msra.mxu0 0.0
    %1020 = vmatprep.subr.mxu0 0.0
    %1021 = vmatpush1.msra.mxu0 0.0
    %1022 = vmatprep.subr.mxu0 0.0
    %1023 = vmatpush1.msra.mxu0 0.0
    %1024 = vmatprep.subr.mxu0 0.0
    %1025 = vmatpush1.msra.mxu0 0.0
    %1026 = vmatprep.subr.mxu0 0.0
    %1027 = vmatpush1.msra.mxu0 0.0
    %1028 = vmatprep.subr.mxu0 0.0
    %1029 = vmatpush1.msra.mxu0 0.0
    %1030 = vmatprep.subr.mxu0 0.0
    %1031 = vmatpush1.msra.mxu0 0.0
    %1032 = vmatprep.subr.mxu0 0.0
    %1033 = vmatpush1.msra.mxu0 0.0
    %1034 = vmatprep.subr.mxu0 0.0
    %1035 = vmatpush1.msra.mxu0 0.0
    %1036 = vmatprep.subr.mxu0 0.0
    %1037 = vmatpush1.msra.mxu0 0.0
    %1038 = vmatprep.subr.mxu0 0.0
    %1039 = vmatpush1.msra.mxu0 0.0
    %1040 = vmatprep.subr.mxu0 0.0
    %1041 = vmatpush1.msra.mxu0 0.0
    %1042 = vmatprep.subr.mxu0 0.0
    %1043 = vmatpush1.msra.mxu0 0.0
    %1044 = vmatprep.subr.mxu0 0.0
    %1045 = vmatpush1.msra.mxu0 0.0
    %1046 = vmatprep.subr.mxu0 0.0
    %1047 = vmatpush1.msra.mxu0 0.0
    %1048 = vmatprep.subr.mxu0 0.0
    %1049 = vmatpush1.msra.mxu0 0.0
    %1050 = vmatprep.mubr.f32.mxu0 0.0
    %1051 = vmatmul.mubr.f32.gmra.mrb[0].mxu0 %v914
    %v1052 = vpop.f32.mrb[0].mxu0
    %v1053 = vadd.f32 0.0, %v1052
    %v1054 = vpop.f32.mrb[0].mxu0
    %1055 = vdwg.mxu0
    %v1056 = vmul.f32 %v983, %v251
    %v1057 = vmul.f32 %v1053, %v252
    %v1058 = vsub.f32 %v1056, %v1057
    %v1059 = vld [vmem:[%s17] sm:$0xff]
    %v1060 = vld [vmem:[%s17 + $0x8] sm:$0xff]
    %v1062 = vsel %vm810, %v1058, 0
    %1064 = vmatprep.subr.mxu0 0.0
    %1065 = vmatpush1.msra.mxu0 %v1059
    %1066 = vmatprep.subr.mxu0 0.0
    %1067 = vmatpush1.msra.mxu0 %v1060
    %1068 = vmatprep.subr.mxu0 0.0
    %1069 = vmatpush1.msra.mxu0 0.0
    %1070 = vmatprep.subr.mxu0 0.0
    %1071 = vmatpush1.msra.mxu0 0.0
    %1072 = vmatprep.subr.mxu0 0.0
    %1073 = vmatpush1.msra.mxu0 0.0
    %1074 = vmatprep.subr.mxu0 0.0
    %1075 = vmatpush1.msra.mxu0 0.0
    %1076 = vmatprep.subr.mxu0 0.0
    %1077 = vmatpush1.msra.mxu0 0.0
    %1078 = vmatprep.subr.mxu0 0.0
    %1079 = vmatpush1.msra.mxu0 0.0
    %1080 = vmatprep.subr.mxu0 0.0
    %1081 = vmatpush1.msra.mxu0 0.0
    %1082 = vmatprep.subr.mxu0 0.0
    %1083 = vmatpush1.msra.mxu0 0.0
    %1084 = vmatprep.subr.mxu0 0.0
    %1085 = vmatpush1.msra.mxu0 0.0
    %1086 = vmatprep.subr.mxu0 0.0
    %1087 = vmatpush1.msra.mxu0 0.0
    %1088 = vmatprep.subr.mxu0 0.0
    %1089 = vmatpush1.msra.mxu0 0.0
    %1090 = vmatprep.subr.mxu0 0.0
    %1091 = vmatpush1.msra.mxu0 0.0
    %1092 = vmatprep.subr.mxu0 0.0
    %1093 = vmatpush1.msra.mxu0 0.0
    %1094 = vmatprep.subr.mxu0 0.0
    %1095 = vmatpush1.msra.mxu0 0.0
    %1096 = vmatprep.subr.mxu0 0.0
    %1097 = vmatpush1.msra.mxu0 0.0
    %1098 = vmatprep.subr.mxu0 0.0
    %1099 = vmatpush1.msra.mxu0 0.0
    %1100 = vmatprep.subr.mxu0 0.0
    %1101 = vmatpush1.msra.mxu0 0.0
    %1102 = vmatprep.subr.mxu0 0.0
    %1103 = vmatpush1.msra.mxu0 0.0
    %1104 = vmatprep.subr.mxu0 0.0
    %1105 = vmatpush1.msra.mxu0 0.0
    %1106 = vmatprep.subr.mxu0 0.0
    %1107 = vmatpush1.msra.mxu0 0.0
    %1108 = vmatprep.subr.mxu0 0.0
    %1109 = vmatpush1.msra.mxu0 0.0
    %1110 = vmatprep.subr.mxu0 0.0
    %1111 = vmatpush1.msra.mxu0 0.0
    %1112 = vmatprep.subr.mxu0 0.0
    %1113 = vmatpush1.msra.mxu0 0.0
    %1114 = vmatprep.subr.mxu0 0.0
    %1115 = vmatpush1.msra.mxu0 0.0
    %1116 = vmatprep.subr.mxu0 0.0
    %1117 = vmatpush1.msra.mxu0 0.0
    %1118 = vmatprep.subr.mxu0 0.0
    %1119 = vmatpush1.msra.mxu0 0.0
    %1120 = vmatprep.subr.mxu0 0.0
    %1121 = vmatpush1.msra.mxu0 0.0
    %1122 = vmatprep.subr.mxu0 0.0
    %1123 = vmatpush1.msra.mxu0 0.0
    %1124 = vmatprep.subr.mxu0 0.0
    %1125 = vmatpush1.msra.mxu0 0.0
    %1126 = vmatprep.subr.mxu0 0.0
    %1127 = vmatpush1.msra.mxu0 0.0
    %1128 = vmatprep.mubr.f32.mxu0 0.0
    %1129 = vmatmul.mubr.f32.gmra.mrb[0].mxu0 %v1062
    %v1130 = vpop.f32.mrb[0].mxu0
    %v1131 = vadd.f32 0.0, %v1130
    %v1132 = vpop.f32.mrb[0].mxu0
    %1133 = vdwg.mxu0
    %v1135 = vlaneseq
    %v1136 = vshrl.u32 %v1135, 7
    %v1137 = vsub.s32 0, %v1136
    %v1138 = vrot.slane %v91, %v1137
    %v1140 = vadd.f32 %v1138, %v1131
    %v1141 = vadd.f32 %v161, %v1140
    %v1142 = vsel %vm162, %v1141, 0.0
    %1143 = vadd.xlane.f32.xlu0 %v1142
    %v1144 = vpop.xlane.xlu0 %1143
    %v1145 = vmul.f32 %v1144, %v166
    %v1146 = vsub.f32 %v1141, %v1145
    %v1147 = vmul.f32 %v1146, %v1146
    %v1148 = vsel %vm162, %v1147, 0.0
    %1149 = vadd.xlane.f32.xlu0 %v1148
    %v1150 = vpop.xlane.xlu0 %1149
    %v1151 = vmul.f32 %v1150, %v166
    %v1152 = vadd.f32 %v1151, 1e-05
    %v1153 = vrsqrt.pop %v1152
    %v1154 = vmul.f32 %v1146, %v1153
    %v1156 = vlaneseq
    %v1157 = vshrl.u32 %v1156, 7
    %v1158 = vsub.s32 0, %v1157
    %v1159 = vrot.slane %v92, %v1158
    %v1161 = vmul.f32 %v1154, %v1159
    %v1163 = vlaneseq
    %v1164 = vshrl.u32 %v1163, 7
    %v1165 = vsub.s32 0, %v1164
    %v1166 = vrot.slane %v93, %v1165
    %v1168 = vadd.f32 %v1161, %v1166
    %v1170 = vlaneseq
    %v1171 = vshrl.u32 %v1170, 7
    %v1172 = vsub.s32 0, %v1171
    %v1173 = vrot.slane %v110, %v1172
    %v1174 = vlaneseq
    %v1175 = vshrl.u32 %v1174, 7
    %v1176 = vsub.s32 1, %v1175
    %v1177 = vrot.slane %v110, %v1176
    %v1181 = vsel %vm162, %v1168, 0
    %1183 = vmatprep.subr.mxu0 %v95
    %1184 = vmatpush1.msra.mxu0 %v94
    %1185 = vmatprep.subr.mxu0 %v97
    %1186 = vmatpush1.msra.mxu0 %v96
    %1187 = vmatprep.subr.mxu0 %v99
    %1188 = vmatpush1.msra.mxu0 %v98
    %1189 = vmatprep.subr.mxu0 %v101
    %1190 = vmatpush1.msra.mxu0 %v100
    %1191 = vmatprep.subr.mxu0 %v103
    %1192 = vmatpush1.msra.mxu0 %v102
    %1193 = vmatprep.subr.mxu0 %v105
    %1194 = vmatpush1.msra.mxu0 %v104
    %1195 = vmatprep.subr.mxu0 %v107
    %1196 = vmatpush1.msra.mxu0 %v106
    %1197 = vmatprep.subr.mxu0 %v109
    %1198 = vmatpush1.msra.mxu0 %v108
    %1199 = vmatprep.subr.mxu0 0.0
    %1200 = vmatpush1.msra.mxu0 0.0
    %1201 = vmatprep.subr.mxu0 0.0
    %1202 = vmatpush1.msra.mxu0 0.0
    %1203 = vmatprep.subr.mxu0 0.0
    %1204 = vmatpush1.msra.mxu0 0.0
    %1205 = vmatprep.subr.mxu0 0.0
    %1206 = vmatpush1.msra.mxu0 0.0
    %1207 = vmatprep.subr.mxu0 0.0
    %1208 = vmatpush1.msra.mxu0 0.0
    %1209 = vmatprep.subr.mxu0 0.0
    %1210 = vmatpush1.msra.mxu0 0.0
    %1211 = vmatprep.subr.mxu0 0.0
    %1212 = vmatpush1.msra.mxu0 0.0
    %1213 = vmatprep.subr.mxu0 0.0
    %1214 = vmatpush1.msra.mxu0 0.0
    %1215 = vmatprep.subr.mxu0 0.0
    %1216 = vmatpush1.msra.mxu0 0.0
    %1217 = vmatprep.subr.mxu0 0.0
    %1218 = vmatpush1.msra.mxu0 0.0
    %1219 = vmatprep.subr.mxu0 0.0
    %1220 = vmatpush1.msra.mxu0 0.0
    %1221 = vmatprep.subr.mxu0 0.0
    %1222 = vmatpush1.msra.mxu0 0.0
    %1223 = vmatprep.subr.mxu0 0.0
    %1224 = vmatpush1.msra.mxu0 0.0
    %1225 = vmatprep.subr.mxu0 0.0
    %1226 = vmatpush1.msra.mxu0 0.0
    %1227 = vmatprep.subr.mxu0 0.0
    %1228 = vmatpush1.msra.mxu0 0.0
    %1229 = vmatprep.subr.mxu0 0.0
    %1230 = vmatpush1.msra.mxu0 0.0
    %1231 = vmatprep.subr.mxu0 0.0
    %1232 = vmatpush1.msra.mxu0 0.0
    %1233 = vmatprep.subr.mxu0 0.0
    %1234 = vmatpush1.msra.mxu0 0.0
    %1235 = vmatprep.subr.mxu0 0.0
    %1236 = vmatpush1.msra.mxu0 0.0
    %1237 = vmatprep.subr.mxu0 0.0
    %1238 = vmatpush1.msra.mxu0 0.0
    %1239 = vmatprep.subr.mxu0 0.0
    %1240 = vmatpush1.msra.mxu0 0.0
    %1241 = vmatprep.subr.mxu0 0.0
    %1242 = vmatpush1.msra.mxu0 0.0
    %1243 = vmatprep.subr.mxu0 0.0
    %1244 = vmatpush1.msra.mxu0 0.0
    %1245 = vmatprep.subr.mxu0 0.0
    %1246 = vmatpush1.msra.mxu0 0.0
    %1247 = vmatprep.mubr.f32.mxu0 0.0
    %1248 = vmatmul.mubr.f32.gmra.mrb[0].mxu0 %v1181
    %v1249 = vpop.f32.mrb[0].mxu0
    %v1250 = vadd.f32 %v1173, %v1249
    %v1251 = vpop.f32.mrb[0].mxu0
    %v1252 = vadd.f32 %v1177, %v1251
    %1253 = vdwg.mxu0
    %v1255 = vlaneseq
    %v1256 = vshrl.u32 %v1255, 7
    %v1257 = vsub.s32 0, %v1256
    %v1258 = vrot.slane %v127, %v1257
    %v1259 = vlaneseq
    %v1260 = vshrl.u32 %v1259, 7
    %v1261 = vsub.s32 1, %v1260
    %v1262 = vrot.slane %v127, %v1261
    %1265 = vmatprep.subr.mxu0 %v112
    %1266 = vmatpush1.msra.mxu0 %v111
    %1267 = vmatprep.subr.mxu0 %v114
    %1268 = vmatpush1.msra.mxu0 %v113
    %1269 = vmatprep.subr.mxu0 %v116
    %1270 = vmatpush1.msra.mxu0 %v115
    %1271 = vmatprep.subr.mxu0 %v118
    %1272 = vmatpush1.msra.mxu0 %v117
    %1273 = vmatprep.subr.mxu0 %v120
    %1274 = vmatpush1.msra.mxu0 %v119
    %1275 = vmatprep.subr.mxu0 %v122
    %1276 = vmatpush1.msra.mxu0 %v121
    %1277 = vmatprep.subr.mxu0 %v124
    %1278 = vmatpush1.msra.mxu0 %v123
    %1279 = vmatprep.subr.mxu0 %v126
    %1280 = vmatpush1.msra.mxu0 %v125
    %1281 = vmatprep.subr.mxu0 0.0
    %1282 = vmatpush1.msra.mxu0 0.0
    %1283 = vmatprep.subr.mxu0 0.0
    %1284 = vmatpush1.msra.mxu0 0.0
    %1285 = vmatprep.subr.mxu0 0.0
    %1286 = vmatpush1.msra.mxu0 0.0
    %1287 = vmatprep.subr.mxu0 0.0
    %1288 = vmatpush1.msra.mxu0 0.0
    %1289 = vmatprep.subr.mxu0 0.0
    %1290 = vmatpush1.msra.mxu0 0.0
    %1291 = vmatprep.subr.mxu0 0.0
    %1292 = vmatpush1.msra.mxu0 0.0
    %1293 = vmatprep.subr.mxu0 0.0
    %1294 = vmatpush1.msra.mxu0 0.0
    %1295 = vmatprep.subr.mxu0 0.0
    %1296 = vmatpush1.msra.mxu0 0.0
    %1297 = vmatprep.subr.mxu0 0.0
    %1298 = vmatpush1.msra.mxu0 0.0
    %1299 = vmatprep.subr.mxu0 0.0
    %1300 = vmatpush1.msra.mxu0 0.0
    %1301 = vmatprep.subr.mxu0 0.0
    %1302 = vmatpush1.msra.mxu0 0.0
    %1303 = vmatprep.subr.mxu0 0.0
    %1304 = vmatpush1.msra.mxu0 0.0
    %1305 = vmatprep.subr.mxu0 0.0
    %1306 = vmatpush1.msra.mxu0 0.0
    %1307 = vmatprep.subr.mxu0 0.0
    %1308 = vmatpush1.msra.mxu0 0.0
    %1309 = vmatprep.subr.mxu0 0.0
    %1310 = vmatpush1.msra.mxu0 0.0
    %1311 = vmatprep.subr.mxu0 0.0
    %1312 = vmatpush1.msra.mxu0 0.0
    %1313 = vmatprep.subr.mxu0 0.0
    %1314 = vmatpush1.msra.mxu0 0.0
    %1315 = vmatprep.subr.mxu0 0.0
    %1316 = vmatpush1.msra.mxu0 0.0
    %1317 = vmatprep.subr.mxu0 0.0
    %1318 = vmatpush1.msra.mxu0 0.0
    %1319 = vmatprep.subr.mxu0 0.0
    %1320 = vmatpush1.msra.mxu0 0.0
    %1321 = vmatprep.subr.mxu0 0.0
    %1322 = vmatpush1.msra.mxu0 0.0
    %1323 = vmatprep.subr.mxu0 0.0
    %1324 = vmatpush1.msra.mxu0 0.0
    %1325 = vmatprep.subr.mxu0 0.0
    %1326 = vmatpush1.msra.mxu0 0.0
    %1327 = vmatprep.subr.mxu0 0.0
    %1328 = vmatpush1.msra.mxu0 0.0
    %1329 = vmatprep.mubr.f32.mxu0 0.0
    %1330 = vmatmul.mubr.f32.gmra.mrb[0].mxu0 %v1181
    %v1331 = vpop.f32.mrb[0].mxu0
    %v1332 = vadd.f32 %v1258, %v1331
    %v1333 = vpop.f32.mrb[0].mxu0
    %v1334 = vadd.f32 %v1262, %v1333
    %1335 = vdwg.mxu0
    %v1336 = vmul.f32 %v1332, 0.5
    %v1337 = vmul.f32 %v1334, 0.5
    %v1338 = vmul.f32 %v1332, 0.70710677
    %v1339 = vmul.f32 %v1334, 0.70710677
    %v1340 = verf.f32.pop %v1338
    %v1341 = verf.f32.pop %v1339
    %v1342 = vadd.f32 %v1340, 1.0
    %v1343 = vadd.f32 %v1341, 1.0
    %v1344 = vmul.f32 %v1336, %v1342
    %v1345 = vmul.f32 %v1337, %v1343
    %v1346 = vmul.f32 %v1250, %v1344
    %v1347 = vmul.f32 %v1252, %v1345
    %v1349 = vlaneseq
    %v1350 = vshrl.u32 %v1349, 7
    %v1351 = vsub.s32 0, %v1350
    %v1352 = vrot.slane %v160, %v1351
    %1354 = vmatprep.subr.mxu0 0.0
    %1355 = vmatpush1.msra.mxu0 %v128
    %1356 = vmatprep.subr.mxu0 0.0
    %1357 = vmatpush1.msra.mxu0 %v129
    %1358 = vmatprep.subr.mxu0 0.0
    %1359 = vmatpush1.msra.mxu0 %v130
    %1360 = vmatprep.subr.mxu0 0.0
    %1361 = vmatpush1.msra.mxu0 %v131
    %1362 = vmatprep.subr.mxu0 0.0
    %1363 = vmatpush1.msra.mxu0 %v132
    %1364 = vmatprep.subr.mxu0 0.0
    %1365 = vmatpush1.msra.mxu0 %v133
    %1366 = vmatprep.subr.mxu0 0.0
    %1367 = vmatpush1.msra.mxu0 %v134
    %1368 = vmatprep.subr.mxu0 0.0
    %1369 = vmatpush1.msra.mxu0 %v135
    %1370 = vmatprep.subr.mxu0 0.0
    %1371 = vmatpush1.msra.mxu0 %v136
    %1372 = vmatprep.subr.mxu0 0.0
    %1373 = vmatpush1.msra.mxu0 %v137
    %1374 = vmatprep.subr.mxu0 0.0
    %1375 = vmatpush1.msra.mxu0 %v138
    %1376 = vmatprep.subr.mxu0 0.0
    %1377 = vmatpush1.msra.mxu0 %v139
    %1378 = vmatprep.subr.mxu0 0.0
    %1379 = vmatpush1.msra.mxu0 %v140
    %1380 = vmatprep.subr.mxu0 0.0
    %1381 = vmatpush1.msra.mxu0 %v141
    %1382 = vmatprep.subr.mxu0 0.0
    %1383 = vmatpush1.msra.mxu0 %v142
    %1384 = vmatprep.subr.mxu0 0.0
    %1385 = vmatpush1.msra.mxu0 %v143
    %1386 = vmatprep.subr.mxu0 0.0
    %1387 = vmatpush1.msra.mxu0 %v144
    %1388 = vmatprep.subr.mxu0 0.0
    %1389 = vmatpush1.msra.mxu0 %v145
    %1390 = vmatprep.subr.mxu0 0.0
    %1391 = vmatpush1.msra.mxu0 %v146
    %1392 = vmatprep.subr.mxu0 0.0
    %1393 = vmatpush1.msra.mxu0 %v147
    %1394 = vmatprep.subr.mxu0 0.0
    %1395 = vmatpush1.msra.mxu0 %v148
    %1396 = vmatprep.subr.mxu0 0.0
    %1397 = vmatpush1.msra.mxu0 %v149
    %1398 = vmatprep.subr.mxu0 0.0
    %1399 = vmatpush1.msra.mxu0 %v150
    %1400 = vmatprep.subr.mxu0 0.0
    %1401 = vmatpush1.msra.mxu0 %v151
    %1402 = vmatprep.subr.mxu0 0.0
    %1403 = vmatpush1.msra.mxu0 %v152
    %1404 = vmatprep.subr.mxu0 0.0
    %1405 = vmatpush1.msra.mxu0 %v153
    %1406 = vmatprep.subr.mxu0 0.0
    %1407 = vmatpush1.msra.mxu0 %v154
    %1408 = vmatprep.subr.mxu0 0.0
    %1409 = vmatpush1.msra.mxu0 %v155
    %1410 = vmatprep.subr.mxu0 0.0
    %1411 = vmatpush1.msra.mxu0 %v156
    %1412 = vmatprep.subr.mxu0 0.0
    %1413 = vmatpush1.msra.mxu0 %v157
    %1414 = vmatprep.subr.mxu0 0.0
    %1415 = vmatpush1.msra.mxu0 %v158
    %1416 = vmatprep.subr.mxu0 0.0
    %1417 = vmatpush1.msra.mxu0 %v159
    %1418 = vmatprep.mubr.f32.mxu0 %v1347
    %1419 = vmatmul.mubr.f32.gmra.mrb[0].mxu0 %v1346
    %v1420 = vpop.f32.mrb[0].mxu0
    %v1421 = vadd.f32 %v1352, %v1420
    %v1422 = vpop.f32.mrb[0].mxu0
    %1423 = vdwg.mxu0
    %v1424 = vadd.f32 %v1141, %v1421
    %1425 = vst.msk [vmem:[#allocation2] sm:$0xff] %vm162, %v1424
    %s1426 = scalar_lea.vmem %s0, 8
    %v1427 = vld [vmem:[%s1426] sm:$0xff]
    %v1428 = vsel %vm162, %v1427, 0.0
    %1429 = vadd.xlane.f32.xlu0 %v1428
    %v1430 = vpop.xlane.xlu0 %1429
    %v1431 = vmul.f32 %v1430, %v166
    %v1432 = vsub.f32 %v1427, %v1431
    %v1433 = vmul.f32 %v1432, %v1432
    %v1434 = vsel %vm162, %v1433, 0.0
    %1435 = vadd.xlane.f32.xlu0 %v1434
    %v1436 = vpop.xlane.xlu0 %1435
    %v1437 = vmul.f32 %v1436, %v166
    %v1438 = vadd.f32 %v1437, 1e-05
    %v1439 = vrsqrt.pop %v1438
    %v1440 = vmul.f32 %v1432, %v1439
    %v1441 = vmul.f32 %v1440, %v181
    %v1442 = vadd.f32 %v1441, %v188
    %s1443 = scalar_lea.vmem %s1, 24
    %v1444 = vld [vmem:[%s1443] sm:$0xff]
    %v1445 = vld [vmem:[%s1443 + $0x8] sm:$0xff]
    %v1446 = vld [vmem:[%s1443 + $0x10] sm:$0xff]
    %v1447 = vsel %vm162, %v1444, 0.0
    %1448 = vadd.xlane.f32.xlu0 %v1447
    %v1449 = vpop.xlane.xlu0 %1448
    %v1450 = vsel %vm162, %v1445, 0.0
    %1451 = vadd.xlane.f32.xlu0 %v1450
    %v1452 = vpop.xlane.xlu0 %1451
    %v1453 = vsel %vm162, %v1446, 0.0
    %1454 = vadd.xlane.f32.xlu0 %v1453
    %v1455 = vpop.xlane.xlu0 %1454
    %v1456 = vmul.f32 %v1449, %v166
    %v1457 = vmul.f32 %v1452, %v166
    %v1458 = vmul.f32 %v1455, %v166
    %v1459 = vsub.f32 %v1444, %v1456
    %v1460 = vsub.f32 %v1445, %v1457
    %v1461 = vsub.f32 %v1446, %v1458
    %v1462 = vmul.f32 %v1459, %v1459
    %v1463 = vmul.f32 %v1460, %v1460
    %v1464 = vmul.f32 %v1461, %v1461
    %v1465 = vsel %vm162, %v1462, 0.0
    %1466 = vadd.xlane.f32.xlu0 %v1465
    %v1467 = vpop.xlane.xlu0 %1466
    %v1468 = vsel %vm162, %v1463, 0.0
    %1469 = vadd.xlane.f32.xlu0 %v1468
    %v1470 = vpop.xlane.xlu0 %1469
    %v1471 = vsel %vm162, %v1464, 0.0
    %1472 = vadd.xlane.f32.xlu0 %v1471
    %v1473 = vpop.xlane.xlu0 %1472
    %v1474 = vmul.f32 %v1467, %v166
    %v1475 = vmul.f32 %v1470, %v166
    %v1476 = vmul.f32 %v1473, %v166
    %v1477 = vadd.f32 %v1474, 1e-05
    %v1478 = vadd.f32 %v1475, 1e-05
    %v1479 = vadd.f32 %v1476, 1e-05
    %v1480 = vrsqrt.pop %v1477
    %v1481 = vrsqrt.pop %v1478
    %v1482 = vrsqrt.pop %v1479
    %v1483 = vmul.f32 %v1459, %v1480
    %v1484 = vmul.f32 %v1460, %v1481
    %v1485 = vmul.f32 %v1461, %v1482
    %v1486 = vmul.f32 %v1483, %v237
    %v1487 = vmul.f32 %v1484, %v237
    %v1488 = vmul.f32 %v1485, %v237
    %v1489 = vadd.f32 %v1486, %v246
    %v1490 = vadd.f32 %v1487, %v246
    %v1491 = vadd.f32 %v1488, %v246
    %s1492 = scalar_lea.vmem %s2, 8
    %v1493 = vld [vmem:[%s1492] sm:$0xff]
    %s1494 = scalar_lea.vmem %s3, 8
    %v1495 = vld [vmem:[%s1494] sm:$0xff]
    %s1496 = scalar_lea.vmem %s4, 24
    %v1497 = vld [vmem:[%s1496] sm:$0xff]
    %v1498 = vld [vmem:[%s1496 + $0x8] sm:$0xff]
    %v1499 = vld [vmem:[%s1496 + $0x10] sm:$0xff]
    %s1500 = scalar_lea.vmem %s5, 24
    %v1501 = vld [vmem:[%s1500] sm:$0xff]
    %v1502 = vld [vmem:[%s1500 + $0x8] sm:$0xff]
    %v1503 = vld [vmem:[%s1500 + $0x10] sm:$0xff]
    %s1504 = scalar_lea.vmem %s6, 1
    %v1505 = vld [vmem:[%s1504] sm:$0x1]
    %v1506 = vld [vmem:[%s11] sm:$0xff]
    %v1507 = vld [vmem:[%s11 + $0x8] sm:$0xff]
    %v1508 = vld [vmem:[%s11 + $0x10] sm:$0xff]
    %v1509 = vld [vmem:[%s11 + $0x18] sm:$0xff]
    %v1510 = vld [vmem:[%s11 + $0x20] sm:$0xff]
    %v1511 = vld [vmem:[%s11 + $0x28] sm:$0xff]
    %v1512 = vld [vmem:[%s11 + $0x30] sm:$0xff]
    %v1513 = vld [vmem:[%s11 + $0x38] sm:$0xff]
    %v1515 = vsel %vm162, %v1442, 0
    %1517 = vmatprep.subr.mxu0 0.0
    %1518 = vmatpush1.msra.mxu0 %v1506
    %1519 = vmatprep.subr.mxu0 0.0
    %1520 = vmatpush1.msra.mxu0 %v1507
    %1521 = vmatprep.subr.mxu0 0.0
    %1522 = vmatpush1.msra.mxu0 %v1508
    %1523 = vmatprep.subr.mxu0 0.0
    %1524 = vmatpush1.msra.mxu0 %v1509
    %1525 = vmatprep.subr.mxu0 0.0
    %1526 = vmatpush1.msra.mxu0 %v1510
    %1527 = vmatprep.subr.mxu0 0.0
    %1528 = vmatpush1.msra.mxu0 %v1511
    %1529 = vmatprep.subr.mxu0 0.0
    %1530 = vmatpush1.msra.mxu0 %v1512
    %1531 = vmatprep.subr.mxu0 0.0
    %1532 = vmatpush1.msra.mxu0 %v1513
    %1533 = vmatprep.subr.mxu0 0.0
    %1534 = vmatpush1.msra.mxu0 0.0
    %1535 = vmatprep.subr.mxu0 0.0
    %1536 = vmatpush1.msra.mxu0 0.0
    %1537 = vmatprep.subr.mxu0 0.0
    %1538 = vmatpush1.msra.mxu0 0.0
    %1539 = vmatprep.subr.mxu0 0.0
    %1540 = vmatpush1.msra.mxu0 0.0
    %1541 = vmatprep.subr.mxu0 0.0
    %1542 = vmatpush1.msra.mxu0 0.0
    %1543 = vmatprep.subr.mxu0 0.0
    %1544 = vmatpush1.msra.mxu0 0.0
    %1545 = vmatprep.subr.mxu0 0.0
    %1546 = vmatpush1.msra.mxu0 0.0
    %1547 = vmatprep.subr.mxu0 0.0
    %1548 = vmatpush1.msra.mxu0 0.0
    %1549 = vmatprep.subr.mxu0 0.0
    %1550 = vmatpush1.msra.mxu0 0.0
    %1551 = vmatprep.subr.mxu0 0.0
    %1552 = vmatpush1.msra.mxu0 0.0
    %1553 = vmatprep.subr.mxu0 0.0
    %1554 = vmatpush1.msra.mxu0 0.0
    %1555 = vmatprep.subr.mxu0 0.0
    %1556 = vmatpush1.msra.mxu0 0.0
    %1557 = vmatprep.subr.mxu0 0.0
    %1558 = vmatpush1.msra.mxu0 0.0
    %1559 = vmatprep.subr.mxu0 0.0
    %1560 = vmatpush1.msra.mxu0 0.0
    %1561 = vmatprep.subr.mxu0 0.0
    %1562 = vmatpush1.msra.mxu0 0.0
    %1563 = vmatprep.subr.mxu0 0.0
    %1564 = vmatpush1.msra.mxu0 0.0
    %1565 = vmatprep.subr.mxu0 0.0
    %1566 = vmatpush1.msra.mxu0 0.0
    %1567 = vmatprep.subr.mxu0 0.0
    %1568 = vmatpush1.msra.mxu0 0.0
    %1569 = vmatprep.subr.mxu0 0.0
    %1570 = vmatpush1.msra.mxu0 0.0
    %1571 = vmatprep.subr.mxu0 0.0
    %1572 = vmatpush1.msra.mxu0 0.0
    %1573 = vmatprep.subr.mxu0 0.0
    %1574 = vmatpush1.msra.mxu0 0.0
    %1575 = vmatprep.subr.mxu0 0.0
    %1576 = vmatpush1.msra.mxu0 0.0
    %1577 = vmatprep.subr.mxu0 0.0
    %1578 = vmatpush1.msra.mxu0 0.0
    %1579 = vmatprep.subr.mxu0 0.0
    %1580 = vmatpush1.msra.mxu0 0.0
    %1581 = vmatprep.mubr.f32.mxu0 0.0
    %1582 = vmatmul.mubr.f32.gmra.mrb[0].mxu0 %v1515
    %v1583 = vpop.f32.mrb[0].mxu0
    %v1584 = vadd.f32 0.0, %v1583
    %v1585 = vpop.f32.mrb[0].mxu0
    %1586 = vdwg.mxu0
    %v1587 = vld [vmem:[%s12] sm:$0xff]
    %v1588 = vld [vmem:[%s12 + $0x8] sm:$0xff]
    %v1589 = vld [vmem:[%s12 + $0x10] sm:$0xff]
    %v1590 = vld [vmem:[%s12 + $0x18] sm:$0xff]
    %v1591 = vld [vmem:[%s12 + $0x20] sm:$0xff]
    %v1592 = vld [vmem:[%s12 + $0x28] sm:$0xff]
    %v1593 = vld [vmem:[%s12 + $0x30] sm:$0xff]
    %v1594 = vld [vmem:[%s12 + $0x38] sm:$0xff]
    %1595 = vmatprep.subr.mxu0 0.0
    %1596 = vmatpush1.msra.mxu0 %v1587
    %1597 = vmatprep.subr.mxu0 0.0
    %1598 = vmatpush1.msra.mxu0 %v1588
    %1599 = vmatprep.subr.mxu0 0.0
    %1600 = vmatpush1.msra.mxu0 %v1589
    %1601 = vmatprep.subr.mxu0 0.0
    %1602 = vmatpush1.msra.mxu0 %v1590
    %1603 = vmatprep.subr.mxu0 0.0
    %1604 = vmatpush1.msra.mxu0 %v1591
    %1605 = vmatprep.subr.mxu0 0.0
    %1606 = vmatpush1.msra.mxu0 %v1592
    %1607 = vmatprep.subr.mxu0 0.0
    %1608 = vmatpush1.msra.mxu0 %v1593
    %1609 = vmatprep.subr.mxu0 0.0
    %1610 = vmatpush1.msra.mxu0 %v1594
    %1611 = vmatprep.subr.mxu0 0.0
    %1612 = vmatpush1.msra.mxu0 0.0
    %1613 = vmatprep.subr.mxu0 0.0
    %1614 = vmatpush1.msra.mxu0 0.0
    %1615 = vmatprep.subr.mxu0 0.0
    %1616 = vmatpush1.msra.mxu0 0.0
    %1617 = vmatprep.subr.mxu0 0.0
    %1618 = vmatpush1.msra.mxu0 0.0
    %1619 = vmatprep.subr.mxu0 0.0
    %1620 = vmatpush1.msra.mxu0 0.0
    %1621 = vmatprep.subr.mxu0 0.0
    %1622 = vmatpush1.msra.mxu0 0.0
    %1623 = vmatprep.subr.mxu0 0.0
    %1624 = vmatpush1.msra.mxu0 0.0
    %1625 = vmatprep.subr.mxu0 0.0
    %1626 = vmatpush1.msra.mxu0 0.0
    %1627 = vmatprep.subr.mxu0 0.0
    %1628 = vmatpush1.msra.mxu0 0.0
    %1629 = vmatprep.subr.mxu0 0.0
    %1630 = vmatpush1.msra.mxu0 0.0
    %1631 = vmatprep.subr.mxu0 0.0
    %1632 = vmatpush1.msra.mxu0 0.0
    %1633 = vmatprep.subr.mxu0 0.0
    %1634 = vmatpush1.msra.mxu0 0.0
    %1635 = vmatprep.subr.mxu0 0.0
    %1636 = vmatpush1.msra.mxu0 0.0
    %1637 = vmatprep.subr.mxu0 0.0
    %1638 = vmatpush1.msra.mxu0 0.0
    %1639 = vmatprep.subr.mxu0 0.0
    %1640 = vmatpush1.msra.mxu0 0.0
    %1641 = vmatprep.subr.mxu0 0.0
    %1642 = vmatpush1.msra.mxu0 0.0
    %1643 = vmatprep.subr.mxu0 0.0
    %1644 = vmatpush1.msra.mxu0 0.0
    %1645 = vmatprep.subr.mxu0 0.0
    %1646 = vmatpush1.msra.mxu0 0.0
    %1647 = vmatprep.subr.mxu0 0.0
    %1648 = vmatpush1.msra.mxu0 0.0
    %1649 = vmatprep.subr.mxu0 0.0
    %1650 = vmatpush1.msra.mxu0 0.0
    %1651 = vmatprep.subr.mxu0 0.0
    %1652 = vmatpush1.msra.mxu0 0.0
    %1653 = vmatprep.subr.mxu0 0.0
    %1654 = vmatpush1.msra.mxu0 0.0
    %1655 = vmatprep.subr.mxu0 0.0
    %1656 = vmatpush1.msra.mxu0 0.0
    %1657 = vmatprep.subr.mxu0 0.0
    %1658 = vmatpush1.msra.mxu0 0.0
    %1659 = vmatprep.mubr.f32.mxu0 0.0
    %1660 = vmatmul.mubr.f32.gmra.mrb[0].mxu0 %v1515
    %v1661 = vpop.f32.mrb[0].mxu0
    %v1662 = vadd.f32 0.0, %v1661
    %v1663 = vpop.f32.mrb[0].mxu0
    %1664 = vdwg.mxu0
    %v1665 = vld [vmem:[%s13] sm:$0xff]
    %v1666 = vld [vmem:[%s13 + $0x8] sm:$0xff]
    %v1667 = vld [vmem:[%s13 + $0x10] sm:$0xff]
    %v1668 = vld [vmem:[%s13 + $0x18] sm:$0xff]
    %v1669 = vld [vmem:[%s13 + $0x20] sm:$0xff]
    %v1670 = vld [vmem:[%s13 + $0x28] sm:$0xff]
    %v1671 = vld [vmem:[%s13 + $0x30] sm:$0xff]
    %v1672 = vld [vmem:[%s13 + $0x38] sm:$0xff]
    %v1674 = vsel %vm162, %v1489, 0
    %v1677 = vsel %vm162, %v1490, 0
    %v1680 = vsel %vm162, %v1491, 0
    %1682 = vmatprep.subr.mxu0 0.0
    %1683 = vmatpush1.msra.mxu0 %v1665
    %1684 = vmatprep.subr.mxu0 0.0
    %1685 = vmatpush1.msra.mxu0 %v1666
    %1686 = vmatprep.subr.mxu0 0.0
    %1687 = vmatpush1.msra.mxu0 %v1667
    %1688 = vmatprep.subr.mxu0 0.0
    %1689 = vmatpush1.msra.mxu0 %v1668
    %1690 = vmatprep.subr.mxu0 0.0
    %1691 = vmatpush1.msra.mxu0 %v1669
    %1692 = vmatprep.subr.mxu0 0.0
    %1693 = vmatpush1.msra.mxu0 %v1670
    %1694 = vmatprep.subr.mxu0 0.0
    %1695 = vmatpush1.msra.mxu0 %v1671
    %1696 = vmatprep.subr.mxu0 0.0
    %1697 = vmatpush1.msra.mxu0 %v1672
    %1698 = vmatprep.subr.mxu0 0.0
    %1699 = vmatpush1.msra.mxu0 0.0
    %1700 = vmatprep.subr.mxu0 0.0
    %1701 = vmatpush1.msra.mxu0 0.0
    %1702 = vmatprep.subr.mxu0 0.0
    %1703 = vmatpush1.msra.mxu0 0.0
    %1704 = vmatprep.subr.mxu0 0.0
    %1705 = vmatpush1.msra.mxu0 0.0
    %1706 = vmatprep.subr.mxu0 0.0
    %1707 = vmatpush1.msra.mxu0 0.0
    %1708 = vmatprep.subr.mxu0 0.0
    %1709 = vmatpush1.msra.mxu0 0.0
    %1710 = vmatprep.subr.mxu0 0.0
    %1711 = vmatpush1.msra.mxu0 0.0
    %1712 = vmatprep.subr.mxu0 0.0
    %1713 = vmatpush1.msra.mxu0 0.0
    %1714 = vmatprep.subr.mxu0 0.0
    %1715 = vmatpush1.msra.mxu0 0.0
    %1716 = vmatprep.subr.mxu0 0.0
    %1717 = vmatpush1.msra.mxu0 0.0
    %1718 = vmatprep.subr.mxu0 0.0
    %1719 = vmatpush1.msra.mxu0 0.0
    %1720 = vmatprep.subr.mxu0 0.0
    %1721 = vmatpush1.msra.mxu0 0.0
    %1722 = vmatprep.subr.mxu0 0.0
    %1723 = vmatpush1.msra.mxu0 0.0
    %1724 = vmatprep.subr.mxu0 0.0
    %1725 = vmatpush1.msra.mxu0 0.0
    %1726 = vmatprep.subr.mxu0 0.0
    %1727 = vmatpush1.msra.mxu0 0.0
    %1728 = vmatprep.subr.mxu0 0.0
    %1729 = vmatpush1.msra.mxu0 0.0
    %1730 = vmatprep.subr.mxu0 0.0
    %1731 = vmatpush1.msra.mxu0 0.0
    %1732 = vmatprep.subr.mxu0 0.0
    %1733 = vmatpush1.msra.mxu0 0.0
    %1734 = vmatprep.subr.mxu0 0.0
    %1735 = vmatpush1.msra.mxu0 0.0
    %1736 = vmatprep.subr.mxu0 0.0
    %1737 = vmatpush1.msra.mxu0 0.0
    %1738 = vmatprep.subr.mxu0 0.0
    %1739 = vmatpush1.msra.mxu0 0.0
    %1740 = vmatprep.subr.mxu0 0.0
    %1741 = vmatpush1.msra.mxu0 0.0
    %1742 = vmatprep.subr.mxu0 0.0
    %1743 = vmatpush1.msra.mxu0 0.0
    %1744 = vmatprep.subr.mxu0 0.0
    %1745 = vmatpush1.msra.mxu0 0.0
    %1746 = vmatprep.mubr.f32.mxu0 0.0
    %1747 = vmatmul.mubr.f32.gmra.mrb[0].mxu0 %v1674
    %v1748 = vpop.f32.mrb[0].mxu0
    %v1749 = vadd.f32 0.0, %v1748
    %v1750 = vpop.f32.mrb[0].mxu0
    %1751 = vmatprep.mubr.f32.mxu0 0.0
    %1752 = vmatmul.mubr.f32.gmra.mrb[0].mxu0 %v1677
    %v1753 = vpop.f32.mrb[0].mxu0
    %v1754 = vadd.f32 0.0, %v1753
    %v1755 = vpop.f32.mrb[0].mxu0
    %1756 = vmatprep.mubr.f32.mxu0 0.0
    %1757 = vmatmul.mubr.f32.gmra.mrb[0].mxu0 %v1680
    %v1758 = vpop.f32.mrb[0].mxu0
    %v1759 = vadd.f32 0.0, %v1758
    %v1760 = vpop.f32.mrb[0].mxu0
    %1761 = vdwg.mxu0
    %v1762 = vld [vmem:[%s14] sm:$0xff]
    %v1763 = vld [vmem:[%s14 + $0x8] sm:$0xff]
    %v1764 = vld [vmem:[%s14 + $0x10] sm:$0xff]
    %v1765 = vld [vmem:[%s14 + $0x18] sm:$0xff]
    %v1766 = vld [vmem:[%s14 + $0x20] sm:$0xff]
    %v1767 = vld [vmem:[%s14 + $0x28] sm:$0xff]
    %v1768 = vld [vmem:[%s14 + $0x30] sm:$0xff]
    %v1769 = vld [vmem:[%s14 + $0x38] sm:$0xff]
    %1770 = vmatprep.subr.mxu0 0.0
    %1771 = vmatpush1.msra.mxu0 %v1762
    %1772 = vmatprep.subr.mxu0 0.0
    %1773 = vmatpush1.msra.mxu0 %v1763
    %1774 = vmatprep.subr.mxu0 0.0
    %1775 = vmatpush1.msra.mxu0 %v1764
    %1776 = vmatprep.subr.mxu0 0.0
    %1777 = vmatpush1.msra.mxu0 %v1765
    %1778 = vmatprep.subr.mxu0 0.0
    %1779 = vmatpush1.msra.mxu0 %v1766
    %1780 = vmatprep.subr.mxu0 0.0
    %1781 = vmatpush1.msra.mxu0 %v1767
    %1782 = vmatprep.subr.mxu0 0.0
    %1783 = vmatpush1.msra.mxu0 %v1768
    %1784 = vmatprep.subr.mxu0 0.0
    %1785 = vmatpush1.msra.mxu0 %v1769
    %1786 = vmatprep.subr.mxu0 0.0
    %1787 = vmatpush1.msra.mxu0 0.0
    %1788 = vmatprep.subr.mxu0 0.0
    %1789 = vmatpush1.msra.mxu0 0.0
    %1790 = vmatprep.subr.mxu0 0.0
    %1791 = vmatpush1.msra.mxu0 0.0
    %1792 = vmatprep.subr.mxu0 0.0
    %1793 = vmatpush1.msra.mxu0 0.0
    %1794 = vmatprep.subr.mxu0 0.0
    %1795 = vmatpush1.msra.mxu0 0.0
    %1796 = vmatprep.subr.mxu0 0.0
    %1797 = vmatpush1.msra.mxu0 0.0
    %1798 = vmatprep.subr.mxu0 0.0
    %1799 = vmatpush1.msra.mxu0 0.0
    %1800 = vmatprep.subr.mxu0 0.0
    %1801 = vmatpush1.msra.mxu0 0.0
    %1802 = vmatprep.subr.mxu0 0.0
    %1803 = vmatpush1.msra.mxu0 0.0
    %1804 = vmatprep.subr.mxu0 0.0
    %1805 = vmatpush1.msra.mxu0 0.0
    %1806 = vmatprep.subr.mxu0 0.0
    %1807 = vmatpush1.msra.mxu0 0.0
    %1808 = vmatprep.subr.mxu0 0.0
    %1809 = vmatpush1.msra.mxu0 0.0
    %1810 = vmatprep.subr.mxu0 0.0
    %1811 = vmatpush1.msra.mxu0 0.0
    %1812 = vmatprep.subr.mxu0 0.0
    %1813 = vmatpush1.msra.mxu0 0.0
    %1814 = vmatprep.subr.mxu0 0.0
    %1815 = vmatpush1.msra.mxu0 0.0
    %1816 = vmatprep.subr.mxu0 0.0
    %1817 = vmatpush1.msra.mxu0 0.0
    %1818 = vmatprep.subr.mxu0 0.0
    %1819 = vmatpush1.msra.mxu0 0.0
    %1820 = vmatprep.subr.mxu0 0.0
    %1821 = vmatpush1.msra.mxu0 0.0
    %1822 = vmatprep.subr.mxu0 0.0
    %1823 = vmatpush1.msra.mxu0 0.0
    %1824 = vmatprep.subr.mxu0 0.0
    %1825 = vmatpush1.msra.mxu0 0.0
    %1826 = vmatprep.subr.mxu0 0.0
    %1827 = vmatpush1.msra.mxu0 0.0
    %1828 = vmatprep.subr.mxu0 0.0
    %1829 = vmatpush1.msra.mxu0 0.0
    %1830 = vmatprep.subr.mxu0 0.0
    %1831 = vmatpush1.msra.mxu0 0.0
    %1832 = vmatprep.subr.mxu0 0.0
    %1833 = vmatpush1.msra.mxu0 0.0
    %1834 = vmatprep.mubr.f32.mxu0 0.0
    %1835 = vmatmul.mubr.f32.gmra.mrb[0].mxu0 %v1674
    %v1836 = vpop.f32.mrb[0].mxu0
    %v1837 = vadd.f32 0.0, %v1836
    %v1838 = vpop.f32.mrb[0].mxu0
    %1839 = vmatprep.mubr.f32.mxu0 0.0
    %1840 = vmatmul.mubr.f32.gmra.mrb[0].mxu0 %v1677
    %v1841 = vpop.f32.mrb[0].mxu0
    %v1842 = vadd.f32 0.0, %v1841
    %v1843 = vpop.f32.mrb[0].mxu0
    %1844 = vmatprep.mubr.f32.mxu0 0.0
    %1845 = vmatmul.mubr.f32.gmra.mrb[0].mxu0 %v1680
    %v1846 = vpop.f32.mrb[0].mxu0
    %v1847 = vadd.f32 0.0, %v1846
    %v1848 = vpop.f32.mrb[0].mxu0
    %1849 = vdwg.mxu0
    %v1850 = vld [vmem:[%s15] sm:$0xff]
    %v1851 = vld [vmem:[%s15 + $0x8] sm:$0xff]
    %v1852 = vld [vmem:[%s15 + $0x10] sm:$0xff]
    %v1853 = vld [vmem:[%s15 + $0x18] sm:$0xff]
    %v1854 = vld [vmem:[%s15 + $0x20] sm:$0xff]
    %v1855 = vld [vmem:[%s15 + $0x28] sm:$0xff]
    %v1856 = vld [vmem:[%s15 + $0x30] sm:$0xff]
    %v1857 = vld [vmem:[%s15 + $0x38] sm:$0xff]
    %1858 = vmatprep.subr.mxu0 0.0
    %1859 = vmatpush1.msra.mxu0 %v1850
    %1860 = vmatprep.subr.mxu0 0.0
    %1861 = vmatpush1.msra.mxu0 %v1851
    %1862 = vmatprep.subr.mxu0 0.0
    %1863 = vmatpush1.msra.mxu0 %v1852
    %1864 = vmatprep.subr.mxu0 0.0
    %1865 = vmatpush1.msra.mxu0 %v1853
    %1866 = vmatprep.subr.mxu0 0.0
    %1867 = vmatpush1.msra.mxu0 %v1854
    %1868 = vmatprep.subr.mxu0 0.0
    %1869 = vmatpush1.msra.mxu0 %v1855
    %1870 = vmatprep.subr.mxu0 0.0
    %1871 = vmatpush1.msra.mxu0 %v1856
    %1872 = vmatprep.subr.mxu0 0.0
    %1873 = vmatpush1.msra.mxu0 %v1857
    %1874 = vmatprep.subr.mxu0 0.0
    %1875 = vmatpush1.msra.mxu0 0.0
    %1876 = vmatprep.subr.mxu0 0.0
    %1877 = vmatpush1.msra.mxu0 0.0
    %1878 = vmatprep.subr.mxu0 0.0
    %1879 = vmatpush1.msra.mxu0 0.0
    %1880 = vmatprep.subr.mxu0 0.0
    %1881 = vmatpush1.msra.mxu0 0.0
    %1882 = vmatprep.subr.mxu0 0.0
    %1883 = vmatpush1.msra.mxu0 0.0
    %1884 = vmatprep.subr.mxu0 0.0
    %1885 = vmatpush1.msra.mxu0 0.0
    %1886 = vmatprep.subr.mxu0 0.0
    %1887 = vmatpush1.msra.mxu0 0.0
    %1888 = vmatprep.subr.mxu0 0.0
    %1889 = vmatpush1.msra.mxu0 0.0
    %1890 = vmatprep.subr.mxu0 0.0
    %1891 = vmatpush1.msra.mxu0 0.0
    %1892 = vmatprep.subr.mxu0 0.0
    %1893 = vmatpush1.msra.mxu0 0.0
    %1894 = vmatprep.subr.mxu0 0.0
    %1895 = vmatpush1.msra.mxu0 0.0
    %1896 = vmatprep.subr.mxu0 0.0
    %1897 = vmatpush1.msra.mxu0 0.0
    %1898 = vmatprep.subr.mxu0 0.0
    %1899 = vmatpush1.msra.mxu0 0.0
    %1900 = vmatprep.subr.mxu0 0.0
    %1901 = vmatpush1.msra.mxu0 0.0
    %1902 = vmatprep.subr.mxu0 0.0
    %1903 = vmatpush1.msra.mxu0 0.0
    %1904 = vmatprep.subr.mxu0 0.0
    %1905 = vmatpush1.msra.mxu0 0.0
    %1906 = vmatprep.subr.mxu0 0.0
    %1907 = vmatpush1.msra.mxu0 0.0
    %1908 = vmatprep.subr.mxu0 0.0
    %1909 = vmatpush1.msra.mxu0 0.0
    %1910 = vmatprep.subr.mxu0 0.0
    %1911 = vmatpush1.msra.mxu0 0.0
    %1912 = vmatprep.subr.mxu0 0.0
    %1913 = vmatpush1.msra.mxu0 0.0
    %1914 = vmatprep.subr.mxu0 0.0
    %1915 = vmatpush1.msra.mxu0 0.0
    %1916 = vmatprep.subr.mxu0 0.0
    %1917 = vmatpush1.msra.mxu0 0.0
    %1918 = vmatprep.subr.mxu0 0.0
    %1919 = vmatpush1.msra.mxu0 0.0
    %1920 = vmatprep.subr.mxu0 0.0
    %1921 = vmatpush1.msra.mxu0 0.0
    %1922 = vmatprep.mubr.f32.mxu0 0.0
    %1923 = vmatmul.mubr.f32.gmra.mrb[0].mxu0 %v1674
    %v1924 = vpop.f32.mrb[0].mxu0
    %v1925 = vadd.f32 0.0, %v1924
    %v1926 = vpop.f32.mrb[0].mxu0
    %1927 = vmatprep.mubr.f32.mxu0 0.0
    %1928 = vmatmul.mubr.f32.gmra.mrb[0].mxu0 %v1677
    %v1929 = vpop.f32.mrb[0].mxu0
    %v1930 = vadd.f32 0.0, %v1929
    %v1931 = vpop.f32.mrb[0].mxu0
    %1932 = vmatprep.mubr.f32.mxu0 0.0
    %1933 = vmatmul.mubr.f32.gmra.mrb[0].mxu0 %v1680
    %v1934 = vpop.f32.mrb[0].mxu0
    %v1935 = vadd.f32 0.0, %v1934
    %v1936 = vpop.f32.mrb[0].mxu0
    %1937 = vdwg.mxu0
    %v1938 = vmul.f32 %v1584, %v1493
    %v1939 = vmul.f32 %v1662, %v1495
    %v1940 = vadd.f32 %v1938, %v1939
    %v1941 = vmul.f32 %v1749, %v1497
    %v1942 = vmul.f32 %v1754, %v1498
    %v1943 = vmul.f32 %v1759, %v1499
    %v1944 = vmul.f32 %v1837, %v1501
    %v1945 = vmul.f32 %v1842, %v1502
    %v1946 = vmul.f32 %v1847, %v1503
    %v1947 = vadd.f32 %v1941, %v1944
    %v1948 = vadd.f32 %v1942, %v1945
    %v1949 = vadd.f32 %v1943, %v1946
    %v1950 = vld [vmem:[%s16] sm:$0xff]
    %v1951 = vld [vmem:[%s16 + $0x8] sm:$0xff]
    %v1952 = vld [vmem:[%s16 + $0x10] sm:$0xff]
    %v1953 = vld [vmem:[%s16 + $0x18] sm:$0xff]
    %v1954 = vld [vmem:[%s16 + $0x20] sm:$0xff]
    %v1955 = vld [vmem:[%s16 + $0x28] sm:$0xff]
    %v1956 = vld [vmem:[%s16 + $0x30] sm:$0xff]
    %v1957 = vld [vmem:[%s16 + $0x38] sm:$0xff]
    %1958 = vmatprep.subr.mxu0 0.0
    %1959 = vmatpush1.msra.mxu0 %v1950
    %1960 = vmatprep.subr.mxu0 0.0
    %1961 = vmatpush1.msra.mxu0 %v1951
    %1962 = vmatprep.subr.mxu0 0.0
    %1963 = vmatpush1.msra.mxu0 %v1952
    %1964 = vmatprep.subr.mxu0 0.0
    %1965 = vmatpush1.msra.mxu0 %v1953
    %1966 = vmatprep.subr.mxu0 0.0
    %1967 = vmatpush1.msra.mxu0 %v1954
    %1968 = vmatprep.subr.mxu0 0.0
    %1969 = vmatpush1.msra.mxu0 %v1955
    %1970 = vmatprep.subr.mxu0 0.0
    %1971 = vmatpush1.msra.mxu0 %v1956
    %1972 = vmatprep.subr.mxu0 0.0
    %1973 = vmatpush1.msra.mxu0 %v1957
    %1974 = vmatprep.subr.mxu0 0.0
    %1975 = vmatpush1.msra.mxu0 0.0
    %1976 = vmatprep.subr.mxu0 0.0
    %1977 = vmatpush1.msra.mxu0 0.0
    %1978 = vmatprep.subr.mxu0 0.0
    %1979 = vmatpush1.msra.mxu0 0.0
    %1980 = vmatprep.subr.mxu0 0.0
    %1981 = vmatpush1.msra.mxu0 0.0
    %1982 = vmatprep.subr.mxu0 0.0
    %1983 = vmatpush1.msra.mxu0 0.0
    %1984 = vmatprep.subr.mxu0 0.0
    %1985 = vmatpush1.msra.mxu0 0.0
    %1986 = vmatprep.subr.mxu0 0.0
    %1987 = vmatpush1.msra.mxu0 0.0
    %1988 = vmatprep.subr.mxu0 0.0
    %1989 = vmatpush1.msra.mxu0 0.0
    %1990 = vmatprep.subr.mxu0 0.0
    %1991 = vmatpush1.msra.mxu0 0.0
    %1992 = vmatprep.subr.mxu0 0.0
    %1993 = vmatpush1.msra.mxu0 0.0
    %1994 = vmatprep.subr.mxu0 0.0
    %1995 = vmatpush1.msra.mxu0 0.0
    %1996 = vmatprep.subr.mxu0 0.0
    %1997 = vmatpush1.msra.mxu0 0.0
    %1998 = vmatprep.subr.mxu0 0.0
    %1999 = vmatpush1.msra.mxu0 0.0
    %2000 = vmatprep.subr.mxu0 0.0
    %2001 = vmatpush1.msra.mxu0 0.0
    %2002 = vmatprep.subr.mxu0 0.0
    %2003 = vmatpush1.msra.mxu0 0.0
    %2004 = vmatprep.subr.mxu0 0.0
    %2005 = vmatpush1.msra.mxu0 0.0
    %2006 = vmatprep.subr.mxu0 0.0
    %2007 = vmatpush1.msra.mxu0 0.0
    %2008 = vmatprep.subr.mxu0 0.0
    %2009 = vmatpush1.msra.mxu0 0.0
    %2010 = vmatprep.subr.mxu0 0.0
    %2011 = vmatpush1.msra.mxu0 0.0
    %2012 = vmatprep.subr.mxu0 0.0
    %2013 = vmatpush1.msra.mxu0 0.0
    %2014 = vmatprep.subr.mxu0 0.0
    %2015 = vmatpush1.msra.mxu0 0.0
    %2016 = vmatprep.subr.mxu0 0.0
    %2017 = vmatpush1.msra.mxu0 0.0
    %2018 = vmatprep.subr.mxu0 0.0
    %2019 = vmatpush1.msra.mxu0 0.0
    %2020 = vmatprep.subr.mxu0 0.0
    %2021 = vmatpush1.msra.mxu0 0.0
    %2022 = vmatprep.mubr.f32.mxu0 0.0
    %2023 = vmatmul.mubr.f32.gmra.mrb[0].mxu0 %v1674
    %v2024 = vpop.f32.mrb[0].mxu0
    %v2025 = vadd.f32 0.0, %v2024
    %v2026 = vpop.f32.mrb[0].mxu0
    %2027 = vmatprep.mubr.f32.mxu0 0.0
    %2028 = vmatmul.mubr.f32.gmra.mrb[0].mxu0 %v1677
    %v2029 = vpop.f32.mrb[0].mxu0
    %v2030 = vadd.f32 0.0, %v2029
    %v2031 = vpop.f32.mrb[0].mxu0
    %2032 = vmatprep.mubr.f32.mxu0 0.0
    %2033 = vmatmul.mubr.f32.gmra.mrb[0].mxu0 %v1680
    %v2034 = vpop.f32.mrb[0].mxu0
    %v2035 = vadd.f32 0.0, %v2034
    %v2036 = vpop.f32.mrb[0].mxu0
    %2037 = vdwg.mxu0
    %v2038 = vmul.f32 %v1925, %v1497
    %v2039 = vmul.f32 %v1930, %v1498
    %v2040 = vmul.f32 %v1935, %v1499
    %v2041 = vmul.f32 %v2025, %v1501
    %v2042 = vmul.f32 %v2030, %v1502
    %v2043 = vmul.f32 %v2035, %v1503
    %v2044 = vadd.f32 %v2038, %v2041
    %v2045 = vadd.f32 %v2039, %v2042
    %v2046 = vadd.f32 %v2040, %v2043
    %v2047 = vmul.f32 %v2025, %v1497
    %v2048 = vmul.f32 %v2030, %v1498
    %v2049 = vmul.f32 %v2035, %v1499
    %v2050 = vmul.f32 %v1925, %v1501
    %v2051 = vmul.f32 %v1930, %v1502
    %v2052 = vmul.f32 %v1935, %v1503
    %v2053 = vsub.f32 %v2047, %v2050
    %v2054 = vsub.f32 %v2048, %v2051
    %v2055 = vsub.f32 %v2049, %v2052
    %v2057 = vsel %vm810, %v1940, 0
    %v2060 = vsel %vm810, %v1947, 0
    %v2063 = vsel %vm810, %v1948, 0
    %v2066 = vsel %vm810, %v1949, 0
    %2068 = vmatprep.subr.mxu0 0.0
    %2069 = vmatpush1.xpose.msra.mxu0 %v2060
    %2070 = vmatprep.subr.mxu0 0.0
    %2071 = vmatpush1.xpose.msra.mxu0 %v2063
    %2072 = vmatprep.subr.mxu0 0.0
    %2073 = vmatpush1.xpose.msra.mxu0 %v2066
    %2074 = vmatprep.subr.mxu0 0.0
    %2075 = vmatpush1.xpose.msra.mxu0 0.0
    %2076 = vmatprep.subr.mxu0 0.0
    %2077 = vmatpush1.xpose.msra.mxu0 0.0
    %2078 = vmatprep.subr.mxu0 0.0
    %2079 = vmatpush1.xpose.msra.mxu0 0.0
    %2080 = vmatprep.subr.mxu0 0.0
    %2081 = vmatpush1.xpose.msra.mxu0 0.0
    %2082 = vmatprep.subr.mxu0 0.0
    %2083 = vmatpush1.xpose.msra.mxu0 0.0
    %2084 = vmatprep.subr.mxu0 0.0
    %2085 = vmatpush1.xpose.msra.mxu0 0.0
    %2086 = vmatprep.subr.mxu0 0.0
    %2087 = vmatpush1.xpose.msra.mxu0 0.0
    %2088 = vmatprep.subr.mxu0 0.0
    %2089 = vmatpush1.xpose.msra.mxu0 0.0
    %2090 = vmatprep.subr.mxu0 0.0
    %2091 = vmatpush1.xpose.msra.mxu0 0.0
    %2092 = vmatprep.subr.mxu0 0.0
    %2093 = vmatpush1.xpose.msra.mxu0 0.0
    %2094 = vmatprep.subr.mxu0 0.0
    %2095 = vmatpush1.xpose.msra.mxu0 0.0
    %2096 = vmatprep.subr.mxu0 0.0
    %2097 = vmatpush1.xpose.msra.mxu0 0.0
    %2098 = vmatprep.subr.mxu0 0.0
    %2099 = vmatpush1.xpose.msra.mxu0 0.0
    %2100 = vmatprep.subr.mxu0 0.0
    %2101 = vmatpush1.xpose.msra.mxu0 0.0
    %2102 = vmatprep.subr.mxu0 0.0
    %2103 = vmatpush1.xpose.msra.mxu0 0.0
    %2104 = vmatprep.subr.mxu0 0.0
    %2105 = vmatpush1.xpose.msra.mxu0 0.0
    %2106 = vmatprep.subr.mxu0 0.0
    %2107 = vmatpush1.xpose.msra.mxu0 0.0
    %2108 = vmatprep.subr.mxu0 0.0
    %2109 = vmatpush1.xpose.msra.mxu0 0.0
    %2110 = vmatprep.subr.mxu0 0.0
    %2111 = vmatpush1.xpose.msra.mxu0 0.0
    %2112 = vmatprep.subr.mxu0 0.0
    %2113 = vmatpush1.xpose.msra.mxu0 0.0
    %2114 = vmatprep.subr.mxu0 0.0
    %2115 = vmatpush1.xpose.msra.mxu0 0.0
    %2116 = vmatprep.subr.mxu0 0.0
    %2117 = vmatpush1.xpose.msra.mxu0 0.0
    %2118 = vmatprep.subr.mxu0 0.0
    %2119 = vmatpush1.xpose.msra.mxu0 0.0
    %2120 = vmatprep.subr.mxu0 0.0
    %2121 = vmatpush1.xpose.msra.mxu0 0.0
    %2122 = vmatprep.subr.mxu0 0.0
    %2123 = vmatpush1.xpose.msra.mxu0 0.0
    %2124 = vmatprep.subr.mxu0 0.0
    %2125 = vmatpush1.xpose.msra.mxu0 0.0
    %2126 = vmatprep.subr.mxu0 0.0
    %2127 = vmatpush1.xpose.msra.mxu0 0.0
    %2128 = vmatprep.subr.mxu0 0.0
    %2129 = vmatpush1.xpose.msra.mxu0 0.0
    %2130 = vmatprep.subr.mxu0 0.0
    %2131 = vmatpush1.xpose.msra.mxu0 0.0
    %2132 = vmatprep.mubr.f32.mxu0 0.0
    %2133 = vmatmul.mubr.f32.gmra.mrb[0].mxu0 %v2057
    %v2134 = vpop.f32.mrb[0].mxu0
    %v2135 = vadd.f32 0.0, %v2134
    %v2136 = vpop.f32.mrb[0].mxu0
    %2137 = vdwg.mxu0
    %v2138 = vmul.f32 %v2135, 0.25
    %v2140 = vlaneseq
    %v2141 = vshrl.u32 %v2140, 7
    %v2142 = vsub.s32 0, %v2141
    %v2143 = vrot.slane %v1505, %v2142
    %v2145 = vadd.f32 %v2138, %v2143
    %v2146 = vsel %vm901, %v2145, -inf
    %2147 = vmax.xlane.f32.xlu0 %v2146
    %v2148 = vpop.xlane.xlu0 %2147
    %v2149 = vsub.f32 %v2145, %v2148
    %v2150 = vmul.f32 %v2149, 1.442695
    %v2151 = vpow.pop %v2150
    %v2152 = vsel %vm901, %v2151, 0.0
    %2153 = vadd.xlane.f32.xlu0 %v2152
    %v2154 = vpop.xlane.xlu0 %2153
    %v2155 = vrcp.pop %v2154
    %v2156 = vmul.f32 %v2151, %v2155
    %v2158 = vsel %vm901, %v2156, 0
    %2160 = vmatprep.subr.mxu0 0.0
    %2161 = vmatpush1.msra.mxu0 %v2044
    %2162 = vmatprep.subr.mxu0 0.0
    %2163 = vmatpush1.msra.mxu0 %v2045
    %2164 = vmatprep.subr.mxu0 0.0
    %2165 = vmatpush1.msra.mxu0 %v2046
    %2166 = vmatprep.subr.mxu0 0.0
    %2167 = vmatpush1.msra.mxu0 0.0
    %2168 = vmatprep.subr.mxu0 0.0
    %2169 = vmatpush1.msra.mxu0 0.0
    %2170 = vmatprep.subr.mxu0 0.0
    %2171 = vmatpush1.msra.mxu0 0.0
    %2172 = vmatprep.subr.mxu0 0.0
    %2173 = vmatpush1.msra.mxu0 0.0
    %2174 = vmatprep.subr.mxu0 0.0
    %2175 = vmatpush1.msra.mxu0 0.0
    %2176 = vmatprep.subr.mxu0 0.0
    %2177 = vmatpush1.msra.mxu0 0.0
    %2178 = vmatprep.subr.mxu0 0.0
    %2179 = vmatpush1.msra.mxu0 0.0
    %2180 = vmatprep.subr.mxu0 0.0
    %2181 = vmatpush1.msra.mxu0 0.0
    %2182 = vmatprep.subr.mxu0 0.0
    %2183 = vmatpush1.msra.mxu0 0.0
    %2184 = vmatprep.subr.mxu0 0.0
    %2185 = vmatpush1.msra.mxu0 0.0
    %2186 = vmatprep.subr.mxu0 0.0
    %2187 = vmatpush1.msra.mxu0 0.0
    %2188 = vmatprep.subr.mxu0 0.0
    %2189 = vmatpush1.msra.mxu0 0.0
    %2190 = vmatprep.subr.mxu0 0.0
    %2191 = vmatpush1.msra.mxu0 0.0
    %2192 = vmatprep.subr.mxu0 0.0
    %2193 = vmatpush1.msra.mxu0 0.0
    %2194 = vmatprep.subr.mxu0 0.0
    %2195 = vmatpush1.msra.mxu0 0.0
    %2196 = vmatprep.subr.mxu0 0.0
    %2197 = vmatpush1.msra.mxu0 0.0
    %2198 = vmatprep.subr.mxu0 0.0
    %2199 = vmatpush1.msra.mxu0 0.0
    %2200 = vmatprep.subr.mxu0 0.0
    %2201 = vmatpush1.msra.mxu0 0.0
    %2202 = vmatprep.subr.mxu0 0.0
    %2203 = vmatpush1.msra.mxu0 0.0
    %2204 = vmatprep.subr.mxu0 0.0
    %2205 = vmatpush1.msra.mxu0 0.0
    %2206 = vmatprep.subr.mxu0 0.0
    %2207 = vmatpush1.msra.mxu0 0.0
    %2208 = vmatprep.subr.mxu0 0.0
    %2209 = vmatpush1.msra.mxu0 0.0
    %2210 = vmatprep.subr.mxu0 0.0
    %2211 = vmatpush1.msra.mxu0 0.0
    %2212 = vmatprep.subr.mxu0 0.0
    %2213 = vmatpush1.msra.mxu0 0.0
    %2214 = vmatprep.subr.mxu0 0.0
    %2215 = vmatpush1.msra.mxu0 0.0
    %2216 = vmatprep.subr.mxu0 0.0
    %2217 = vmatpush1.msra.mxu0 0.0
    %2218 = vmatprep.subr.mxu0 0.0
    %2219 = vmatpush1.msra.mxu0 0.0
    %2220 = vmatprep.subr.mxu0 0.0
    %2221 = vmatpush1.msra.mxu0 0.0
    %2222 = vmatprep.subr.mxu0 0.0
    %2223 = vmatpush1.msra.mxu0 0.0
    %2224 = vmatprep.mubr.f32.mxu0 0.0
    %2225 = vmatmul.mubr.f32.gmra.mrb[0].mxu0 %v2158
    %v2226 = vpop.f32.mrb[0].mxu0
    %v2227 = vadd.f32 0.0, %v2226
    %v2228 = vpop.f32.mrb[0].mxu0
    %2229 = vdwg.mxu0
    %2230 = vmatprep.subr.mxu0 0.0
    %2231 = vmatpush1.msra.mxu0 %v2053
    %2232 = vmatprep.subr.mxu0 0.0
    %2233 = vmatpush1.msra.mxu0 %v2054
    %2234 = vmatprep.subr.mxu0 0.0
    %2235 = vmatpush1.msra.mxu0 %v2055
    %2236 = vmatprep.subr.mxu0 0.0
    %2237 = vmatpush1.msra.mxu0 0.0
    %2238 = vmatprep.subr.mxu0 0.0
    %2239 = vmatpush1.msra.mxu0 0.0
    %2240 = vmatprep.subr.mxu0 0.0
    %2241 = vmatpush1.msra.mxu0 0.0
    %2242 = vmatprep.subr.mxu0 0.0
    %2243 = vmatpush1.msra.mxu0 0.0
    %2244 = vmatprep.subr.mxu0 0.0
    %2245 = vmatpush1.msra.mxu0 0.0
    %2246 = vmatprep.subr.mxu0 0.0
    %2247 = vmatpush1.msra.mxu0 0.0
    %2248 = vmatprep.subr.mxu0 0.0
    %2249 = vmatpush1.msra.mxu0 0.0
    %2250 = vmatprep.subr.mxu0 0.0
    %2251 = vmatpush1.msra.mxu0 0.0
    %2252 = vmatprep.subr.mxu0 0.0
    %2253 = vmatpush1.msra.mxu0 0.0
    %2254 = vmatprep.subr.mxu0 0.0
    %2255 = vmatpush1.msra.mxu0 0.0
    %2256 = vmatprep.subr.mxu0 0.0
    %2257 = vmatpush1.msra.mxu0 0.0
    %2258 = vmatprep.subr.mxu0 0.0
    %2259 = vmatpush1.msra.mxu0 0.0
    %2260 = vmatprep.subr.mxu0 0.0
    %2261 = vmatpush1.msra.mxu0 0.0
    %2262 = vmatprep.subr.mxu0 0.0
    %2263 = vmatpush1.msra.mxu0 0.0
    %2264 = vmatprep.subr.mxu0 0.0
    %2265 = vmatpush1.msra.mxu0 0.0
    %2266 = vmatprep.subr.mxu0 0.0
    %2267 = vmatpush1.msra.mxu0 0.0
    %2268 = vmatprep.subr.mxu0 0.0
    %2269 = vmatpush1.msra.mxu0 0.0
    %2270 = vmatprep.subr.mxu0 0.0
    %2271 = vmatpush1.msra.mxu0 0.0
    %2272 = vmatprep.subr.mxu0 0.0
    %2273 = vmatpush1.msra.mxu0 0.0
    %2274 = vmatprep.subr.mxu0 0.0
    %2275 = vmatpush1.msra.mxu0 0.0
    %2276 = vmatprep.subr.mxu0 0.0
    %2277 = vmatpush1.msra.mxu0 0.0
    %2278 = vmatprep.subr.mxu0 0.0
    %2279 = vmatpush1.msra.mxu0 0.0
    %2280 = vmatprep.subr.mxu0 0.0
    %2281 = vmatpush1.msra.mxu0 0.0
    %2282 = vmatprep.subr.mxu0 0.0
    %2283 = vmatpush1.msra.mxu0 0.0
    %2284 = vmatprep.subr.mxu0 0.0
    %2285 = vmatpush1.msra.mxu0 0.0
    %2286 = vmatprep.subr.mxu0 0.0
    %2287 = vmatpush1.msra.mxu0 0.0
    %2288 = vmatprep.subr.mxu0 0.0
    %2289 = vmatpush1.msra.mxu0 0.0
    %2290 = vmatprep.subr.mxu0 0.0
    %2291 = vmatpush1.msra.mxu0 0.0
    %2292 = vmatprep.subr.mxu0 0.0
    %2293 = vmatpush1.msra.mxu0 0.0
    %2294 = vmatprep.mubr.f32.mxu0 0.0
    %2295 = vmatmul.mubr.f32.gmra.mrb[0].mxu0 %v2158
    %v2296 = vpop.f32.mrb[0].mxu0
    %v2297 = vadd.f32 0.0, %v2296
    %v2298 = vpop.f32.mrb[0].mxu0
    %2299 = vdwg.mxu0
    %v2300 = vmul.f32 %v2227, %v1493
    %v2301 = vmul.f32 %v2297, %v1495
    %v2302 = vsub.f32 %v2300, %v2301
    %v2303 = vld [vmem:[%s17] sm:$0xff]
    %v2304 = vld [vmem:[%s17 + $0x8] sm:$0xff]
    %v2306 = vsel %vm810, %v2302, 0
    %2308 = vmatprep.subr.mxu0 0.0
    %2309 = vmatpush1.msra.mxu0 %v2303
    %2310 = vmatprep.subr.mxu0 0.0
    %2311 = vmatpush1.msra.mxu0 %v2304
    %2312 = vmatprep.subr.mxu0 0.0
    %2313 = vmatpush1.msra.mxu0 0.0
    %2314 = vmatprep.subr.mxu0 0.0
    %2315 = vmatpush1.msra.mxu0 0.0
    %2316 = vmatprep.subr.mxu0 0.0
    %2317 = vmatpush1.msra.mxu0 0.0
    %2318 = vmatprep.subr.mxu0 0.0
    %2319 = vmatpush1.msra.mxu0 0.0
    %2320 = vmatprep.subr.mxu0 0.0
    %2321 = vmatpush1.msra.mxu0 0.0
    %2322 = vmatprep.subr.mxu0 0.0
    %2323 = vmatpush1.msra.mxu0 0.0
    %2324 = vmatprep.subr.mxu0 0.0
    %2325 = vmatpush1.msra.mxu0 0.0
    %2326 = vmatprep.subr.mxu0 0.0
    %2327 = vmatpush1.msra.mxu0 0.0
    %2328 = vmatprep.subr.mxu0 0.0
    %2329 = vmatpush1.msra.mxu0 0.0
    %2330 = vmatprep.subr.mxu0 0.0
    %2331 = vmatpush1.msra.mxu0 0.0
    %2332 = vmatprep.subr.mxu0 0.0
    %2333 = vmatpush1.msra.mxu0 0.0
    %2334 = vmatprep.subr.mxu0 0.0
    %2335 = vmatpush1.msra.mxu0 0.0
    %2336 = vmatprep.subr.mxu0 0.0
    %2337 = vmatpush1.msra.mxu0 0.0
    %2338 = vmatprep.subr.mxu0 0.0
    %2339 = vmatpush1.msra.mxu0 0.0
    %2340 = vmatprep.subr.mxu0 0.0
    %2341 = vmatpush1.msra.mxu0 0.0
    %2342 = vmatprep.subr.mxu0 0.0
    %2343 = vmatpush1.msra.mxu0 0.0
    %2344 = vmatprep.subr.mxu0 0.0
    %2345 = vmatpush1.msra.mxu0 0.0
    %2346 = vmatprep.subr.mxu0 0.0
    %2347 = vmatpush1.msra.mxu0 0.0
    %2348 = vmatprep.subr.mxu0 0.0
    %2349 = vmatpush1.msra.mxu0 0.0
    %2350 = vmatprep.subr.mxu0 0.0
    %2351 = vmatpush1.msra.mxu0 0.0
    %2352 = vmatprep.subr.mxu0 0.0
    %2353 = vmatpush1.msra.mxu0 0.0
    %2354 = vmatprep.subr.mxu0 0.0
    %2355 = vmatpush1.msra.mxu0 0.0
    %2356 = vmatprep.subr.mxu0 0.0
    %2357 = vmatpush1.msra.mxu0 0.0
    %2358 = vmatprep.subr.mxu0 0.0
    %2359 = vmatpush1.msra.mxu0 0.0
    %2360 = vmatprep.subr.mxu0 0.0
    %2361 = vmatpush1.msra.mxu0 0.0
    %2362 = vmatprep.subr.mxu0 0.0
    %2363 = vmatpush1.msra.mxu0 0.0
    %2364 = vmatprep.subr.mxu0 0.0
    %2365 = vmatpush1.msra.mxu0 0.0
    %2366 = vmatprep.subr.mxu0 0.0
    %2367 = vmatpush1.msra.mxu0 0.0
    %2368 = vmatprep.subr.mxu0 0.0
    %2369 = vmatpush1.msra.mxu0 0.0
    %2370 = vmatprep.subr.mxu0 0.0
    %2371 = vmatpush1.msra.mxu0 0.0
    %2372 = vmatprep.mubr.f32.mxu0 0.0
    %2373 = vmatmul.mubr.f32.gmra.mrb[0].mxu0 %v2306
    %v2374 = vpop.f32.mrb[0].mxu0
    %v2375 = vadd.f32 0.0, %v2374
    %v2376 = vpop.f32.mrb[0].mxu0
    %2377 = vdwg.mxu0
    %v2378 = vadd.f32 %v1138, %v2375
    %v2379 = vadd.f32 %v1427, %v2378
    %v2380 = vsel %vm162, %v2379, 0.0
    %2381 = vadd.xlane.f32.xlu0 %v2380
    %v2382 = vpop.xlane.xlu0 %2381
    %v2383 = vmul.f32 %v2382, %v166
    %v2384 = vsub.f32 %v2379, %v2383
    %v2385 = vmul.f32 %v2384, %v2384
    %v2386 = vsel %vm162, %v2385, 0.0
    %2387 = vadd.xlane.f32.xlu0 %v2386
    %v2388 = vpop.xlane.xlu0 %2387
    %v2389 = vmul.f32 %v2388, %v166
    %v2390 = vadd.f32 %v2389, 1e-05
    %v2391 = vrsqrt.pop %v2390
    %v2392 = vmul.f32 %v2384, %v2391
    %v2393 = vmul.f32 %v2392, %v1159
    %v2394 = vadd.f32 %v2393, %v1166
    %v2396 = vsel %vm162, %v2394, 0
    %2398 = vmatprep.subr.mxu0 %v95
    %2399 = vmatpush1.msra.mxu0 %v94
    %2400 = vmatprep.subr.mxu0 %v97
    %2401 = vmatpush1.msra.mxu0 %v96
    %2402 = vmatprep.subr.mxu0 %v99
    %2403 = vmatpush1.msra.mxu0 %v98
    %2404 = vmatprep.subr.mxu0 %v101
    %2405 = vmatpush1.msra.mxu0 %v100
    %2406 = vmatprep.subr.mxu0 %v103
    %2407 = vmatpush1.msra.mxu0 %v102
    %2408 = vmatprep.subr.mxu0 %v105
    %2409 = vmatpush1.msra.mxu0 %v104
    %2410 = vmatprep.subr.mxu0 %v107
    %2411 = vmatpush1.msra.mxu0 %v106
    %2412 = vmatprep.subr.mxu0 %v109
    %2413 = vmatpush1.msra.mxu0 %v108
    %2414 = vmatprep.subr.mxu0 0.0
    %2415 = vmatpush1.msra.mxu0 0.0
    %2416 = vmatprep.subr.mxu0 0.0
    %2417 = vmatpush1.msra.mxu0 0.0
    %2418 = vmatprep.subr.mxu0 0.0
    %2419 = vmatpush1.msra.mxu0 0.0
    %2420 = vmatprep.subr.mxu0 0.0
    %2421 = vmatpush1.msra.mxu0 0.0
    %2422 = vmatprep.subr.mxu0 0.0
    %2423 = vmatpush1.msra.mxu0 0.0
    %2424 = vmatprep.subr.mxu0 0.0
    %2425 = vmatpush1.msra.mxu0 0.0
    %2426 = vmatprep.subr.mxu0 0.0
    %2427 = vmatpush1.msra.mxu0 0.0
    %2428 = vmatprep.subr.mxu0 0.0
    %2429 = vmatpush1.msra.mxu0 0.0
    %2430 = vmatprep.subr.mxu0 0.0
    %2431 = vmatpush1.msra.mxu0 0.0
    %2432 = vmatprep.subr.mxu0 0.0
    %2433 = vmatpush1.msra.mxu0 0.0
    %2434 = vmatprep.subr.mxu0 0.0
    %2435 = vmatpush1.msra.mxu0 0.0
    %2436 = vmatprep.subr.mxu0 0.0
    %2437 = vmatpush1.msra.mxu0 0.0
    %2438 = vmatprep.subr.mxu0 0.0
    %2439 = vmatpush1.msra.mxu0 0.0
    %2440 = vmatprep.subr.mxu0 0.0
    %2441 = vmatpush1.msra.mxu0 0.0
    %2442 = vmatprep.subr.mxu0 0.0
    %2443 = vmatpush1.msra.mxu0 0.0
    %2444 = vmatprep.subr.mxu0 0.0
    %2445 = vmatpush1.msra.mxu0 0.0
    %2446 = vmatprep.subr.mxu0 0.0
    %2447 = vmatpush1.msra.mxu0 0.0
    %2448 = vmatprep.subr.mxu0 0.0
    %2449 = vmatpush1.msra.mxu0 0.0
    %2450 = vmatprep.subr.mxu0 0.0
    %2451 = vmatpush1.msra.mxu0 0.0
    %2452 = vmatprep.subr.mxu0 0.0
    %2453 = vmatpush1.msra.mxu0 0.0
    %2454 = vmatprep.subr.mxu0 0.0
    %2455 = vmatpush1.msra.mxu0 0.0
    %2456 = vmatprep.subr.mxu0 0.0
    %2457 = vmatpush1.msra.mxu0 0.0
    %2458 = vmatprep.subr.mxu0 0.0
    %2459 = vmatpush1.msra.mxu0 0.0
    %2460 = vmatprep.subr.mxu0 0.0
    %2461 = vmatpush1.msra.mxu0 0.0
    %2462 = vmatprep.mubr.f32.mxu0 0.0
    %2463 = vmatmul.mubr.f32.gmra.mrb[0].mxu0 %v2396
    %v2464 = vpop.f32.mrb[0].mxu0
    %v2465 = vadd.f32 %v1173, %v2464
    %v2466 = vpop.f32.mrb[0].mxu0
    %v2467 = vadd.f32 %v1177, %v2466
    %2468 = vdwg.mxu0
    %2469 = vmatprep.subr.mxu0 %v112
    %2470 = vmatpush1.msra.mxu0 %v111
    %2471 = vmatprep.subr.mxu0 %v114
    %2472 = vmatpush1.msra.mxu0 %v113
    %2473 = vmatprep.subr.mxu0 %v116
    %2474 = vmatpush1.msra.mxu0 %v115
    %2475 = vmatprep.subr.mxu0 %v118
    %2476 = vmatpush1.msra.mxu0 %v117
    %2477 = vmatprep.subr.mxu0 %v120
    %2478 = vmatpush1.msra.mxu0 %v119
    %2479 = vmatprep.subr.mxu0 %v122
    %2480 = vmatpush1.msra.mxu0 %v121
    %2481 = vmatprep.subr.mxu0 %v124
    %2482 = vmatpush1.msra.mxu0 %v123
    %2483 = vmatprep.subr.mxu0 %v126
    %2484 = vmatpush1.msra.mxu0 %v125
    %2485 = vmatprep.subr.mxu0 0.0
    %2486 = vmatpush1.msra.mxu0 0.0
    %2487 = vmatprep.subr.mxu0 0.0
    %2488 = vmatpush1.msra.mxu0 0.0
    %2489 = vmatprep.subr.mxu0 0.0
    %2490 = vmatpush1.msra.mxu0 0.0
    %2491 = vmatprep.subr.mxu0 0.0
    %2492 = vmatpush1.msra.mxu0 0.0
    %2493 = vmatprep.subr.mxu0 0.0
    %2494 = vmatpush1.msra.mxu0 0.0
    %2495 = vmatprep.subr.mxu0 0.0
    %2496 = vmatpush1.msra.mxu0 0.0
    %2497 = vmatprep.subr.mxu0 0.0
    %2498 = vmatpush1.msra.mxu0 0.0
    %2499 = vmatprep.subr.mxu0 0.0
    %2500 = vmatpush1.msra.mxu0 0.0
    %2501 = vmatprep.subr.mxu0 0.0
    %2502 = vmatpush1.msra.mxu0 0.0
    %2503 = vmatprep.subr.mxu0 0.0
    %2504 = vmatpush1.msra.mxu0 0.0
    %2505 = vmatprep.subr.mxu0 0.0
    %2506 = vmatpush1.msra.mxu0 0.0
    %2507 = vmatprep.subr.mxu0 0.0
    %2508 = vmatpush1.msra.mxu0 0.0
    %2509 = vmatprep.subr.mxu0 0.0
    %2510 = vmatpush1.msra.mxu0 0.0
    %2511 = vmatprep.subr.mxu0 0.0
    %2512 = vmatpush1.msra.mxu0 0.0
    %2513 = vmatprep.subr.mxu0 0.0
    %2514 = vmatpush1.msra.mxu0 0.0
    %2515 = vmatprep.subr.mxu0 0.0
    %2516 = vmatpush1.msra.mxu0 0.0
    %2517 = vmatprep.subr.mxu0 0.0
    %2518 = vmatpush1.msra.mxu0 0.0
    %2519 = vmatprep.subr.mxu0 0.0
    %2520 = vmatpush1.msra.mxu0 0.0
    %2521 = vmatprep.subr.mxu0 0.0
    %2522 = vmatpush1.msra.mxu0 0.0
    %2523 = vmatprep.subr.mxu0 0.0
    %2524 = vmatpush1.msra.mxu0 0.0
    %2525 = vmatprep.subr.mxu0 0.0
    %2526 = vmatpush1.msra.mxu0 0.0
    %2527 = vmatprep.subr.mxu0 0.0
    %2528 = vmatpush1.msra.mxu0 0.0
    %2529 = vmatprep.subr.mxu0 0.0
    %2530 = vmatpush1.msra.mxu0 0.0
    %2531 = vmatprep.subr.mxu0 0.0
    %2532 = vmatpush1.msra.mxu0 0.0
    %2533 = vmatprep.mubr.f32.mxu0 0.0
    %2534 = vmatmul.mubr.f32.gmra.mrb[0].mxu0 %v2396
    %v2535 = vpop.f32.mrb[0].mxu0
    %v2536 = vadd.f32 %v1258, %v2535
    %v2537 = vpop.f32.mrb[0].mxu0
    %v2538 = vadd.f32 %v1262, %v2537
    %2539 = vdwg.mxu0
    %v2540 = vmul.f32 %v2536, 0.5
    %v2541 = vmul.f32 %v2538, 0.5
    %v2542 = vmul.f32 %v2536, 0.70710677
    %v2543 = vmul.f32 %v2538, 0.70710677
    %v2544 = verf.f32.pop %v2542
    %v2545 = verf.f32.pop %v2543
    %v2546 = vadd.f32 %v2544, 1.0
    %v2547 = vadd.f32 %v2545, 1.0
    %v2548 = vmul.f32 %v2540, %v2546
    %v2549 = vmul.f32 %v2541, %v2547
    %v2550 = vmul.f32 %v2465, %v2548
    %v2551 = vmul.f32 %v2467, %v2549
    %2552 = vmatprep.subr.mxu0 0.0
    %2553 = vmatpush1.msra.mxu0 %v128
    %2554 = vmatprep.subr.mxu0 0.0
    %2555 = vmatpush1.msra.mxu0 %v129
    %2556 = vmatprep.subr.mxu0 0.0
    %2557 = vmatpush1.msra.mxu0 %v130
    %2558 = vmatprep.subr.mxu0 0.0
    %2559 = vmatpush1.msra.mxu0 %v131
    %2560 = vmatprep.subr.mxu0 0.0
    %2561 = vmatpush1.msra.mxu0 %v132
    %2562 = vmatprep.subr.mxu0 0.0
    %2563 = vmatpush1.msra.mxu0 %v133
    %2564 = vmatprep.subr.mxu0 0.0
    %2565 = vmatpush1.msra.mxu0 %v134
    %2566 = vmatprep.subr.mxu0 0.0
    %2567 = vmatpush1.msra.mxu0 %v135
    %2568 = vmatprep.subr.mxu0 0.0
    %2569 = vmatpush1.msra.mxu0 %v136
    %2570 = vmatprep.subr.mxu0 0.0
    %2571 = vmatpush1.msra.mxu0 %v137
    %2572 = vmatprep.subr.mxu0 0.0
    %2573 = vmatpush1.msra.mxu0 %v138
    %2574 = vmatprep.subr.mxu0 0.0
    %2575 = vmatpush1.msra.mxu0 %v139
    %2576 = vmatprep.subr.mxu0 0.0
    %2577 = vmatpush1.msra.mxu0 %v140
    %2578 = vmatprep.subr.mxu0 0.0
    %2579 = vmatpush1.msra.mxu0 %v141
    %2580 = vmatprep.subr.mxu0 0.0
    %2581 = vmatpush1.msra.mxu0 %v142
    %2582 = vmatprep.subr.mxu0 0.0
    %2583 = vmatpush1.msra.mxu0 %v143
    %2584 = vmatprep.subr.mxu0 0.0
    %2585 = vmatpush1.msra.mxu0 %v144
    %2586 = vmatprep.subr.mxu0 0.0
    %2587 = vmatpush1.msra.mxu0 %v145
    %2588 = vmatprep.subr.mxu0 0.0
    %2589 = vmatpush1.msra.mxu0 %v146
    %2590 = vmatprep.subr.mxu0 0.0
    %2591 = vmatpush1.msra.mxu0 %v147
    %2592 = vmatprep.subr.mxu0 0.0
    %2593 = vmatpush1.msra.mxu0 %v148
    %2594 = vmatprep.subr.mxu0 0.0
    %2595 = vmatpush1.msra.mxu0 %v149
    %2596 = vmatprep.subr.mxu0 0.0
    %2597 = vmatpush1.msra.mxu0 %v150
    %2598 = vmatprep.subr.mxu0 0.0
    %2599 = vmatpush1.msra.mxu0 %v151
    %2600 = vmatprep.subr.mxu0 0.0
    %2601 = vmatpush1.msra.mxu0 %v152
    %2602 = vmatprep.subr.mxu0 0.0
    %2603 = vmatpush1.msra.mxu0 %v153
    %2604 = vmatprep.subr.mxu0 0.0
    %2605 = vmatpush1.msra.mxu0 %v154
    %2606 = vmatprep.subr.mxu0 0.0
    %2607 = vmatpush1.msra.mxu0 %v155
    %2608 = vmatprep.subr.mxu0 0.0
    %2609 = vmatpush1.msra.mxu0 %v156
    %2610 = vmatprep.subr.mxu0 0.0
    %2611 = vmatpush1.msra.mxu0 %v157
    %2612 = vmatprep.subr.mxu0 0.0
    %2613 = vmatpush1.msra.mxu0 %v158
    %2614 = vmatprep.subr.mxu0 0.0
    %2615 = vmatpush1.msra.mxu0 %v159
    %2616 = vmatprep.mubr.f32.mxu0 %v2551
    %2617 = vmatmul.mubr.f32.gmra.mrb[0].mxu0 %v2550
    %v2618 = vpop.f32.mrb[0].mxu0
    %v2619 = vadd.f32 %v1352, %v2618
    %v2620 = vpop.f32.mrb[0].mxu0
    %2621 = vdwg.mxu0
    %v2622 = vadd.f32 %v2379, %v2619
    %s2623 = scalar_lea.vmem [#allocation2], 8
    %2624 = vst.msk [vmem:[%s2623] sm:$0xff] %vm162, %v2622
    // Predicated region
    $region110: #{tpu_custom_call.1} parent=1 // pred_check
      _
    $region111: #{tpu_custom_call.1} parent=1 // pred_check_branch
      %2626 = sbr.rel (0) target = $region113
    $region112: #{tpu_custom_call.1} parent=1 // pred_region
      %s2628 = ssub.s32 256, 256
      %2629 = vsyncadd [#allocation3], %s2628
      %s2630 = sshll.u32 [#allocation2], 4
      %s2631 = int_to_ptr.vmem [resolvable:$true] %s2630
      %2636 = dma.vmem_to_hbm [thread:$0]  %s2631, 256, %s27, [#allocation3], 128, 128, 8
    $region113: #{tpu_custom_call.1} parent=1 // pred_fallthru
      _
    // Predicated region
    $region114: #{tpu_custom_call.1} parent=1 // pred_check
      _
    $region115: #{tpu_custom_call.1} parent=1 // pred_check_branch
      %2638 = sbr.rel (0) target = $region117
    $region116: #{tpu_custom_call.1} parent=1 // pred_region
      %2639 = dma.done [#allocation3], 256
    $region117: #{tpu_custom_call.1} parent=1 // pred_fallthru
      _
    %2640 = vsyncpa [#allocation3], 1

</llo_original>
